<compile_context>
chip_gen: v7x
topology: tpu7x:2x2x1
jax: 0.10.0
libtpu: 0.0.40
codegen_flags: <defaults>
</compile_context>

<pallas_src>
import jax
import jax.numpy as jnp
from jax.experimental import pallas as pl
from jax.experimental.pallas import tpu as pltpu

K = 5            # spatial filter support (K taps per axis)
L = 4            # number of band-pass orientations
NOUT = 1 + L     # scattering channels: S0 + L first-order coefficients


# ---------------------------------------------------------------------------
# Filter bank ("register_filters"): separable 1D factors.
# ---------------------------------------------------------------------------
def _filter_bank():
    c = K // 2
    t = jnp.arange(K, dtype=jnp.float32) - c
    # low-pass: separable Gaussian, each 1D factor sums to 1
    g = jnp.exp(-t * t / (2.0 * 1.2 ** 2))
    g = g / jnp.sum(g)
    # band-pass: Morlet-like, rank-1 separable in complex form
    xi = 3.0 * jnp.pi / 4.0
    env = jnp.exp(-t * t / (2.0 * 1.0 ** 2))
    u_fac, v_fac = [], []
    for l in range(L):
        th = jnp.pi * l / L
        a = xi * jnp.sin(th)      # oscillation along rows (H)
        b = xi * jnp.cos(th)      # oscillation along cols (W)
        ur, ui = env * jnp.cos(a * t), env * jnp.sin(a * t)
        vr, vi = env * jnp.cos(b * t), env * jnp.sin(b * t)
        nu = jnp.sqrt(jnp.sum(ur * ur + ui * ui))
        nv = jnp.sqrt(jnp.sum(vr * vr + vi * vi))
        u_fac.append((ur / nu, ui / nu))
        v_fac.append((vr / nv, vi / nv))
    return g, u_fac, v_fac


def _circulant_rows(h, N):
    """(M @ X)[i, :] == sum_u h[u] * X[(i + u - c) % N, :]   (circ conv, rows)."""
    c = K // 2
    i = jnp.arange(N)
    M = jnp.zeros((N, N), jnp.float32)
    for u in range(K):
        M = M.at[i, (i + u - c) % N].add(h[u])
    return M


def _circulant_cols(h, N):
    """(X @ M)[:, j] == sum_v h[v] * X[:, (j + v - c) % N]   (circ conv, cols)."""
    c = K // 2
    j = jnp.arange(N)
    M = jnp.zeros((N, N), jnp.float32)
    for v in range(K):
        M = M.at[(j + v - c) % N, j].add(h[v])
    return M


def make_operators(H, W):
    """'register_filters': build the circulant conv operators used in-kernel."""
    assert H % 2 == 0 and W % 2 == 0, "H and W must be even"
    g, u_fac, v_fac = _filter_bank()
    # row low-pass with the stride-2 row subsample folded in (left-multiply)
    phi_h = _circulant_rows(g, H)[::2, :]                       # (H/2, H)
    # column low-pass: fold the column subsample in only when the resulting
    # output lane width stays >= 128 (lane-dense stores); otherwise write the
    # full-width field and subsample columns in the wrapper.
    phi_w_full = _circulant_cols(g, W)                          # (W, W)
    phi_w = phi_w_full[:, ::2] if (W // 2) >= 128 else phi_w_full
    # band-pass operators, fused re/im layouts, bf16 (f32 accumulation on MXU)
    U_blocks, V_blocks = [], []
    for l in range(L):
        ur, ui = u_fac[l]
        vr, vi = v_fac[l]
        U_blocks.append(jnp.concatenate(
            [_circulant_rows(ur, H), _circulant_rows(ui, H)], axis=0))   # (2H, H)
        V_blocks.append(jnp.concatenate(
            [_circulant_cols(vr, W), _circulant_cols(vi, W)], axis=1))   # (W, 2W)
    U_all = jnp.stack(U_blocks).astype(jnp.bfloat16)            # (L, 2H, H)
    V_all = jnp.stack(V_blocks).astype(jnp.bfloat16)            # (L, W, 2W)
    return U_all, V_all, phi_h.astype(jnp.float32), phi_w.astype(jnp.float32)


# ---------------------------------------------------------------------------
# Pallas kernel: TB images per grid step.
# ---------------------------------------------------------------------------
def _scattering_kernel(x_ref, u_ref, v_ref, phih_ref, phiw_ref, o_ref):
    """x_ref:(TB,H,W) f32   u_ref:(L,2H,H) bf16   v_ref:(L,W,2W) bf16
       phih_ref:(Hs,H) f32  phiw_ref:(W,Wo) f32   o_ref:(TB,NOUT,Hs,Wo) f32."""
    TB, H, W = x_ref.shape

    x = x_ref[...]                                   # (TB, H, W) f32
    xb = x.astype(jnp.bfloat16).reshape(TB * H, W)   # stacked rows for right-mults
    phi_h = phih_ref[...]
    phi_w = phiw_ref[...]

    # ---- zeroth order: f32 low-pass path (phi_h first -> lane-dense N = W) ----
    for b in range(TB):
        t0 = jnp.dot(phi_h, x[b], preferred_element_type=jnp.float32)      # (Hs, W)
        o_ref[b, 0] = jnp.dot(t0, phi_w, preferred_element_type=jnp.float32)

    # ---- first order: |x (*) psi_l| then low-pass + downsample ----
    for l in range(L):
        # column (W-axis) complex pass for all TB images at once:
        # one matmul, M = TB*H, N = 2W  ->  [cr | ci] per image stacked in rows
        Cl = jnp.dot(xb, v_ref[l], preferred_element_type=jnp.float32)     # (TB*H, 2W)
        Cl = Cl.astype(jnp.bfloat16)
        for b in range(TB):
            # row (H-axis) complex pass: [u_re ; u_im] @ [cr | ci] gives all
            # four re/im products in one MXU launch (M = 2H, N = 2W).
            P = jnp.dot(u_ref[l], Cl[b * H:(b + 1) * H],
                        preferred_element_type=jnp.float32)                # (2H, 2W)
            yr = P[:H, :W] - P[H:, W:]
            yi = P[:H, W:] + P[H:, :W]
            u1 = jnp.sqrt(yr * yr + yi * yi)                               # modulus, f32
            t = jnp.dot(phi_h, u1, preferred_element_type=jnp.float32)     # (Hs, W)
            o_ref[b, 1 + l] = jnp.dot(t, phi_w, preferred_element_type=jnp.float32)


# ---------------------------------------------------------------------------
# Wrapper ("scattering" / forward)
# ---------------------------------------------------------------------------
def _vmem_limit_bytes():
    try:
        cap = int(pltpu.get_tpu_info().vmem_capacity_bytes)
    except Exception:
        cap = 64 * 1024 * 1024
    # leave headroom for compiler scratch; caps at 96 MiB (v5e/v6e), ~48 MiB (v7x)
    return max(32 * 1024 * 1024, min(cap * 3 // 4, 96 * 1024 * 1024))


def _choose_tb(BC, H, W, Wo, vmem_limit):
    """Largest per-step image batch that fits VMEM, keeping >= 2 grid steps."""
    Hs = H // 2

    def fits(t):
        est = (2 * t * H * W * 4                    # x, double buffered
               + 2 * t * NOUT * Hs * Wo * 4         # out, double buffered
               + t * H * 2 * W * 4 * 2              # column-pass intermediate (f32+bf16)
               + 8 * L * (H * H + W * W)            # bf16 operators, double buffered
               + 2 * (Hs * H + W * Wo) * 4          # phi operators, double buffered
               + 4 * H * W * 4 * 4)                 # per-image temps headroom
        return est <= vmem_limit // 2

    candidates = [t for t in range(1, min(BC, 16) + 1) if BC % t == 0]
    fitting = [t for t in candidates if fits(t)] or [1]
    tb = max(fitting)
    if BC // tb < 2:                                # keep both v7x TCs busy
        two_step = [t for t in fitting if BC // t >= 2]
        if two_step:
            tb = max(two_step)
    return tb


def scattering_forward(x, U_all, V_all, phi_h, phi_w):
    """forward(x) of ScatteringTorch: returns scattering(x) as
       (B, C, 1+L, H//2, W//2)."""
    B, C, H, W = x.shape
    Hs = H // 2
    Wo = phi_w.shape[1]                  # W//2 (fused subsample) or W (small-W regime)
    BC = B * C
    x3 = x.reshape(BC, H, W).astype(jnp.float32)

    vmem_limit = _vmem_limit_bytes()
    TB = _choose_tb(BC, H, W, Wo, vmem_limit)

    out = pl.pallas_call(
        _scattering_kernel,
        out_shape=jax.ShapeDtypeStruct((BC, NOUT, Hs, Wo), jnp.float32),
        grid=(BC // TB,),
        in_specs=[
            pl.BlockSpec((TB, H, W), lambda i: (i, 0, 0)),        # TB images / step
            pl.BlockSpec((L, 2 * H, H), lambda i: (0, 0, 0)),     # constant operators,
            pl.BlockSpec((L, W, 2 * W), lambda i: (0, 0, 0)),     # constant index map
            pl.BlockSpec((Hs, H), lambda i: (0, 0)),
            pl.BlockSpec((W, Wo), lambda i: (0, 0)),
        ],
        out_specs=pl.BlockSpec((TB, NOUT, Hs, Wo), lambda i: (i, 0, 0, 0)),
        compiler_params=pltpu.CompilerParams(
            dimension_semantics=("parallel",),     # shard image blocks across cores
            vmem_limit_bytes=vmem_limit,
        ),
    )(x3, U_all, V_all, phi_h, phi_w)

    out = out.reshape(B, C, NOUT, Hs, Wo)
    if Wo == W:                                    # small-W regime: cheap wrapper ::2
        out = out[..., ::2]
    return out


# ---------------------------------------------------------------------------
# Pure-JAX reference (tap-based circular conv via jnp.roll) for correctness.
# ---------------------------------------------------------------------------
def _reference(x, g, u_fac, v_fac):
    B, C, H, W = x.shape
    x3 = x.reshape(B * C, H, W).astype(jnp.float32)
    c = K // 2

    def circ_conv(img, f):
        acc = jnp.zeros_like(img)
        for u in range(K):
            for v in range(K):
                acc = acc + f[u, v] * jnp.roll(img, (c - u, c - v), axis=(1, 2))
        return acc

    phi2d = jnp.outer(g, g)
    outs = [circ_conv(x3, phi2d)]
    for l in range(L):
        ur, ui = u_fac[l]
        vr, vi = v_fac[l]
        re2d = jnp.outer(ur, vr) - jnp.outer(ui, vi)
        im2d = jnp.outer(ur, vi) + jnp.outer(ui, vr)
        re = circ_conv(x3, re2d)
        im = circ_conv(x3, im2d)
        outs.append(circ_conv(jnp.sqrt(re * re + im * im), phi2d))
    out = jnp.stack(outs, axis=1)[:, :, ::2, ::2]
    return out.reshape(B, C, NOUT, H // 2, W // 2)


if __name__ == "__main__":
    key = jax.random.PRNGKey(0)
    B, C, H, W = 2, 4, 16, 16
    x = jax.random.normal(key, (B, C, H, W), dtype=jnp.float32)

    ops = make_operators(H, W)                    # "register_filters"
    out = jax.block_until_ready(scattering_forward(x, *ops))

    g, u_fac, v_fac = _filter_bank()
    ref = jax.block_until_ready(_reference(x, g, u_fac, v_fac))

    assert out.shape == (B, C, NOUT, H // 2, W // 2), out.shape
    assert bool(jnp.all(jnp.isfinite(out)))
    # S0 goes through the pure-f32 phi path -> tight tolerance.
    assert bool(jnp.allclose(out[:, :, 0], ref[:, :, 0], atol=2e-3, rtol=2e-3))
    # First-order coefficients use bf16 band-pass matmuls (f32 accumulation);
    # tolerance deliberately loosened vs. the f32 tap-sum reference.
    assert bool(jnp.allclose(out, ref, atol=5e-2, rtol=5e-2))
    print("KERNEL_OK")
</pallas_src>

<mosaic_0001>
module attributes {stable_mosaic.version = 11 : i64} {
  func.func @_scattering_kernel(%arg0: i32, %arg1: memref<4x16x16xf32, #tpu.memory_space<vmem>>, %arg2: memref<4x32x16xbf16, #tpu.memory_space<vmem>>, %arg3: memref<4x16x32xbf16, #tpu.memory_space<vmem>>, %arg4: memref<8x16xf32, #tpu.memory_space<vmem>>, %arg5: memref<16x16xf32, #tpu.memory_space<vmem>>, %arg6: memref<4x5x8x16xf32, #tpu.memory_space<vmem>>) attributes {dimension_semantics = [#tpu.dimension_semantics<parallel>], iteration_bounds = array<i64: 2>, scalar_prefetch = 0 : i64, scratch_operands = 0 : i64, tpu.core_type = #tpu.core_type<tc>, window_params = [{transform_indices = @transform_0, window_bounds = array<i64: 4, 16, 16>}, {pipeline_mode = #tpu.pipeline_mode<synchronous>, transform_indices = @transform_1, window_bounds = array<i64: 4, 32, 16>}, {pipeline_mode = #tpu.pipeline_mode<synchronous>, transform_indices = @transform_2, window_bounds = array<i64: 4, 16, 32>}, {pipeline_mode = #tpu.pipeline_mode<synchronous>, transform_indices = @transform_3, window_bounds = array<i64: 8, 16>}, {pipeline_mode = #tpu.pipeline_mode<synchronous>, transform_indices = @transform_4, window_bounds = array<i64: 16, 16>}, {transform_indices = @transform_5, window_bounds = array<i64: 4, 5, 8, 16>}]} {
    %c0 = arith.constant 0 : index
    %c0_0 = arith.constant 0 : index
    %c0_1 = arith.constant 0 : index
    %0 = vector.load %arg1[%c0, %c0_0, %c0_1] : memref<4x16x16xf32, #tpu.memory_space<vmem>>, vector<4x16x16xf32>
    %1 = arith.truncf %0 : vector<4x16x16xf32> to vector<4x16x16xbf16>
    %2 = vector.shape_cast %1 : vector<4x16x16xbf16> to vector<64x16xbf16>
    %c0_2 = arith.constant 0 : index
    %c0_3 = arith.constant 0 : index
    %3 = vector.load %arg4[%c0_2, %c0_3] : memref<8x16xf32, #tpu.memory_space<vmem>>, vector<8x16xf32>
    %c0_4 = arith.constant 0 : index
    %c0_5 = arith.constant 0 : index
    %4 = vector.load %arg5[%c0_4, %c0_5] : memref<16x16xf32, #tpu.memory_space<vmem>>, vector<16x16xf32>
    %5 = vector.extract_strided_slice %0 {offsets = [0, 0, 0], sizes = [1, 16, 16], strides = [1, 1, 1]} : vector<4x16x16xf32> to vector<1x16x16xf32>
    %6 = vector.shape_cast %5 : vector<1x16x16xf32> to vector<16x16xf32>
    %cst = arith.constant dense<0.000000e+00> : vector<8x16xf32>
    %7 = tpu.matmul %3, %6, %cst {dimension_numbers = #tpu.dot_dimension_numbers<[1], [0], [0], [1], [0, 0, 1, 1], [], []>} : vector<8x16xf32>, vector<16x16xf32>, vector<8x16xf32> -> vector<8x16xf32>
    %cst_6 = arith.constant dense<0.000000e+00> : vector<8x16xf32>
    %8 = tpu.matmul %7, %4, %cst_6 {dimension_numbers = #tpu.dot_dimension_numbers<[1], [0], [0], [1], [0, 0, 1, 1], [], []>} : vector<8x16xf32>, vector<16x16xf32>, vector<8x16xf32> -> vector<8x16xf32>
    %c0_7 = arith.constant 0 : index
    %c0_8 = arith.constant 0 : index
    %c0_9 = arith.constant 0 : index
    %c0_10 = arith.constant 0 : index
    %9 = vector.load %arg6[%c0_7, %c0_8, %c0_9, %c0_10] : memref<4x5x8x16xf32, #tpu.memory_space<vmem>>, vector<1x1x8x16xf32>
    %10 = vector.shape_cast %9 : vector<1x1x8x16xf32> to vector<8x16xf32>
    %11 = vector.shape_cast %8 : vector<8x16xf32> to vector<1x1x8x16xf32>
    tpu.vector_store %arg6[%c0_7, %c0_8, %c0_9, %c0_10], %11 {strides = array<i32>} : memref<4x5x8x16xf32, #tpu.memory_space<vmem>>, vector<1x1x8x16xf32>,
    %12 = vector.extract_strided_slice %0 {offsets = [1, 0, 0], sizes = [1, 16, 16], strides = [1, 1, 1]} : vector<4x16x16xf32> to vector<1x16x16xf32>
    %13 = vector.shape_cast %12 : vector<1x16x16xf32> to vector<16x16xf32>
    %cst_11 = arith.constant dense<0.000000e+00> : vector<8x16xf32>
    %14 = tpu.matmul %3, %13, %cst_11 {dimension_numbers = #tpu.dot_dimension_numbers<[1], [0], [0], [1], [0, 0, 1, 1], [], []>} : vector<8x16xf32>, vector<16x16xf32>, vector<8x16xf32> -> vector<8x16xf32>
    %cst_12 = arith.constant dense<0.000000e+00> : vector<8x16xf32>
    %15 = tpu.matmul %14, %4, %cst_12 {dimension_numbers = #tpu.dot_dimension_numbers<[1], [0], [0], [1], [0, 0, 1, 1], [], []>} : vector<8x16xf32>, vector<16x16xf32>, vector<8x16xf32> -> vector<8x16xf32>
    %c1 = arith.constant 1 : index
    %c0_13 = arith.constant 0 : index
    %c0_14 = arith.constant 0 : index
    %c0_15 = arith.constant 0 : index
    %16 = vector.load %arg6[%c1, %c0_13, %c0_14, %c0_15] : memref<4x5x8x16xf32, #tpu.memory_space<vmem>>, vector<1x1x8x16xf32>
    %17 = vector.shape_cast %16 : vector<1x1x8x16xf32> to vector<8x16xf32>
    %18 = vector.shape_cast %15 : vector<8x16xf32> to vector<1x1x8x16xf32>
    tpu.vector_store %arg6[%c1, %c0_13, %c0_14, %c0_15], %18 {strides = array<i32>} : memref<4x5x8x16xf32, #tpu.memory_space<vmem>>, vector<1x1x8x16xf32>,
    %19 = vector.extract_strided_slice %0 {offsets = [2, 0, 0], sizes = [1, 16, 16], strides = [1, 1, 1]} : vector<4x16x16xf32> to vector<1x16x16xf32>
    %20 = vector.shape_cast %19 : vector<1x16x16xf32> to vector<16x16xf32>
    %cst_16 = arith.constant dense<0.000000e+00> : vector<8x16xf32>
    %21 = tpu.matmul %3, %20, %cst_16 {dimension_numbers = #tpu.dot_dimension_numbers<[1], [0], [0], [1], [0, 0, 1, 1], [], []>} : vector<8x16xf32>, vector<16x16xf32>, vector<8x16xf32> -> vector<8x16xf32>
    %cst_17 = arith.constant dense<0.000000e+00> : vector<8x16xf32>
    %22 = tpu.matmul %21, %4, %cst_17 {dimension_numbers = #tpu.dot_dimension_numbers<[1], [0], [0], [1], [0, 0, 1, 1], [], []>} : vector<8x16xf32>, vector<16x16xf32>, vector<8x16xf32> -> vector<8x16xf32>
    %c2 = arith.constant 2 : index
    %c0_18 = arith.constant 0 : index
    %c0_19 = arith.constant 0 : index
    %c0_20 = arith.constant 0 : index
    %23 = vector.load %arg6[%c2, %c0_18, %c0_19, %c0_20] : memref<4x5x8x16xf32, #tpu.memory_space<vmem>>, vector<1x1x8x16xf32>
    %24 = vector.shape_cast %23 : vector<1x1x8x16xf32> to vector<8x16xf32>
    %25 = vector.shape_cast %22 : vector<8x16xf32> to vector<1x1x8x16xf32>
    tpu.vector_store %arg6[%c2, %c0_18, %c0_19, %c0_20], %25 {strides = array<i32>} : memref<4x5x8x16xf32, #tpu.memory_space<vmem>>, vector<1x1x8x16xf32>,
    %26 = vector.extract_strided_slice %0 {offsets = [3, 0, 0], sizes = [1, 16, 16], strides = [1, 1, 1]} : vector<4x16x16xf32> to vector<1x16x16xf32>
    %27 = vector.shape_cast %26 : vector<1x16x16xf32> to vector<16x16xf32>
    %cst_21 = arith.constant dense<0.000000e+00> : vector<8x16xf32>
    %28 = tpu.matmul %3, %27, %cst_21 {dimension_numbers = #tpu.dot_dimension_numbers<[1], [0], [0], [1], [0, 0, 1, 1], [], []>} : vector<8x16xf32>, vector<16x16xf32>, vector<8x16xf32> -> vector<8x16xf32>
    %cst_22 = arith.constant dense<0.000000e+00> : vector<8x16xf32>
    %29 = tpu.matmul %28, %4, %cst_22 {dimension_numbers = #tpu.dot_dimension_numbers<[1], [0], [0], [1], [0, 0, 1, 1], [], []>} : vector<8x16xf32>, vector<16x16xf32>, vector<8x16xf32> -> vector<8x16xf32>
    %c3 = arith.constant 3 : index
    %c0_23 = arith.constant 0 : index
    %c0_24 = arith.constant 0 : index
    %c0_25 = arith.constant 0 : index
    %30 = vector.load %arg6[%c3, %c0_23, %c0_24, %c0_25] : memref<4x5x8x16xf32, #tpu.memory_space<vmem>>, vector<1x1x8x16xf32>
    %31 = vector.shape_cast %30 : vector<1x1x8x16xf32> to vector<8x16xf32>
    %32 = vector.shape_cast %29 : vector<8x16xf32> to vector<1x1x8x16xf32>
    tpu.vector_store %arg6[%c3, %c0_23, %c0_24, %c0_25], %32 {strides = array<i32>} : memref<4x5x8x16xf32, #tpu.memory_space<vmem>>, vector<1x1x8x16xf32>,
    %c0_26 = arith.constant 0 : index
    %c0_27 = arith.constant 0 : index
    %c0_28 = arith.constant 0 : index
    %33 = vector.load %arg3[%c0_26, %c0_27, %c0_28] : memref<4x16x32xbf16, #tpu.memory_space<vmem>>, vector<1x16x32xbf16>
    %34 = vector.shape_cast %33 : vector<1x16x32xbf16> to vector<16x32xbf16>
    %cst_29 = arith.constant dense<0.000000e+00> : vector<64x32xf32>
    %35 = tpu.matmul %2, %34, %cst_29 {dimension_numbers = #tpu.dot_dimension_numbers<[1], [0], [0], [1], [0, 0, 1, 1], [], []>} : vector<64x16xbf16>, vector<16x32xbf16>, vector<64x32xf32> -> vector<64x32xf32>
    %36 = arith.truncf %35 : vector<64x32xf32> to vector<64x32xbf16>
    %c0_30 = arith.constant 0 : index
    %c0_31 = arith.constant 0 : index
    %c0_32 = arith.constant 0 : index
    %37 = vector.load %arg2[%c0_30, %c0_31, %c0_32] : memref<4x32x16xbf16, #tpu.memory_space<vmem>>, vector<1x32x16xbf16>
    %38 = vector.shape_cast %37 : vector<1x32x16xbf16> to vector<32x16xbf16>
    %39 = vector.extract_strided_slice %36 {offsets = [0, 0], sizes = [16, 32], strides = [1, 1]} : vector<64x32xbf16> to vector<16x32xbf16>
    %cst_33 = arith.constant dense<0.000000e+00> : vector<32x32xf32>
    %40 = tpu.matmul %38, %39, %cst_33 {dimension_numbers = #tpu.dot_dimension_numbers<[1], [0], [0], [1], [0, 0, 1, 1], [], []>} : vector<32x16xbf16>, vector<16x32xbf16>, vector<32x32xf32> -> vector<32x32xf32>
    %41 = vector.extract_strided_slice %40 {offsets = [0, 0], sizes = [16, 16], strides = [1, 1]} : vector<32x32xf32> to vector<16x16xf32>
    %42 = vector.extract_strided_slice %40 {offsets = [16, 16], sizes = [16, 16], strides = [1, 1]} : vector<32x32xf32> to vector<16x16xf32>
    %43 = arith.subf %41, %42 : vector<16x16xf32>
    %44 = vector.extract_strided_slice %40 {offsets = [0, 16], sizes = [16, 16], strides = [1, 1]} : vector<32x32xf32> to vector<16x16xf32>
    %45 = vector.extract_strided_slice %40 {offsets = [16, 0], sizes = [16, 16], strides = [1, 1]} : vector<32x32xf32> to vector<16x16xf32>
    %46 = arith.addf %44, %45 : vector<16x16xf32>
    %47 = arith.mulf %43, %43 : vector<16x16xf32>
    %48 = arith.mulf %46, %46 : vector<16x16xf32>
    %49 = arith.addf %47, %48 : vector<16x16xf32>
    %50 = math.sqrt %49 : vector<16x16xf32>
    %cst_34 = arith.constant dense<0.000000e+00> : vector<8x16xf32>
    %51 = tpu.matmul %3, %50, %cst_34 {dimension_numbers = #tpu.dot_dimension_numbers<[1], [0], [0], [1], [0, 0, 1, 1], [], []>} : vector<8x16xf32>, vector<16x16xf32>, vector<8x16xf32> -> vector<8x16xf32>
    %cst_35 = arith.constant dense<0.000000e+00> : vector<8x16xf32>
    %52 = tpu.matmul %51, %4, %cst_35 {dimension_numbers = #tpu.dot_dimension_numbers<[1], [0], [0], [1], [0, 0, 1, 1], [], []>} : vector<8x16xf32>, vector<16x16xf32>, vector<8x16xf32> -> vector<8x16xf32>
    %c0_36 = arith.constant 0 : index
    %c1_37 = arith.constant 1 : index
    %c0_38 = arith.constant 0 : index
    %c0_39 = arith.constant 0 : index
    %53 = vector.load %arg6[%c0_36, %c1_37, %c0_38, %c0_39] : memref<4x5x8x16xf32, #tpu.memory_space<vmem>>, vector<1x1x8x16xf32>
    %54 = vector.shape_cast %53 : vector<1x1x8x16xf32> to vector<8x16xf32>
    %55 = vector.shape_cast %52 : vector<8x16xf32> to vector<1x1x8x16xf32>
    tpu.vector_store %arg6[%c0_36, %c1_37, %c0_38, %c0_39], %55 {strides = array<i32>} : memref<4x5x8x16xf32, #tpu.memory_space<vmem>>, vector<1x1x8x16xf32>,
    %c0_40 = arith.constant 0 : index
    %c0_41 = arith.constant 0 : index
    %c0_42 = arith.constant 0 : index
    %56 = vector.load %arg2[%c0_40, %c0_41, %c0_42] : memref<4x32x16xbf16, #tpu.memory_space<vmem>>, vector<1x32x16xbf16>
    %57 = vector.shape_cast %56 : vector<1x32x16xbf16> to vector<32x16xbf16>
    %58 = vector.extract_strided_slice %36 {offsets = [16, 0], sizes = [16, 32], strides = [1, 1]} : vector<64x32xbf16> to vector<16x32xbf16>
    %cst_43 = arith.constant dense<0.000000e+00> : vector<32x32xf32>
    %59 = tpu.matmul %57, %58, %cst_43 {dimension_numbers = #tpu.dot_dimension_numbers<[1], [0], [0], [1], [0, 0, 1, 1], [], []>} : vector<32x16xbf16>, vector<16x32xbf16>, vector<32x32xf32> -> vector<32x32xf32>
    %60 = vector.extract_strided_slice %59 {offsets = [0, 0], sizes = [16, 16], strides = [1, 1]} : vector<32x32xf32> to vector<16x16xf32>
    %61 = vector.extract_strided_slice %59 {offsets = [16, 16], sizes = [16, 16], strides = [1, 1]} : vector<32x32xf32> to vector<16x16xf32>
    %62 = arith.subf %60, %61 : vector<16x16xf32>
    %63 = vector.extract_strided_slice %59 {offsets = [0, 16], sizes = [16, 16], strides = [1, 1]} : vector<32x32xf32> to vector<16x16xf32>
    %64 = vector.extract_strided_slice %59 {offsets = [16, 0], sizes = [16, 16], strides = [1, 1]} : vector<32x32xf32> to vector<16x16xf32>
    %65 = arith.addf %63, %64 : vector<16x16xf32>
    %66 = arith.mulf %62, %62 : vector<16x16xf32>
    %67 = arith.mulf %65, %65 : vector<16x16xf32>
    %68 = arith.addf %66, %67 : vector<16x16xf32>
    %69 = math.sqrt %68 : vector<16x16xf32>
    %cst_44 = arith.constant dense<0.000000e+00> : vector<8x16xf32>
    %70 = tpu.matmul %3, %69, %cst_44 {dimension_numbers = #tpu.dot_dimension_numbers<[1], [0], [0], [1], [0, 0, 1, 1], [], []>} : vector<8x16xf32>, vector<16x16xf32>, vector<8x16xf32> -> vector<8x16xf32>
    %cst_45 = arith.constant dense<0.000000e+00> : vector<8x16xf32>
    %71 = tpu.matmul %70, %4, %cst_45 {dimension_numbers = #tpu.dot_dimension_numbers<[1], [0], [0], [1], [0, 0, 1, 1], [], []>} : vector<8x16xf32>, vector<16x16xf32>, vector<8x16xf32> -> vector<8x16xf32>
    %c1_46 = arith.constant 1 : index
    %c1_47 = arith.constant 1 : index
    %c0_48 = arith.constant 0 : index
    %c0_49 = arith.constant 0 : index
    %72 = vector.load %arg6[%c1_46, %c1_47, %c0_48, %c0_49] : memref<4x5x8x16xf32, #tpu.memory_space<vmem>>, vector<1x1x8x16xf32>
    %73 = vector.shape_cast %72 : vector<1x1x8x16xf32> to vector<8x16xf32>
    %74 = vector.shape_cast %71 : vector<8x16xf32> to vector<1x1x8x16xf32>
    tpu.vector_store %arg6[%c1_46, %c1_47, %c0_48, %c0_49], %74 {strides = array<i32>} : memref<4x5x8x16xf32, #tpu.memory_space<vmem>>, vector<1x1x8x16xf32>,
    %c0_50 = arith.constant 0 : index
    %c0_51 = arith.constant 0 : index
    %c0_52 = arith.constant 0 : index
    %75 = vector.load %arg2[%c0_50, %c0_51, %c0_52] : memref<4x32x16xbf16, #tpu.memory_space<vmem>>, vector<1x32x16xbf16>
    %76 = vector.shape_cast %75 : vector<1x32x16xbf16> to vector<32x16xbf16>
    %77 = vector.extract_strided_slice %36 {offsets = [32, 0], sizes = [16, 32], strides = [1, 1]} : vector<64x32xbf16> to vector<16x32xbf16>
    %cst_53 = arith.constant dense<0.000000e+00> : vector<32x32xf32>
    %78 = tpu.matmul %76, %77, %cst_53 {dimension_numbers = #tpu.dot_dimension_numbers<[1], [0], [0], [1], [0, 0, 1, 1], [], []>} : vector<32x16xbf16>, vector<16x32xbf16>, vector<32x32xf32> -> vector<32x32xf32>
    %79 = vector.extract_strided_slice %78 {offsets = [0, 0], sizes = [16, 16], strides = [1, 1]} : vector<32x32xf32> to vector<16x16xf32>
    %80 = vector.extract_strided_slice %78 {offsets = [16, 16], sizes = [16, 16], strides = [1, 1]} : vector<32x32xf32> to vector<16x16xf32>
    %81 = arith.subf %79, %80 : vector<16x16xf32>
    %82 = vector.extract_strided_slice %78 {offsets = [0, 16], sizes = [16, 16], strides = [1, 1]} : vector<32x32xf32> to vector<16x16xf32>
    %83 = vector.extract_strided_slice %78 {offsets = [16, 0], sizes = [16, 16], strides = [1, 1]} : vector<32x32xf32> to vector<16x16xf32>
    %84 = arith.addf %82, %83 : vector<16x16xf32>
    %85 = arith.mulf %81, %81 : vector<16x16xf32>
    %86 = arith.mulf %84, %84 : vector<16x16xf32>
    %87 = arith.addf %85, %86 : vector<16x16xf32>
    %88 = math.sqrt %87 : vector<16x16xf32>
    %cst_54 = arith.constant dense<0.000000e+00> : vector<8x16xf32>
    %89 = tpu.matmul %3, %88, %cst_54 {dimension_numbers = #tpu.dot_dimension_numbers<[1], [0], [0], [1], [0, 0, 1, 1], [], []>} : vector<8x16xf32>, vector<16x16xf32>, vector<8x16xf32> -> vector<8x16xf32>
    %cst_55 = arith.constant dense<0.000000e+00> : vector<8x16xf32>
    %90 = tpu.matmul %89, %4, %cst_55 {dimension_numbers = #tpu.dot_dimension_numbers<[1], [0], [0], [1], [0, 0, 1, 1], [], []>} : vector<8x16xf32>, vector<16x16xf32>, vector<8x16xf32> -> vector<8x16xf32>
    %c2_56 = arith.constant 2 : index
    %c1_57 = arith.constant 1 : index
    %c0_58 = arith.constant 0 : index
    %c0_59 = arith.constant 0 : index
    %91 = vector.load %arg6[%c2_56, %c1_57, %c0_58, %c0_59] : memref<4x5x8x16xf32, #tpu.memory_space<vmem>>, vector<1x1x8x16xf32>
    %92 = vector.shape_cast %91 : vector<1x1x8x16xf32> to vector<8x16xf32>
    %93 = vector.shape_cast %90 : vector<8x16xf32> to vector<1x1x8x16xf32>
    tpu.vector_store %arg6[%c2_56, %c1_57, %c0_58, %c0_59], %93 {strides = array<i32>} : memref<4x5x8x16xf32, #tpu.memory_space<vmem>>, vector<1x1x8x16xf32>,
    %c0_60 = arith.constant 0 : index
    %c0_61 = arith.constant 0 : index
    %c0_62 = arith.constant 0 : index
    %94 = vector.load %arg2[%c0_60, %c0_61, %c0_62] : memref<4x32x16xbf16, #tpu.memory_space<vmem>>, vector<1x32x16xbf16>
    %95 = vector.shape_cast %94 : vector<1x32x16xbf16> to vector<32x16xbf16>
    %96 = vector.extract_strided_slice %36 {offsets = [48, 0], sizes = [16, 32], strides = [1, 1]} : vector<64x32xbf16> to vector<16x32xbf16>
    %cst_63 = arith.constant dense<0.000000e+00> : vector<32x32xf32>
    %97 = tpu.matmul %95, %96, %cst_63 {dimension_numbers = #tpu.dot_dimension_numbers<[1], [0], [0], [1], [0, 0, 1, 1], [], []>} : vector<32x16xbf16>, vector<16x32xbf16>, vector<32x32xf32> -> vector<32x32xf32>
    %98 = vector.extract_strided_slice %97 {offsets = [0, 0], sizes = [16, 16], strides = [1, 1]} : vector<32x32xf32> to vector<16x16xf32>
    %99 = vector.extract_strided_slice %97 {offsets = [16, 16], sizes = [16, 16], strides = [1, 1]} : vector<32x32xf32> to vector<16x16xf32>
    %100 = arith.subf %98, %99 : vector<16x16xf32>
    %101 = vector.extract_strided_slice %97 {offsets = [0, 16], sizes = [16, 16], strides = [1, 1]} : vector<32x32xf32> to vector<16x16xf32>
    %102 = vector.extract_strided_slice %97 {offsets = [16, 0], sizes = [16, 16], strides = [1, 1]} : vector<32x32xf32> to vector<16x16xf32>
    %103 = arith.addf %101, %102 : vector<16x16xf32>
    %104 = arith.mulf %100, %100 : vector<16x16xf32>
    %105 = arith.mulf %103, %103 : vector<16x16xf32>
    %106 = arith.addf %104, %105 : vector<16x16xf32>
    %107 = math.sqrt %106 : vector<16x16xf32>
    %cst_64 = arith.constant dense<0.000000e+00> : vector<8x16xf32>
    %108 = tpu.matmul %3, %107, %cst_64 {dimension_numbers = #tpu.dot_dimension_numbers<[1], [0], [0], [1], [0, 0, 1, 1], [], []>} : vector<8x16xf32>, vector<16x16xf32>, vector<8x16xf32> -> vector<8x16xf32>
    %cst_65 = arith.constant dense<0.000000e+00> : vector<8x16xf32>
    %109 = tpu.matmul %108, %4, %cst_65 {dimension_numbers = #tpu.dot_dimension_numbers<[1], [0], [0], [1], [0, 0, 1, 1], [], []>} : vector<8x16xf32>, vector<16x16xf32>, vector<8x16xf32> -> vector<8x16xf32>
    %c3_66 = arith.constant 3 : index
    %c1_67 = arith.constant 1 : index
    %c0_68 = arith.constant 0 : index
    %c0_69 = arith.constant 0 : index
    %110 = vector.load %arg6[%c3_66, %c1_67, %c0_68, %c0_69] : memref<4x5x8x16xf32, #tpu.memory_space<vmem>>, vector<1x1x8x16xf32>
    %111 = vector.shape_cast %110 : vector<1x1x8x16xf32> to vector<8x16xf32>
    %112 = vector.shape_cast %109 : vector<8x16xf32> to vector<1x1x8x16xf32>
    tpu.vector_store %arg6[%c3_66, %c1_67, %c0_68, %c0_69], %112 {strides = array<i32>} : memref<4x5x8x16xf32, #tpu.memory_space<vmem>>, vector<1x1x8x16xf32>,
    %c1_70 = arith.constant 1 : index
    %c0_71 = arith.constant 0 : index
    %c0_72 = arith.constant 0 : index
    %113 = vector.load %arg3[%c1_70, %c0_71, %c0_72] : memref<4x16x32xbf16, #tpu.memory_space<vmem>>, vector<1x16x32xbf16>
    %114 = vector.shape_cast %113 : vector<1x16x32xbf16> to vector<16x32xbf16>
    %cst_73 = arith.constant dense<0.000000e+00> : vector<64x32xf32>
    %115 = tpu.matmul %2, %114, %cst_73 {dimension_numbers = #tpu.dot_dimension_numbers<[1], [0], [0], [1], [0, 0, 1, 1], [], []>} : vector<64x16xbf16>, vector<16x32xbf16>, vector<64x32xf32> -> vector<64x32xf32>
    %116 = arith.truncf %115 : vector<64x32xf32> to vector<64x32xbf16>
    %c1_74 = arith.constant 1 : index
    %c0_75 = arith.constant 0 : index
    %c0_76 = arith.constant 0 : index
    %117 = vector.load %arg2[%c1_74, %c0_75, %c0_76] : memref<4x32x16xbf16, #tpu.memory_space<vmem>>, vector<1x32x16xbf16>
    %118 = vector.shape_cast %117 : vector<1x32x16xbf16> to vector<32x16xbf16>
    %119 = vector.extract_strided_slice %116 {offsets = [0, 0], sizes = [16, 32], strides = [1, 1]} : vector<64x32xbf16> to vector<16x32xbf16>
    %cst_77 = arith.constant dense<0.000000e+00> : vector<32x32xf32>
    %120 = tpu.matmul %118, %119, %cst_77 {dimension_numbers = #tpu.dot_dimension_numbers<[1], [0], [0], [1], [0, 0, 1, 1], [], []>} : vector<32x16xbf16>, vector<16x32xbf16>, vector<32x32xf32> -> vector<32x32xf32>
    %121 = vector.extract_strided_slice %120 {offsets = [0, 0], sizes = [16, 16], strides = [1, 1]} : vector<32x32xf32> to vector<16x16xf32>
    %122 = vector.extract_strided_slice %120 {offsets = [16, 16], sizes = [16, 16], strides = [1, 1]} : vector<32x32xf32> to vector<16x16xf32>
    %123 = arith.subf %121, %122 : vector<16x16xf32>
    %124 = vector.extract_strided_slice %120 {offsets = [0, 16], sizes = [16, 16], strides = [1, 1]} : vector<32x32xf32> to vector<16x16xf32>
    %125 = vector.extract_strided_slice %120 {offsets = [16, 0], sizes = [16, 16], strides = [1, 1]} : vector<32x32xf32> to vector<16x16xf32>
    %126 = arith.addf %124, %125 : vector<16x16xf32>
    %127 = arith.mulf %123, %123 : vector<16x16xf32>
    %128 = arith.mulf %126, %126 : vector<16x16xf32>
    %129 = arith.addf %127, %128 : vector<16x16xf32>
    %130 = math.sqrt %129 : vector<16x16xf32>
    %cst_78 = arith.constant dense<0.000000e+00> : vector<8x16xf32>
    %131 = tpu.matmul %3, %130, %cst_78 {dimension_numbers = #tpu.dot_dimension_numbers<[1], [0], [0], [1], [0, 0, 1, 1], [], []>} : vector<8x16xf32>, vector<16x16xf32>, vector<8x16xf32> -> vector<8x16xf32>
    %cst_79 = arith.constant dense<0.000000e+00> : vector<8x16xf32>
    %132 = tpu.matmul %131, %4, %cst_79 {dimension_numbers = #tpu.dot_dimension_numbers<[1], [0], [0], [1], [0, 0, 1, 1], [], []>} : vector<8x16xf32>, vector<16x16xf32>, vector<8x16xf32> -> vector<8x16xf32>
    %c0_80 = arith.constant 0 : index
    %c2_81 = arith.constant 2 : index
    %c0_82 = arith.constant 0 : index
    %c0_83 = arith.constant 0 : index
    %133 = vector.load %arg6[%c0_80, %c2_81, %c0_82, %c0_83] : memref<4x5x8x16xf32, #tpu.memory_space<vmem>>, vector<1x1x8x16xf32>
    %134 = vector.shape_cast %133 : vector<1x1x8x16xf32> to vector<8x16xf32>
    %135 = vector.shape_cast %132 : vector<8x16xf32> to vector<1x1x8x16xf32>
    tpu.vector_store %arg6[%c0_80, %c2_81, %c0_82, %c0_83], %135 {strides = array<i32>} : memref<4x5x8x16xf32, #tpu.memory_space<vmem>>, vector<1x1x8x16xf32>,
    %c1_84 = arith.constant 1 : index
    %c0_85 = arith.constant 0 : index
    %c0_86 = arith.constant 0 : index
    %136 = vector.load %arg2[%c1_84, %c0_85, %c0_86] : memref<4x32x16xbf16, #tpu.memory_space<vmem>>, vector<1x32x16xbf16>
    %137 = vector.shape_cast %136 : vector<1x32x16xbf16> to vector<32x16xbf16>
    %138 = vector.extract_strided_slice %116 {offsets = [16, 0], sizes = [16, 32], strides = [1, 1]} : vector<64x32xbf16> to vector<16x32xbf16>
    %cst_87 = arith.constant dense<0.000000e+00> : vector<32x32xf32>
    %139 = tpu.matmul %137, %138, %cst_87 {dimension_numbers = #tpu.dot_dimension_numbers<[1], [0], [0], [1], [0, 0, 1, 1], [], []>} : vector<32x16xbf16>, vector<16x32xbf16>, vector<32x32xf32> -> vector<32x32xf32>
    %140 = vector.extract_strided_slice %139 {offsets = [0, 0], sizes = [16, 16], strides = [1, 1]} : vector<32x32xf32> to vector<16x16xf32>
    %141 = vector.extract_strided_slice %139 {offsets = [16, 16], sizes = [16, 16], strides = [1, 1]} : vector<32x32xf32> to vector<16x16xf32>
    %142 = arith.subf %140, %141 : vector<16x16xf32>
    %143 = vector.extract_strided_slice %139 {offsets = [0, 16], sizes = [16, 16], strides = [1, 1]} : vector<32x32xf32> to vector<16x16xf32>
    %144 = vector.extract_strided_slice %139 {offsets = [16, 0], sizes = [16, 16], strides = [1, 1]} : vector<32x32xf32> to vector<16x16xf32>
    %145 = arith.addf %143, %144 : vector<16x16xf32>
    %146 = arith.mulf %142, %142 : vector<16x16xf32>
    %147 = arith.mulf %145, %145 : vector<16x16xf32>
    %148 = arith.addf %146, %147 : vector<16x16xf32>
    %149 = math.sqrt %148 : vector<16x16xf32>
    %cst_88 = arith.constant dense<0.000000e+00> : vector<8x16xf32>
    %150 = tpu.matmul %3, %149, %cst_88 {dimension_numbers = #tpu.dot_dimension_numbers<[1], [0], [0], [1], [0, 0, 1, 1], [], []>} : vector<8x16xf32>, vector<16x16xf32>, vector<8x16xf32> -> vector<8x16xf32>
    %cst_89 = arith.constant dense<0.000000e+00> : vector<8x16xf32>
    %151 = tpu.matmul %150, %4, %cst_89 {dimension_numbers = #tpu.dot_dimension_numbers<[1], [0], [0], [1], [0, 0, 1, 1], [], []>} : vector<8x16xf32>, vector<16x16xf32>, vector<8x16xf32> -> vector<8x16xf32>
    %c1_90 = arith.constant 1 : index
    %c2_91 = arith.constant 2 : index
    %c0_92 = arith.constant 0 : index
    %c0_93 = arith.constant 0 : index
    %152 = vector.load %arg6[%c1_90, %c2_91, %c0_92, %c0_93] : memref<4x5x8x16xf32, #tpu.memory_space<vmem>>, vector<1x1x8x16xf32>
    %153 = vector.shape_cast %152 : vector<1x1x8x16xf32> to vector<8x16xf32>
    %154 = vector.shape_cast %151 : vector<8x16xf32> to vector<1x1x8x16xf32>
    tpu.vector_store %arg6[%c1_90, %c2_91, %c0_92, %c0_93], %154 {strides = array<i32>} : memref<4x5x8x16xf32, #tpu.memory_space<vmem>>, vector<1x1x8x16xf32>,
    %c1_94 = arith.constant 1 : index
    %c0_95 = arith.constant 0 : index
    %c0_96 = arith.constant 0 : index
    %155 = vector.load %arg2[%c1_94, %c0_95, %c0_96] : memref<4x32x16xbf16, #tpu.memory_space<vmem>>, vector<1x32x16xbf16>
    %156 = vector.shape_cast %155 : vector<1x32x16xbf16> to vector<32x16xbf16>
    %157 = vector.extract_strided_slice %116 {offsets = [32, 0], sizes = [16, 32], strides = [1, 1]} : vector<64x32xbf16> to vector<16x32xbf16>
    %cst_97 = arith.constant dense<0.000000e+00> : vector<32x32xf32>
    %158 = tpu.matmul %156, %157, %cst_97 {dimension_numbers = #tpu.dot_dimension_numbers<[1], [0], [0], [1], [0, 0, 1, 1], [], []>} : vector<32x16xbf16>, vector<16x32xbf16>, vector<32x32xf32> -> vector<32x32xf32>
    %159 = vector.extract_strided_slice %158 {offsets = [0, 0], sizes = [16, 16], strides = [1, 1]} : vector<32x32xf32> to vector<16x16xf32>
    %160 = vector.extract_strided_slice %158 {offsets = [16, 16], sizes = [16, 16], strides = [1, 1]} : vector<32x32xf32> to vector<16x16xf32>
    %161 = arith.subf %159, %160 : vector<16x16xf32>
    %162 = vector.extract_strided_slice %158 {offsets = [0, 16], sizes = [16, 16], strides = [1, 1]} : vector<32x32xf32> to vector<16x16xf32>
    %163 = vector.extract_strided_slice %158 {offsets = [16, 0], sizes = [16, 16], strides = [1, 1]} : vector<32x32xf32> to vector<16x16xf32>
    %164 = arith.addf %162, %163 : vector<16x16xf32>
    %165 = arith.mulf %161, %161 : vector<16x16xf32>
    %166 = arith.mulf %164, %164 : vector<16x16xf32>
    %167 = arith.addf %165, %166 : vector<16x16xf32>
    %168 = math.sqrt %167 : vector<16x16xf32>
    %cst_98 = arith.constant dense<0.000000e+00> : vector<8x16xf32>
    %169 = tpu.matmul %3, %168, %cst_98 {dimension_numbers = #tpu.dot_dimension_numbers<[1], [0], [0], [1], [0, 0, 1, 1], [], []>} : vector<8x16xf32>, vector<16x16xf32>, vector<8x16xf32> -> vector<8x16xf32>
    %cst_99 = arith.constant dense<0.000000e+00> : vector<8x16xf32>
    %170 = tpu.matmul %169, %4, %cst_99 {dimension_numbers = #tpu.dot_dimension_numbers<[1], [0], [0], [1], [0, 0, 1, 1], [], []>} : vector<8x16xf32>, vector<16x16xf32>, vector<8x16xf32> -> vector<8x16xf32>
    %c2_100 = arith.constant 2 : index
    %c2_101 = arith.constant 2 : index
    %c0_102 = arith.constant 0 : index
    %c0_103 = arith.constant 0 : index
    %171 = vector.load %arg6[%c2_100, %c2_101, %c0_102, %c0_103] : memref<4x5x8x16xf32, #tpu.memory_space<vmem>>, vector<1x1x8x16xf32>
    %172 = vector.shape_cast %171 : vector<1x1x8x16xf32> to vector<8x16xf32>
    %173 = vector.shape_cast %170 : vector<8x16xf32> to vector<1x1x8x16xf32>
    tpu.vector_store %arg6[%c2_100, %c2_101, %c0_102, %c0_103], %173 {strides = array<i32>} : memref<4x5x8x16xf32, #tpu.memory_space<vmem>>, vector<1x1x8x16xf32>,
    %c1_104 = arith.constant 1 : index
    %c0_105 = arith.constant 0 : index
    %c0_106 = arith.constant 0 : index
    %174 = vector.load %arg2[%c1_104, %c0_105, %c0_106] : memref<4x32x16xbf16, #tpu.memory_space<vmem>>, vector<1x32x16xbf16>
    %175 = vector.shape_cast %174 : vector<1x32x16xbf16> to vector<32x16xbf16>
    %176 = vector.extract_strided_slice %116 {offsets = [48, 0], sizes = [16, 32], strides = [1, 1]} : vector<64x32xbf16> to vector<16x32xbf16>
    %cst_107 = arith.constant dense<0.000000e+00> : vector<32x32xf32>
    %177 = tpu.matmul %175, %176, %cst_107 {dimension_numbers = #tpu.dot_dimension_numbers<[1], [0], [0], [1], [0, 0, 1, 1], [], []>} : vector<32x16xbf16>, vector<16x32xbf16>, vector<32x32xf32> -> vector<32x32xf32>
    %178 = vector.extract_strided_slice %177 {offsets = [0, 0], sizes = [16, 16], strides = [1, 1]} : vector<32x32xf32> to vector<16x16xf32>
    %179 = vector.extract_strided_slice %177 {offsets = [16, 16], sizes = [16, 16], strides = [1, 1]} : vector<32x32xf32> to vector<16x16xf32>
    %180 = arith.subf %178, %179 : vector<16x16xf32>
    %181 = vector.extract_strided_slice %177 {offsets = [0, 16], sizes = [16, 16], strides = [1, 1]} : vector<32x32xf32> to vector<16x16xf32>
    %182 = vector.extract_strided_slice %177 {offsets = [16, 0], sizes = [16, 16], strides = [1, 1]} : vector<32x32xf32> to vector<16x16xf32>
    %183 = arith.addf %181, %182 : vector<16x16xf32>
    %184 = arith.mulf %180, %180 : vector<16x16xf32>
    %185 = arith.mulf %183, %183 : vector<16x16xf32>
    %186 = arith.addf %184, %185 : vector<16x16xf32>
    %187 = math.sqrt %186 : vector<16x16xf32>
    %cst_108 = arith.constant dense<0.000000e+00> : vector<8x16xf32>
    %188 = tpu.matmul %3, %187, %cst_108 {dimension_numbers = #tpu.dot_dimension_numbers<[1], [0], [0], [1], [0, 0, 1, 1], [], []>} : vector<8x16xf32>, vector<16x16xf32>, vector<8x16xf32> -> vector<8x16xf32>
    %cst_109 = arith.constant dense<0.000000e+00> : vector<8x16xf32>
    %189 = tpu.matmul %188, %4, %cst_109 {dimension_numbers = #tpu.dot_dimension_numbers<[1], [0], [0], [1], [0, 0, 1, 1], [], []>} : vector<8x16xf32>, vector<16x16xf32>, vector<8x16xf32> -> vector<8x16xf32>
    %c3_110 = arith.constant 3 : index
    %c2_111 = arith.constant 2 : index
    %c0_112 = arith.constant 0 : index
    %c0_113 = arith.constant 0 : index
    %190 = vector.load %arg6[%c3_110, %c2_111, %c0_112, %c0_113] : memref<4x5x8x16xf32, #tpu.memory_space<vmem>>, vector<1x1x8x16xf32>
    %191 = vector.shape_cast %190 : vector<1x1x8x16xf32> to vector<8x16xf32>
    %192 = vector.shape_cast %189 : vector<8x16xf32> to vector<1x1x8x16xf32>
    tpu.vector_store %arg6[%c3_110, %c2_111, %c0_112, %c0_113], %192 {strides = array<i32>} : memref<4x5x8x16xf32, #tpu.memory_space<vmem>>, vector<1x1x8x16xf32>,
    %c2_114 = arith.constant 2 : index
    %c0_115 = arith.constant 0 : index
    %c0_116 = arith.constant 0 : index
    %193 = vector.load %arg3[%c2_114, %c0_115, %c0_116] : memref<4x16x32xbf16, #tpu.memory_space<vmem>>, vector<1x16x32xbf16>
    %194 = vector.shape_cast %193 : vector<1x16x32xbf16> to vector<16x32xbf16>
    %cst_117 = arith.constant dense<0.000000e+00> : vector<64x32xf32>
    %195 = tpu.matmul %2, %194, %cst_117 {dimension_numbers = #tpu.dot_dimension_numbers<[1], [0], [0], [1], [0, 0, 1, 1], [], []>} : vector<64x16xbf16>, vector<16x32xbf16>, vector<64x32xf32> -> vector<64x32xf32>
    %196 = arith.truncf %195 : vector<64x32xf32> to vector<64x32xbf16>
    %c2_118 = arith.constant 2 : index
    %c0_119 = arith.constant 0 : index
    %c0_120 = arith.constant 0 : index
    %197 = vector.load %arg2[%c2_118, %c0_119, %c0_120] : memref<4x32x16xbf16, #tpu.memory_space<vmem>>, vector<1x32x16xbf16>
    %198 = vector.shape_cast %197 : vector<1x32x16xbf16> to vector<32x16xbf16>
    %199 = vector.extract_strided_slice %196 {offsets = [0, 0], sizes = [16, 32], strides = [1, 1]} : vector<64x32xbf16> to vector<16x32xbf16>
    %cst_121 = arith.constant dense<0.000000e+00> : vector<32x32xf32>
    %200 = tpu.matmul %198, %199, %cst_121 {dimension_numbers = #tpu.dot_dimension_numbers<[1], [0], [0], [1], [0, 0, 1, 1], [], []>} : vector<32x16xbf16>, vector<16x32xbf16>, vector<32x32xf32> -> vector<32x32xf32>
    %201 = vector.extract_strided_slice %200 {offsets = [0, 0], sizes = [16, 16], strides = [1, 1]} : vector<32x32xf32> to vector<16x16xf32>
    %202 = vector.extract_strided_slice %200 {offsets = [16, 16], sizes = [16, 16], strides = [1, 1]} : vector<32x32xf32> to vector<16x16xf32>
    %203 = arith.subf %201, %202 : vector<16x16xf32>
    %204 = vector.extract_strided_slice %200 {offsets = [0, 16], sizes = [16, 16], strides = [1, 1]} : vector<32x32xf32> to vector<16x16xf32>
    %205 = vector.extract_strided_slice %200 {offsets = [16, 0], sizes = [16, 16], strides = [1, 1]} : vector<32x32xf32> to vector<16x16xf32>
    %206 = arith.addf %204, %205 : vector<16x16xf32>
    %207 = arith.mulf %203, %203 : vector<16x16xf32>
    %208 = arith.mulf %206, %206 : vector<16x16xf32>
    %209 = arith.addf %207, %208 : vector<16x16xf32>
    %210 = math.sqrt %209 : vector<16x16xf32>
    %cst_122 = arith.constant dense<0.000000e+00> : vector<8x16xf32>
    %211 = tpu.matmul %3, %210, %cst_122 {dimension_numbers = #tpu.dot_dimension_numbers<[1], [0], [0], [1], [0, 0, 1, 1], [], []>} : vector<8x16xf32>, vector<16x16xf32>, vector<8x16xf32> -> vector<8x16xf32>
    %cst_123 = arith.constant dense<0.000000e+00> : vector<8x16xf32>
    %212 = tpu.matmul %211, %4, %cst_123 {dimension_numbers = #tpu.dot_dimension_numbers<[1], [0], [0], [1], [0, 0, 1, 1], [], []>} : vector<8x16xf32>, vector<16x16xf32>, vector<8x16xf32> -> vector<8x16xf32>
    %c0_124 = arith.constant 0 : index
    %c3_125 = arith.constant 3 : index
    %c0_126 = arith.constant 0 : index
    %c0_127 = arith.constant 0 : index
    %213 = vector.load %arg6[%c0_124, %c3_125, %c0_126, %c0_127] : memref<4x5x8x16xf32, #tpu.memory_space<vmem>>, vector<1x1x8x16xf32>
    %214 = vector.shape_cast %213 : vector<1x1x8x16xf32> to vector<8x16xf32>
    %215 = vector.shape_cast %212 : vector<8x16xf32> to vector<1x1x8x16xf32>
    tpu.vector_store %arg6[%c0_124, %c3_125, %c0_126, %c0_127], %215 {strides = array<i32>} : memref<4x5x8x16xf32, #tpu.memory_space<vmem>>, vector<1x1x8x16xf32>,
    %c2_128 = arith.constant 2 : index
    %c0_129 = arith.constant 0 : index
    %c0_130 = arith.constant 0 : index
    %216 = vector.load %arg2[%c2_128, %c0_129, %c0_130] : memref<4x32x16xbf16, #tpu.memory_space<vmem>>, vector<1x32x16xbf16>
    %217 = vector.shape_cast %216 : vector<1x32x16xbf16> to vector<32x16xbf16>
    %218 = vector.extract_strided_slice %196 {offsets = [16, 0], sizes = [16, 32], strides = [1, 1]} : vector<64x32xbf16> to vector<16x32xbf16>
    %cst_131 = arith.constant dense<0.000000e+00> : vector<32x32xf32>
    %219 = tpu.matmul %217, %218, %cst_131 {dimension_numbers = #tpu.dot_dimension_numbers<[1], [0], [0], [1], [0, 0, 1, 1], [], []>} : vector<32x16xbf16>, vector<16x32xbf16>, vector<32x32xf32> -> vector<32x32xf32>
    %220 = vector.extract_strided_slice %219 {offsets = [0, 0], sizes = [16, 16], strides = [1, 1]} : vector<32x32xf32> to vector<16x16xf32>
    %221 = vector.extract_strided_slice %219 {offsets = [16, 16], sizes = [16, 16], strides = [1, 1]} : vector<32x32xf32> to vector<16x16xf32>
    %222 = arith.subf %220, %221 : vector<16x16xf32>
    %223 = vector.extract_strided_slice %219 {offsets = [0, 16], sizes = [16, 16], strides = [1, 1]} : vector<32x32xf32> to vector<16x16xf32>
    %224 = vector.extract_strided_slice %219 {offsets = [16, 0], sizes = [16, 16], strides = [1, 1]} : vector<32x32xf32> to vector<16x16xf32>
    %225 = arith.addf %223, %224 : vector<16x16xf32>
    %226 = arith.mulf %222, %222 : vector<16x16xf32>
    %227 = arith.mulf %225, %225 : vector<16x16xf32>
    %228 = arith.addf %226, %227 : vector<16x16xf32>
    %229 = math.sqrt %228 : vector<16x16xf32>
    %cst_132 = arith.constant dense<0.000000e+00> : vector<8x16xf32>
    %230 = tpu.matmul %3, %229, %cst_132 {dimension_numbers = #tpu.dot_dimension_numbers<[1], [0], [0], [1], [0, 0, 1, 1], [], []>} : vector<8x16xf32>, vector<16x16xf32>, vector<8x16xf32> -> vector<8x16xf32>
    %cst_133 = arith.constant dense<0.000000e+00> : vector<8x16xf32>
    %231 = tpu.matmul %230, %4, %cst_133 {dimension_numbers = #tpu.dot_dimension_numbers<[1], [0], [0], [1], [0, 0, 1, 1], [], []>} : vector<8x16xf32>, vector<16x16xf32>, vector<8x16xf32> -> vector<8x16xf32>
    %c1_134 = arith.constant 1 : index
    %c3_135 = arith.constant 3 : index
    %c0_136 = arith.constant 0 : index
    %c0_137 = arith.constant 0 : index
    %232 = vector.load %arg6[%c1_134, %c3_135, %c0_136, %c0_137] : memref<4x5x8x16xf32, #tpu.memory_space<vmem>>, vector<1x1x8x16xf32>
    %233 = vector.shape_cast %232 : vector<1x1x8x16xf32> to vector<8x16xf32>
    %234 = vector.shape_cast %231 : vector<8x16xf32> to vector<1x1x8x16xf32>
    tpu.vector_store %arg6[%c1_134, %c3_135, %c0_136, %c0_137], %234 {strides = array<i32>} : memref<4x5x8x16xf32, #tpu.memory_space<vmem>>, vector<1x1x8x16xf32>,
    %c2_138 = arith.constant 2 : index
    %c0_139 = arith.constant 0 : index
    %c0_140 = arith.constant 0 : index
    %235 = vector.load %arg2[%c2_138, %c0_139, %c0_140] : memref<4x32x16xbf16, #tpu.memory_space<vmem>>, vector<1x32x16xbf16>
    %236 = vector.shape_cast %235 : vector<1x32x16xbf16> to vector<32x16xbf16>
    %237 = vector.extract_strided_slice %196 {offsets = [32, 0], sizes = [16, 32], strides = [1, 1]} : vector<64x32xbf16> to vector<16x32xbf16>
    %cst_141 = arith.constant dense<0.000000e+00> : vector<32x32xf32>
    %238 = tpu.matmul %236, %237, %cst_141 {dimension_numbers = #tpu.dot_dimension_numbers<[1], [0], [0], [1], [0, 0, 1, 1], [], []>} : vector<32x16xbf16>, vector<16x32xbf16>, vector<32x32xf32> -> vector<32x32xf32>
    %239 = vector.extract_strided_slice %238 {offsets = [0, 0], sizes = [16, 16], strides = [1, 1]} : vector<32x32xf32> to vector<16x16xf32>
    %240 = vector.extract_strided_slice %238 {offsets = [16, 16], sizes = [16, 16], strides = [1, 1]} : vector<32x32xf32> to vector<16x16xf32>
    %241 = arith.subf %239, %240 : vector<16x16xf32>
    %242 = vector.extract_strided_slice %238 {offsets = [0, 16], sizes = [16, 16], strides = [1, 1]} : vector<32x32xf32> to vector<16x16xf32>
    %243 = vector.extract_strided_slice %238 {offsets = [16, 0], sizes = [16, 16], strides = [1, 1]} : vector<32x32xf32> to vector<16x16xf32>
    %244 = arith.addf %242, %243 : vector<16x16xf32>
    %245 = arith.mulf %241, %241 : vector<16x16xf32>
    %246 = arith.mulf %244, %244 : vector<16x16xf32>
    %247 = arith.addf %245, %246 : vector<16x16xf32>
    %248 = math.sqrt %247 : vector<16x16xf32>
    %cst_142 = arith.constant dense<0.000000e+00> : vector<8x16xf32>
    %249 = tpu.matmul %3, %248, %cst_142 {dimension_numbers = #tpu.dot_dimension_numbers<[1], [0], [0], [1], [0, 0, 1, 1], [], []>} : vector<8x16xf32>, vector<16x16xf32>, vector<8x16xf32> -> vector<8x16xf32>
    %cst_143 = arith.constant dense<0.000000e+00> : vector<8x16xf32>
    %250 = tpu.matmul %249, %4, %cst_143 {dimension_numbers = #tpu.dot_dimension_numbers<[1], [0], [0], [1], [0, 0, 1, 1], [], []>} : vector<8x16xf32>, vector<16x16xf32>, vector<8x16xf32> -> vector<8x16xf32>
    %c2_144 = arith.constant 2 : index
    %c3_145 = arith.constant 3 : index
    %c0_146 = arith.constant 0 : index
    %c0_147 = arith.constant 0 : index
    %251 = vector.load %arg6[%c2_144, %c3_145, %c0_146, %c0_147] : memref<4x5x8x16xf32, #tpu.memory_space<vmem>>, vector<1x1x8x16xf32>
    %252 = vector.shape_cast %251 : vector<1x1x8x16xf32> to vector<8x16xf32>
    %253 = vector.shape_cast %250 : vector<8x16xf32> to vector<1x1x8x16xf32>
    tpu.vector_store %arg6[%c2_144, %c3_145, %c0_146, %c0_147], %253 {strides = array<i32>} : memref<4x5x8x16xf32, #tpu.memory_space<vmem>>, vector<1x1x8x16xf32>,
    %c2_148 = arith.constant 2 : index
    %c0_149 = arith.constant 0 : index
    %c0_150 = arith.constant 0 : index
    %254 = vector.load %arg2[%c2_148, %c0_149, %c0_150] : memref<4x32x16xbf16, #tpu.memory_space<vmem>>, vector<1x32x16xbf16>
    %255 = vector.shape_cast %254 : vector<1x32x16xbf16> to vector<32x16xbf16>
    %256 = vector.extract_strided_slice %196 {offsets = [48, 0], sizes = [16, 32], strides = [1, 1]} : vector<64x32xbf16> to vector<16x32xbf16>
    %cst_151 = arith.constant dense<0.000000e+00> : vector<32x32xf32>
    %257 = tpu.matmul %255, %256, %cst_151 {dimension_numbers = #tpu.dot_dimension_numbers<[1], [0], [0], [1], [0, 0, 1, 1], [], []>} : vector<32x16xbf16>, vector<16x32xbf16>, vector<32x32xf32> -> vector<32x32xf32>
    %258 = vector.extract_strided_slice %257 {offsets = [0, 0], sizes = [16, 16], strides = [1, 1]} : vector<32x32xf32> to vector<16x16xf32>
    %259 = vector.extract_strided_slice %257 {offsets = [16, 16], sizes = [16, 16], strides = [1, 1]} : vector<32x32xf32> to vector<16x16xf32>
    %260 = arith.subf %258, %259 : vector<16x16xf32>
    %261 = vector.extract_strided_slice %257 {offsets = [0, 16], sizes = [16, 16], strides = [1, 1]} : vector<32x32xf32> to vector<16x16xf32>
    %262 = vector.extract_strided_slice %257 {offsets = [16, 0], sizes = [16, 16], strides = [1, 1]} : vector<32x32xf32> to vector<16x16xf32>
    %263 = arith.addf %261, %262 : vector<16x16xf32>
    %264 = arith.mulf %260, %260 : vector<16x16xf32>
    %265 = arith.mulf %263, %263 : vector<16x16xf32>
    %266 = arith.addf %264, %265 : vector<16x16xf32>
    %267 = math.sqrt %266 : vector<16x16xf32>
    %cst_152 = arith.constant dense<0.000000e+00> : vector<8x16xf32>
    %268 = tpu.matmul %3, %267, %cst_152 {dimension_numbers = #tpu.dot_dimension_numbers<[1], [0], [0], [1], [0, 0, 1, 1], [], []>} : vector<8x16xf32>, vector<16x16xf32>, vector<8x16xf32> -> vector<8x16xf32>
    %cst_153 = arith.constant dense<0.000000e+00> : vector<8x16xf32>
    %269 = tpu.matmul %268, %4, %cst_153 {dimension_numbers = #tpu.dot_dimension_numbers<[1], [0], [0], [1], [0, 0, 1, 1], [], []>} : vector<8x16xf32>, vector<16x16xf32>, vector<8x16xf32> -> vector<8x16xf32>
    %c3_154 = arith.constant 3 : index
    %c3_155 = arith.constant 3 : index
    %c0_156 = arith.constant 0 : index
    %c0_157 = arith.constant 0 : index
    %270 = vector.load %arg6[%c3_154, %c3_155, %c0_156, %c0_157] : memref<4x5x8x16xf32, #tpu.memory_space<vmem>>, vector<1x1x8x16xf32>
    %271 = vector.shape_cast %270 : vector<1x1x8x16xf32> to vector<8x16xf32>
    %272 = vector.shape_cast %269 : vector<8x16xf32> to vector<1x1x8x16xf32>
    tpu.vector_store %arg6[%c3_154, %c3_155, %c0_156, %c0_157], %272 {strides = array<i32>} : memref<4x5x8x16xf32, #tpu.memory_space<vmem>>, vector<1x1x8x16xf32>,
    %c3_158 = arith.constant 3 : index
    %c0_159 = arith.constant 0 : index
    %c0_160 = arith.constant 0 : index
    %273 = vector.load %arg3[%c3_158, %c0_159, %c0_160] : memref<4x16x32xbf16, #tpu.memory_space<vmem>>, vector<1x16x32xbf16>
    %274 = vector.shape_cast %273 : vector<1x16x32xbf16> to vector<16x32xbf16>
    %cst_161 = arith.constant dense<0.000000e+00> : vector<64x32xf32>
    %275 = tpu.matmul %2, %274, %cst_161 {dimension_numbers = #tpu.dot_dimension_numbers<[1], [0], [0], [1], [0, 0, 1, 1], [], []>} : vector<64x16xbf16>, vector<16x32xbf16>, vector<64x32xf32> -> vector<64x32xf32>
    %276 = arith.truncf %275 : vector<64x32xf32> to vector<64x32xbf16>
    %c3_162 = arith.constant 3 : index
    %c0_163 = arith.constant 0 : index
    %c0_164 = arith.constant 0 : index
    %277 = vector.load %arg2[%c3_162, %c0_163, %c0_164] : memref<4x32x16xbf16, #tpu.memory_space<vmem>>, vector<1x32x16xbf16>
    %278 = vector.shape_cast %277 : vector<1x32x16xbf16> to vector<32x16xbf16>
    %279 = vector.extract_strided_slice %276 {offsets = [0, 0], sizes = [16, 32], strides = [1, 1]} : vector<64x32xbf16> to vector<16x32xbf16>
    %cst_165 = arith.constant dense<0.000000e+00> : vector<32x32xf32>
    %280 = tpu.matmul %278, %279, %cst_165 {dimension_numbers = #tpu.dot_dimension_numbers<[1], [0], [0], [1], [0, 0, 1, 1], [], []>} : vector<32x16xbf16>, vector<16x32xbf16>, vector<32x32xf32> -> vector<32x32xf32>
    %281 = vector.extract_strided_slice %280 {offsets = [0, 0], sizes = [16, 16], strides = [1, 1]} : vector<32x32xf32> to vector<16x16xf32>
    %282 = vector.extract_strided_slice %280 {offsets = [16, 16], sizes = [16, 16], strides = [1, 1]} : vector<32x32xf32> to vector<16x16xf32>
    %283 = arith.subf %281, %282 : vector<16x16xf32>
    %284 = vector.extract_strided_slice %280 {offsets = [0, 16], sizes = [16, 16], strides = [1, 1]} : vector<32x32xf32> to vector<16x16xf32>
    %285 = vector.extract_strided_slice %280 {offsets = [16, 0], sizes = [16, 16], strides = [1, 1]} : vector<32x32xf32> to vector<16x16xf32>
    %286 = arith.addf %284, %285 : vector<16x16xf32>
    %287 = arith.mulf %283, %283 : vector<16x16xf32>
    %288 = arith.mulf %286, %286 : vector<16x16xf32>
    %289 = arith.addf %287, %288 : vector<16x16xf32>
    %290 = math.sqrt %289 : vector<16x16xf32>
    %cst_166 = arith.constant dense<0.000000e+00> : vector<8x16xf32>
    %291 = tpu.matmul %3, %290, %cst_166 {dimension_numbers = #tpu.dot_dimension_numbers<[1], [0], [0], [1], [0, 0, 1, 1], [], []>} : vector<8x16xf32>, vector<16x16xf32>, vector<8x16xf32> -> vector<8x16xf32>
    %cst_167 = arith.constant dense<0.000000e+00> : vector<8x16xf32>
    %292 = tpu.matmul %291, %4, %cst_167 {dimension_numbers = #tpu.dot_dimension_numbers<[1], [0], [0], [1], [0, 0, 1, 1], [], []>} : vector<8x16xf32>, vector<16x16xf32>, vector<8x16xf32> -> vector<8x16xf32>
    %c0_168 = arith.constant 0 : index
    %c4 = arith.constant 4 : index
    %c0_169 = arith.constant 0 : index
    %c0_170 = arith.constant 0 : index
    %293 = vector.load %arg6[%c0_168, %c4, %c0_169, %c0_170] : memref<4x5x8x16xf32, #tpu.memory_space<vmem>>, vector<1x1x8x16xf32>
    %294 = vector.shape_cast %293 : vector<1x1x8x16xf32> to vector<8x16xf32>
    %295 = vector.shape_cast %292 : vector<8x16xf32> to vector<1x1x8x16xf32>
    tpu.vector_store %arg6[%c0_168, %c4, %c0_169, %c0_170], %295 {strides = array<i32>} : memref<4x5x8x16xf32, #tpu.memory_space<vmem>>, vector<1x1x8x16xf32>,
    %c3_171 = arith.constant 3 : index
    %c0_172 = arith.constant 0 : index
    %c0_173 = arith.constant 0 : index
    %296 = vector.load %arg2[%c3_171, %c0_172, %c0_173] : memref<4x32x16xbf16, #tpu.memory_space<vmem>>, vector<1x32x16xbf16>
    %297 = vector.shape_cast %296 : vector<1x32x16xbf16> to vector<32x16xbf16>
    %298 = vector.extract_strided_slice %276 {offsets = [16, 0], sizes = [16, 32], strides = [1, 1]} : vector<64x32xbf16> to vector<16x32xbf16>
    %cst_174 = arith.constant dense<0.000000e+00> : vector<32x32xf32>
    %299 = tpu.matmul %297, %298, %cst_174 {dimension_numbers = #tpu.dot_dimension_numbers<[1], [0], [0], [1], [0, 0, 1, 1], [], []>} : vector<32x16xbf16>, vector<16x32xbf16>, vector<32x32xf32> -> vector<32x32xf32>
    %300 = vector.extract_strided_slice %299 {offsets = [0, 0], sizes = [16, 16], strides = [1, 1]} : vector<32x32xf32> to vector<16x16xf32>
    %301 = vector.extract_strided_slice %299 {offsets = [16, 16], sizes = [16, 16], strides = [1, 1]} : vector<32x32xf32> to vector<16x16xf32>
    %302 = arith.subf %300, %301 : vector<16x16xf32>
    %303 = vector.extract_strided_slice %299 {offsets = [0, 16], sizes = [16, 16], strides = [1, 1]} : vector<32x32xf32> to vector<16x16xf32>
    %304 = vector.extract_strided_slice %299 {offsets = [16, 0], sizes = [16, 16], strides = [1, 1]} : vector<32x32xf32> to vector<16x16xf32>
    %305 = arith.addf %303, %304 : vector<16x16xf32>
    %306 = arith.mulf %302, %302 : vector<16x16xf32>
    %307 = arith.mulf %305, %305 : vector<16x16xf32>
    %308 = arith.addf %306, %307 : vector<16x16xf32>
    %309 = math.sqrt %308 : vector<16x16xf32>
    %cst_175 = arith.constant dense<0.000000e+00> : vector<8x16xf32>
    %310 = tpu.matmul %3, %309, %cst_175 {dimension_numbers = #tpu.dot_dimension_numbers<[1], [0], [0], [1], [0, 0, 1, 1], [], []>} : vector<8x16xf32>, vector<16x16xf32>, vector<8x16xf32> -> vector<8x16xf32>
    %cst_176 = arith.constant dense<0.000000e+00> : vector<8x16xf32>
    %311 = tpu.matmul %310, %4, %cst_176 {dimension_numbers = #tpu.dot_dimension_numbers<[1], [0], [0], [1], [0, 0, 1, 1], [], []>} : vector<8x16xf32>, vector<16x16xf32>, vector<8x16xf32> -> vector<8x16xf32>
    %c1_177 = arith.constant 1 : index
    %c4_178 = arith.constant 4 : index
    %c0_179 = arith.constant 0 : index
    %c0_180 = arith.constant 0 : index
    %312 = vector.load %arg6[%c1_177, %c4_178, %c0_179, %c0_180] : memref<4x5x8x16xf32, #tpu.memory_space<vmem>>, vector<1x1x8x16xf32>
    %313 = vector.shape_cast %312 : vector<1x1x8x16xf32> to vector<8x16xf32>
    %314 = vector.shape_cast %311 : vector<8x16xf32> to vector<1x1x8x16xf32>
    tpu.vector_store %arg6[%c1_177, %c4_178, %c0_179, %c0_180], %314 {strides = array<i32>} : memref<4x5x8x16xf32, #tpu.memory_space<vmem>>, vector<1x1x8x16xf32>,
    %c3_181 = arith.constant 3 : index
    %c0_182 = arith.constant 0 : index
    %c0_183 = arith.constant 0 : index
    %315 = vector.load %arg2[%c3_181, %c0_182, %c0_183] : memref<4x32x16xbf16, #tpu.memory_space<vmem>>, vector<1x32x16xbf16>
    %316 = vector.shape_cast %315 : vector<1x32x16xbf16> to vector<32x16xbf16>
    %317 = vector.extract_strided_slice %276 {offsets = [32, 0], sizes = [16, 32], strides = [1, 1]} : vector<64x32xbf16> to vector<16x32xbf16>
    %cst_184 = arith.constant dense<0.000000e+00> : vector<32x32xf32>
    %318 = tpu.matmul %316, %317, %cst_184 {dimension_numbers = #tpu.dot_dimension_numbers<[1], [0], [0], [1], [0, 0, 1, 1], [], []>} : vector<32x16xbf16>, vector<16x32xbf16>, vector<32x32xf32> -> vector<32x32xf32>
    %319 = vector.extract_strided_slice %318 {offsets = [0, 0], sizes = [16, 16], strides = [1, 1]} : vector<32x32xf32> to vector<16x16xf32>
    %320 = vector.extract_strided_slice %318 {offsets = [16, 16], sizes = [16, 16], strides = [1, 1]} : vector<32x32xf32> to vector<16x16xf32>
    %321 = arith.subf %319, %320 : vector<16x16xf32>
    %322 = vector.extract_strided_slice %318 {offsets = [0, 16], sizes = [16, 16], strides = [1, 1]} : vector<32x32xf32> to vector<16x16xf32>
    %323 = vector.extract_strided_slice %318 {offsets = [16, 0], sizes = [16, 16], strides = [1, 1]} : vector<32x32xf32> to vector<16x16xf32>
    %324 = arith.addf %322, %323 : vector<16x16xf32>
    %325 = arith.mulf %321, %321 : vector<16x16xf32>
    %326 = arith.mulf %324, %324 : vector<16x16xf32>
    %327 = arith.addf %325, %326 : vector<16x16xf32>
    %328 = math.sqrt %327 : vector<16x16xf32>
    %cst_185 = arith.constant dense<0.000000e+00> : vector<8x16xf32>
    %329 = tpu.matmul %3, %328, %cst_185 {dimension_numbers = #tpu.dot_dimension_numbers<[1], [0], [0], [1], [0, 0, 1, 1], [], []>} : vector<8x16xf32>, vector<16x16xf32>, vector<8x16xf32> -> vector<8x16xf32>
    %cst_186 = arith.constant dense<0.000000e+00> : vector<8x16xf32>
    %330 = tpu.matmul %329, %4, %cst_186 {dimension_numbers = #tpu.dot_dimension_numbers<[1], [0], [0], [1], [0, 0, 1, 1], [], []>} : vector<8x16xf32>, vector<16x16xf32>, vector<8x16xf32> -> vector<8x16xf32>
    %c2_187 = arith.constant 2 : index
    %c4_188 = arith.constant 4 : index
    %c0_189 = arith.constant 0 : index
    %c0_190 = arith.constant 0 : index
    %331 = vector.load %arg6[%c2_187, %c4_188, %c0_189, %c0_190] : memref<4x5x8x16xf32, #tpu.memory_space<vmem>>, vector<1x1x8x16xf32>
    %332 = vector.shape_cast %331 : vector<1x1x8x16xf32> to vector<8x16xf32>
    %333 = vector.shape_cast %330 : vector<8x16xf32> to vector<1x1x8x16xf32>
    tpu.vector_store %arg6[%c2_187, %c4_188, %c0_189, %c0_190], %333 {strides = array<i32>} : memref<4x5x8x16xf32, #tpu.memory_space<vmem>>, vector<1x1x8x16xf32>,
    %c3_191 = arith.constant 3 : index
    %c0_192 = arith.constant 0 : index
    %c0_193 = arith.constant 0 : index
    %334 = vector.load %arg2[%c3_191, %c0_192, %c0_193] : memref<4x32x16xbf16, #tpu.memory_space<vmem>>, vector<1x32x16xbf16>
    %335 = vector.shape_cast %334 : vector<1x32x16xbf16> to vector<32x16xbf16>
    %336 = vector.extract_strided_slice %276 {offsets = [48, 0], sizes = [16, 32], strides = [1, 1]} : vector<64x32xbf16> to vector<16x32xbf16>
    %cst_194 = arith.constant dense<0.000000e+00> : vector<32x32xf32>
    %337 = tpu.matmul %335, %336, %cst_194 {dimension_numbers = #tpu.dot_dimension_numbers<[1], [0], [0], [1], [0, 0, 1, 1], [], []>} : vector<32x16xbf16>, vector<16x32xbf16>, vector<32x32xf32> -> vector<32x32xf32>
    %338 = vector.extract_strided_slice %337 {offsets = [0, 0], sizes = [16, 16], strides = [1, 1]} : vector<32x32xf32> to vector<16x16xf32>
    %339 = vector.extract_strided_slice %337 {offsets = [16, 16], sizes = [16, 16], strides = [1, 1]} : vector<32x32xf32> to vector<16x16xf32>
    %340 = arith.subf %338, %339 : vector<16x16xf32>
    %341 = vector.extract_strided_slice %337 {offsets = [0, 16], sizes = [16, 16], strides = [1, 1]} : vector<32x32xf32> to vector<16x16xf32>
    %342 = vector.extract_strided_slice %337 {offsets = [16, 0], sizes = [16, 16], strides = [1, 1]} : vector<32x32xf32> to vector<16x16xf32>
    %343 = arith.addf %341, %342 : vector<16x16xf32>
    %344 = arith.mulf %340, %340 : vector<16x16xf32>
    %345 = arith.mulf %343, %343 : vector<16x16xf32>
    %346 = arith.addf %344, %345 : vector<16x16xf32>
    %347 = math.sqrt %346 : vector<16x16xf32>
    %cst_195 = arith.constant dense<0.000000e+00> : vector<8x16xf32>
    %348 = tpu.matmul %3, %347, %cst_195 {dimension_numbers = #tpu.dot_dimension_numbers<[1], [0], [0], [1], [0, 0, 1, 1], [], []>} : vector<8x16xf32>, vector<16x16xf32>, vector<8x16xf32> -> vector<8x16xf32>
    %cst_196 = arith.constant dense<0.000000e+00> : vector<8x16xf32>
    %349 = tpu.matmul %348, %4, %cst_196 {dimension_numbers = #tpu.dot_dimension_numbers<[1], [0], [0], [1], [0, 0, 1, 1], [], []>} : vector<8x16xf32>, vector<16x16xf32>, vector<8x16xf32> -> vector<8x16xf32>
    %c3_197 = arith.constant 3 : index
    %c4_198 = arith.constant 4 : index
    %c0_199 = arith.constant 0 : index
    %c0_200 = arith.constant 0 : index
    %350 = vector.load %arg6[%c3_197, %c4_198, %c0_199, %c0_200] : memref<4x5x8x16xf32, #tpu.memory_space<vmem>>, vector<1x1x8x16xf32>
    %351 = vector.shape_cast %350 : vector<1x1x8x16xf32> to vector<8x16xf32>
    %352 = vector.shape_cast %349 : vector<8x16xf32> to vector<1x1x8x16xf32>
    tpu.vector_store %arg6[%c3_197, %c4_198, %c0_199, %c0_200], %352 {strides = array<i32>} : memref<4x5x8x16xf32, #tpu.memory_space<vmem>>, vector<1x1x8x16xf32>,
    return
  }
  func.func @transform_0(%arg0: i32) -> (i32, i32, i32) {
    %c0_i32 = arith.constant 0 : i32
    %c0_i32_0 = arith.constant 0 : i32
    %c0_i32_1 = arith.constant 0 : i32
    return %arg0, %c0_i32, %c0_i32_0 : i32, i32, i32
  }
  func.func @transform_1(%arg0: i32) -> (i32, i32, i32) {
    %c0_i32 = arith.constant 0 : i32
    %c0_i32_0 = arith.constant 0 : i32
    %c0_i32_1 = arith.constant 0 : i32
    %c0_i32_2 = arith.constant 0 : i32
    return %c0_i32, %c0_i32_0, %c0_i32_1 : i32, i32, i32
  }
  func.func @transform_2(%arg0: i32) -> (i32, i32, i32) {
    %c0_i32 = arith.constant 0 : i32
    %c0_i32_0 = arith.constant 0 : i32
    %c0_i32_1 = arith.constant 0 : i32
    %c0_i32_2 = arith.constant 0 : i32
    return %c0_i32, %c0_i32_0, %c0_i32_1 : i32, i32, i32
  }
  func.func @transform_3(%arg0: i32) -> (i32, i32) {
    %c0_i32 = arith.constant 0 : i32
    %c0_i32_0 = arith.constant 0 : i32
    %c0_i32_1 = arith.constant 0 : i32
    return %c0_i32, %c0_i32_0 : i32, i32
  }
  func.func @transform_4(%arg0: i32) -> (i32, i32) {
    %c0_i32 = arith.constant 0 : i32
    %c0_i32_0 = arith.constant 0 : i32
    %c0_i32_1 = arith.constant 0 : i32
    return %c0_i32, %c0_i32_0 : i32, i32
  }
  func.func @transform_5(%arg0: i32) -> (i32, i32, i32, i32) {
    %c0_i32 = arith.constant 0 : i32
    %c0_i32_0 = arith.constant 0 : i32
    %c0_i32_1 = arith.constant 0 : i32
    %c0_i32_2 = arith.constant 0 : i32
    return %arg0, %c0_i32, %c0_i32_0, %c0_i32_1 : i32, i32, i32, i32
  }
}

</mosaic_0001>

<llo_original>
// kernel: tpu_custom_call.1
$region0: #{tpu_custom_call.1}
  #allocation0 [shape = 'u32[]', space=smem, size = 0x4, offset = 0x4, fixed_abs, tag = 'smem constant byte address 0x4 - core index']
  #allocation1 [shape = 'u32[144,128]{1,0:T(1,128)}', space=vmem, size = 0x12000, scoped, tag = 'internal scratch']
  %s0 = inlined_call_operand.hbm [shape: f32[8,16,16], index: 0, kind: input, shape index: {}]
  %s1 = inlined_call_operand.vmem [shape: bf16[4,32,16], index: 1, kind: input, shape index: {}]
  %s2 = inlined_call_operand.vmem [shape: bf16[4,16,32], index: 2, kind: input, shape index: {}]
  %s3 = inlined_call_operand.vmem [shape: f32[8,16], index: 3, kind: input, shape index: {}]
  %s4 = inlined_call_operand.vmem [shape: f32[16,16], index: 4, kind: input, shape index: {}]
  %s5 = inlined_call_operand.hbm [shape: f32[8,5,8,16], index: 5, kind: output, shape index: {}]
  %s6 = sld [smem:[#allocation0]]
  $region57: #{tpu_custom_call.1} parent=0
    _
  %s8 = ssub.s32 1, %s6
  %s9 = scalar_select 0, %s8, %s6
  $region1: #{tpu_custom_call.1} parent=0
    #allocation2 [shape = 'u8[65536]{0}', space=vmem, size = 0x10000, scoped, tag = 'input window, operand 0']
    #allocation3 [shape = 's32[2]{0}', space=sflag, size = 0x8, scoped, tag = 'scoped memory for tpu_custom_call.1']
    #allocation4 [shape = 's32[2]{0}', space=sflag, size = 0x8, scoped, tag = 'scoped memory for tpu_custom_call.1']
    #allocation5 [shape = 'u8[163840]{0}', space=vmem, size = 0x28000, scoped, tag = 'output window, operand 0']
    %10 = vsyncpa [#allocation3], 0
    %s11 = scalar_lea.sflag [#allocation3], 1
    %12 = vsyncpa %s11, 0
    %13 = vsyncpa [#allocation4], 0
    %s14 = scalar_lea.sflag [#allocation4], 1
    %15 = vsyncpa %s14, 0
    loop: start=0, step=1, limit=4
    $region2: #{tpu_custom_call.1} parent=1 // loop_pre_header
      _
    $region3: #{tpu_custom_call.1} parent=1 // loop_header
      %s17 = sphi 0, %s21
      %p18 = scmp.ge.s32.totalorder %s17, 4
      %s27 = sphi 0, %s29
      %s30 = sphi 0, %s27
      %s31 = sphi 0, %s30
      %s47 = sphi 0, %s31
      %s51 = sphi 0, %s51
      %s53 = sphi 0, %s51
      %s54 = sphi 0, %s53
      %s68 = sphi 0, %s54
      %s72 = sphi 0, %s72
      %s74 = sphi 0, %s72
      %s75 = sphi 0, %s74
      %s89 = sphi 0, %s75
      %s93 = sphi 0, %s93
      %s95 = sphi 0, %s93
      %s96 = sphi 0, %s95
      %s110 = sphi 0, %s96
      %s114 = sphi 0, %s114
      %s116 = sphi 0, %s114
      %s117 = sphi 0, %s116
      %s131 = sphi 0, %s117
      %s137 = sphi 0, %s139
      %s140 = sphi 0, %s137
      %s141 = sphi 0, %s140
      %s157 = sphi 0, %s141
    $region4: #{tpu_custom_call.1} parent=1 // loop_header_branch
      %20 = sbr.rel (%p18) target = $region8
    $region5: #{tpu_custom_call.1} parent=1 // loop_body
      %s22 = ssub.s32 %s17, 1
      %s23 = ssub.s32 %s17, 2
      %s24 = sadd.s32 %s17, 1
      %s25 = ssub.s32 %s17, %s24
      %p26 = scmp.eq.s32.totalorder %s25, 0
      %s28 = sadd.s32 %s27, 1
      %s29 = scalar_select %p26, %s27, %s28
      %p32 = pneg %p26
      %p33 = scmp.eq.s32.totalorder %s17, 1
      %p34 = por %p32, %p33
      %p35 = scmp.ne.s32.totalorder %s27, %s30
      %p36 = scmp.eq.s32.totalorder %s17, 0
      %p37 = por %p35, %p36
      %p38 = scmp.ne.s32.totalorder %s27, %s30
      %p39 = scmp.eq.s32.totalorder %s22, 1
      %p40 = por %p38, %p39
      %p41 = scmp.ne.s32.totalorder %s30, %s31
      %p42 = scmp.eq.s32.totalorder %s22, 0
      %p43 = por %p41, %p42
      %p44 = scmp.ne.s32.totalorder %s30, %s31
      %p45 = scmp.eq.s32.totalorder %s23, 1
      %p46 = por %p44, %p45
      %p48 = scmp.ne.s32.totalorder %s31, %s47
      %p49 = scmp.eq.s32.totalorder %s23, 0
      %p50 = por %p48, %p49
      %s52 = sadd.s32 %s51, 1
      %p55 = scmp.eq.s32.totalorder %s17, 1
      %p56 = scmp.ne.s32.totalorder %s51, %s53
      %p57 = scmp.eq.s32.totalorder %s17, 0
      %p58 = por %p56, %p57
      %p59 = scmp.ne.s32.totalorder %s51, %s53
      %p60 = scmp.eq.s32.totalorder %s22, 1
      %p61 = por %p59, %p60
      %p62 = scmp.ne.s32.totalorder %s53, %s54
      %p63 = scmp.eq.s32.totalorder %s22, 0
      %p64 = por %p62, %p63
      %p65 = scmp.ne.s32.totalorder %s53, %s54
      %p66 = scmp.eq.s32.totalorder %s23, 1
      %p67 = por %p65, %p66
      %p69 = scmp.ne.s32.totalorder %s54, %s68
      %p70 = scmp.eq.s32.totalorder %s23, 0
      %p71 = por %p69, %p70
      %s73 = sadd.s32 %s72, 1
      %p76 = scmp.eq.s32.totalorder %s17, 1
      %p77 = scmp.ne.s32.totalorder %s72, %s74
      %p78 = scmp.eq.s32.totalorder %s17, 0
      %p79 = por %p77, %p78
      %p80 = scmp.ne.s32.totalorder %s72, %s74
      %p81 = scmp.eq.s32.totalorder %s22, 1
      %p82 = por %p80, %p81
      %p83 = scmp.ne.s32.totalorder %s74, %s75
      %p84 = scmp.eq.s32.totalorder %s22, 0
      %p85 = por %p83, %p84
      %p86 = scmp.ne.s32.totalorder %s74, %s75
      %p87 = scmp.eq.s32.totalorder %s23, 1
      %p88 = por %p86, %p87
      %p90 = scmp.ne.s32.totalorder %s75, %s89
      %p91 = scmp.eq.s32.totalorder %s23, 0
      %p92 = por %p90, %p91
      %s94 = sadd.s32 %s93, 1
      %p97 = scmp.eq.s32.totalorder %s17, 1
      %p98 = scmp.ne.s32.totalorder %s93, %s95
      %p99 = scmp.eq.s32.totalorder %s17, 0
      %p100 = por %p98, %p99
      %p101 = scmp.ne.s32.totalorder %s93, %s95
      %p102 = scmp.eq.s32.totalorder %s22, 1
      %p103 = por %p101, %p102
      %p104 = scmp.ne.s32.totalorder %s95, %s96
      %p105 = scmp.eq.s32.totalorder %s22, 0
      %p106 = por %p104, %p105
      %p107 = scmp.ne.s32.totalorder %s95, %s96
      %p108 = scmp.eq.s32.totalorder %s23, 1
      %p109 = por %p107, %p108
      %p111 = scmp.ne.s32.totalorder %s96, %s110
      %p112 = scmp.eq.s32.totalorder %s23, 0
      %p113 = por %p111, %p112
      %s115 = sadd.s32 %s114, 1
      %p118 = scmp.eq.s32.totalorder %s17, 1
      %p119 = scmp.ne.s32.totalorder %s114, %s116
      %p120 = scmp.eq.s32.totalorder %s17, 0
      %p121 = por %p119, %p120
      %p122 = scmp.ne.s32.totalorder %s114, %s116
      %p123 = scmp.eq.s32.totalorder %s22, 1
      %p124 = por %p122, %p123
      %p125 = scmp.ne.s32.totalorder %s116, %s117
      %p126 = scmp.eq.s32.totalorder %s22, 0
      %p127 = por %p125, %p126
      %p128 = scmp.ne.s32.totalorder %s116, %s117
      %p129 = scmp.eq.s32.totalorder %s23, 1
      %p130 = por %p128, %p129
      %p132 = scmp.ne.s32.totalorder %s117, %s131
      %p133 = scmp.eq.s32.totalorder %s23, 0
      %p134 = por %p132, %p133
      %s135 = ssub.s32 %s17, %s24
      %p136 = scmp.eq.s32.totalorder %s135, 0
      %s138 = sadd.s32 %s137, 1
      %s139 = scalar_select %p136, %s137, %s138
      %p142 = pneg %p136
      %p143 = scmp.eq.s32.totalorder %s17, 1
      %p144 = por %p142, %p143
      %p145 = scmp.ne.s32.totalorder %s137, %s140
      %p146 = scmp.eq.s32.totalorder %s17, 0
      %p147 = por %p145, %p146
      %p148 = scmp.ne.s32.totalorder %s137, %s140
      %p149 = scmp.eq.s32.totalorder %s22, 1
      %p150 = por %p148, %p149
      %p151 = scmp.ne.s32.totalorder %s140, %s141
      %p152 = scmp.eq.s32.totalorder %s22, 0
      %p153 = por %p151, %p152
      %p154 = scmp.ne.s32.totalorder %s140, %s141
      %p155 = scmp.eq.s32.totalorder %s23, 1
      %p156 = por %p154, %p155
      %p158 = scmp.ne.s32.totalorder %s141, %s157
      %p159 = scmp.eq.s32.totalorder %s23, 0
      %p160 = por %p158, %p159
      %p161 = scmp.le.s32.totalorder 1, %s17
      %p162 = scmp.lt.s32.totalorder %s17, 3
      %p163 = pnand %p161, %p162
      %p164 = pneg %p163
      // Predicated region
      $region9: #{tpu_custom_call.1} parent=5 // pred_check
        _
      $region10: #{tpu_custom_call.1} parent=5 // pred_check_branch
        %166 = sbr.rel (%p163) target = $region12
      $region11: #{tpu_custom_call.1} parent=5 // pred_region
        %s167 = ssub.s32 %s17, 1
        // Predicated region
        $region13: #{tpu_custom_call.1} parent=11 // pred_check
          %p168 = pneg %p64
        $region14: #{tpu_custom_call.1} parent=11 // pred_check_branch
          %170 = sbr.rel (%p168) target = $region16
        $region15: #{tpu_custom_call.1} parent=11 // pred_region
          _
        $region16: #{tpu_custom_call.1} parent=11 // pred_fallthru
          _
        // Predicated region
        $region17: #{tpu_custom_call.1} parent=11 // pred_check
          %p171 = pneg %p85
        $region18: #{tpu_custom_call.1} parent=11 // pred_check_branch
          %173 = sbr.rel (%p171) target = $region20
        $region19: #{tpu_custom_call.1} parent=11 // pred_region
          _
        $region20: #{tpu_custom_call.1} parent=11 // pred_fallthru
          _
        // Predicated region
        $region21: #{tpu_custom_call.1} parent=11 // pred_check
          %p174 = pneg %p106
        $region22: #{tpu_custom_call.1} parent=11 // pred_check_branch
          %176 = sbr.rel (%p174) target = $region24
        $region23: #{tpu_custom_call.1} parent=11 // pred_region
          _
        $region24: #{tpu_custom_call.1} parent=11 // pred_fallthru
          _
        // Predicated region
        $region25: #{tpu_custom_call.1} parent=11 // pred_check
          %p177 = pneg %p127
        $region26: #{tpu_custom_call.1} parent=11 // pred_check_branch
          %179 = sbr.rel (%p177) target = $region28
        $region27: #{tpu_custom_call.1} parent=11 // pred_region
          _
        $region28: #{tpu_custom_call.1} parent=11 // pred_fallthru
          _
      $region12: #{tpu_custom_call.1} parent=5 // pred_fallthru
        _
      %p180 = scmp.lt.s32.totalorder %s17, 2
      // Predicated region
      $region29: #{tpu_custom_call.1} parent=5 // pred_check
        %p181 = pneg %p180
      $region30: #{tpu_custom_call.1} parent=5 // pred_check_branch
        %183 = sbr.rel (%p181) target = $region32
      $region31: #{tpu_custom_call.1} parent=5 // pred_region
        // Predicated region
        $region33: #{tpu_custom_call.1} parent=31 // pred_check
          %p184 = pneg %p37
        $region34: #{tpu_custom_call.1} parent=31 // pred_check_branch
          %186 = sbr.rel (%p184) target = $region36
        $region35: #{tpu_custom_call.1} parent=31 // pred_region
          %s187 = sand.u32 %s27, 1
          %s188 = scalar_lea.sflag [#allocation3], %s187
          %s189 = sand.u32 %s27, 1
          %s190 = smul.addr %s189, 64
          %s191 = scalar_lea.vmem [#allocation2], %s190
          %s192 = smul.u32 4, %s17
          %s194 = ssub.s32 1024, 1024
          %195 = vsyncadd %s188, %s194
          %s196 = smul.addr %s192, 2
          %s197 = smul.addr %s196, 128
          %s198 = scalar_lea.hbm %s0, %s197
          %s199 = sshll.u32 %s191, 4
          %s200 = int_to_ptr.vmem [resolvable:$true] %s199
          %205 = dma.hbm_to_vmem [thread:$0]  %s198, 1024, %s200, %s188, 128, 128, 8
        $region36: #{tpu_custom_call.1} parent=31 // pred_fallthru
          _
      $region32: #{tpu_custom_call.1} parent=5 // pred_fallthru
        _
      %p206 = scmp.le.s32.totalorder 1, %s17
      %p207 = scmp.lt.s32.totalorder %s17, 3
      %p208 = pnand %p206, %p207
      %p209 = pneg %p208
      // Predicated region
      $region37: #{tpu_custom_call.1} parent=5 // pred_check
        _
      $region38: #{tpu_custom_call.1} parent=5 // pred_check_branch
        %211 = sbr.rel (%p208) target = $region40
      $region39: #{tpu_custom_call.1} parent=5 // pred_region
        %s212 = ssub.s32 %s17, 1
        %s213 = sand.u32 %s30, 1
        %s214 = scalar_lea.sflag [#allocation3], %s213
        %s215 = sand.u32 %s30, 1
        %s216 = smul.addr %s215, 64
        %s217 = scalar_lea.vmem [#allocation2], %s216
        // Predicated region
        $region41: #{tpu_custom_call.1} parent=39 // pred_check
          %p218 = pneg %p43
        $region42: #{tpu_custom_call.1} parent=39 // pred_check_branch
          %220 = sbr.rel (%p218) target = $region44
        $region43: #{tpu_custom_call.1} parent=39 // pred_region
          %221 = dma.done %s214, 1024
        $region44: #{tpu_custom_call.1} parent=39 // pred_fallthru
          _
        %s222 = sand.u32 %s30, 1
        %s223 = scalar_lea.sflag [#allocation3], %s222
        %s224 = sand.u32 %s30, 1
        %s225 = smul.addr %s224, 64
        %s226 = scalar_lea.vmem [#allocation2], %s225
        %p227 = pneg %p43
        %p228 = pneg %p40
        %p229 = pneg %p64
        %p230 = pneg %p61
        %p231 = pneg %p85
        %p232 = pneg %p82
        %p233 = pneg %p106
        %p234 = pneg %p103
        %p235 = pneg %p127
        %p236 = pneg %p124
        %p237 = pneg %p153
        %p238 = pneg %p150
        %s239 = sand.u32 %s140, 1
        %s240 = scalar_lea.sflag [#allocation4], %s239
        %s241 = sand.u32 %s140, 1
        %s242 = smul.addr %s241, 160
        %s243 = scalar_lea.vmem [#allocation5], %s242
        %s244 = smul.u32 4, %s22
        %s245 = smul.u32 4, %s22
        %v247 = vld [vmem:[%s217] sm:$0xff]
        %v248 = vld [vmem:[%s217 + $0x8] sm:$0xff]
        %v249 = vld [vmem:[%s217 + $0x10] sm:$0xff]
        %v250 = vld [vmem:[%s217 + $0x18] sm:$0xff]
        %v251 = vld [vmem:[%s217 + $0x20] sm:$0xff]
        %v252 = vld [vmem:[%s217 + $0x28] sm:$0xff]
        %v253 = vld [vmem:[%s217 + $0x30] sm:$0xff]
        %v254 = vld [vmem:[%s217 + $0x38] sm:$0xff]
        %v255 = vpack.c.bf16 %v248, %v247
        %v256 = vpack.c.bf16 %v250, %v249
        %v257 = vpack.c.bf16 %v252, %v251
        %v258 = vpack.c.bf16 %v254, %v253
        %v259 = vld [vmem:[%s3] sm:$0xff]
        %v260 = vld [vmem:[%s4] sm:$0xff]
        %v261 = vld [vmem:[%s4 + $0x8] sm:$0xff]
        %vm262 = vcmask 130048
        %v264 = vsel %vm262, %v259, 0
        %266 = vmatprep.subr.mxu0 0.0
        %267 = vmatpush1.msra.mxu0 %v247
        %268 = vmatprep.subr.mxu0 0.0
        %269 = vmatpush1.msra.mxu0 %v248
        %270 = vmatprep.subr.mxu0 0.0
        %271 = vmatpush1.msra.mxu0 0.0
        %272 = vmatprep.subr.mxu0 0.0
        %273 = vmatpush1.msra.mxu0 0.0
        %274 = vmatprep.subr.mxu0 0.0
        %275 = vmatpush1.msra.mxu0 0.0
        %276 = vmatprep.subr.mxu0 0.0
        %277 = vmatpush1.msra.mxu0 0.0
        %278 = vmatprep.subr.mxu0 0.0
        %279 = vmatpush1.msra.mxu0 0.0
        %280 = vmatprep.subr.mxu0 0.0
        %281 = vmatpush1.msra.mxu0 0.0
        %282 = vmatprep.subr.mxu0 0.0
        %283 = vmatpush1.msra.mxu0 0.0
        %284 = vmatprep.subr.mxu0 0.0
        %285 = vmatpush1.msra.mxu0 0.0
        %286 = vmatprep.subr.mxu0 0.0
        %287 = vmatpush1.msra.mxu0 0.0
        %288 = vmatprep.subr.mxu0 0.0
        %289 = vmatpush1.msra.mxu0 0.0
        %290 = vmatprep.subr.mxu0 0.0
        %291 = vmatpush1.msra.mxu0 0.0
        %292 = vmatprep.subr.mxu0 0.0
        %293 = vmatpush1.msra.mxu0 0.0
        %294 = vmatprep.subr.mxu0 0.0
        %295 = vmatpush1.msra.mxu0 0.0
        %296 = vmatprep.subr.mxu0 0.0
        %297 = vmatpush1.msra.mxu0 0.0
        %298 = vmatprep.subr.mxu0 0.0
        %299 = vmatpush1.msra.mxu0 0.0
        %300 = vmatprep.subr.mxu0 0.0
        %301 = vmatpush1.msra.mxu0 0.0
        %302 = vmatprep.subr.mxu0 0.0
        %303 = vmatpush1.msra.mxu0 0.0
        %304 = vmatprep.subr.mxu0 0.0
        %305 = vmatpush1.msra.mxu0 0.0
        %306 = vmatprep.subr.mxu0 0.0
        %307 = vmatpush1.msra.mxu0 0.0
        %308 = vmatprep.subr.mxu0 0.0
        %309 = vmatpush1.msra.mxu0 0.0
        %310 = vmatprep.subr.mxu0 0.0
        %311 = vmatpush1.msra.mxu0 0.0
        %312 = vmatprep.subr.mxu0 0.0
        %313 = vmatpush1.msra.mxu0 0.0
        %314 = vmatprep.subr.mxu0 0.0
        %315 = vmatpush1.msra.mxu0 0.0
        %316 = vmatprep.subr.mxu0 0.0
        %317 = vmatpush1.msra.mxu0 0.0
        %318 = vmatprep.subr.mxu0 0.0
        %319 = vmatpush1.msra.mxu0 0.0
        %320 = vmatprep.subr.mxu0 0.0
        %321 = vmatpush1.msra.mxu0 0.0
        %322 = vmatprep.subr.mxu0 0.0
        %323 = vmatpush1.msra.mxu0 0.0
        %324 = vmatprep.subr.mxu0 0.0
        %325 = vmatpush1.msra.mxu0 0.0
        %326 = vmatprep.subr.mxu0 0.0
        %327 = vmatpush1.msra.mxu0 0.0
        %328 = vmatprep.subr.mxu0 0.0
        %329 = vmatpush1.msra.mxu0 0.0
        %330 = vmatprep.mubr.f32.mxu0 0.0
        %331 = vmatmul.mubr.f32.gmra.mrb[0].mxu0 %v264
        %v332 = vpop.f32.mrb[0].mxu0
        %v333 = vadd.f32 0.0, %v332
        %v334 = vpop.f32.mrb[0].mxu0
        %335 = vdwg.mxu0
        %v337 = vsel %vm262, %v333, 0
        %339 = vmatprep.subr.mxu0 0.0
        %340 = vmatpush1.msra.mxu0 %v260
        %341 = vmatprep.subr.mxu0 0.0
        %342 = vmatpush1.msra.mxu0 %v261
        %343 = vmatprep.subr.mxu0 0.0
        %344 = vmatpush1.msra.mxu0 0.0
        %345 = vmatprep.subr.mxu0 0.0
        %346 = vmatpush1.msra.mxu0 0.0
        %347 = vmatprep.subr.mxu0 0.0
        %348 = vmatpush1.msra.mxu0 0.0
        %349 = vmatprep.subr.mxu0 0.0
        %350 = vmatpush1.msra.mxu0 0.0
        %351 = vmatprep.subr.mxu0 0.0
        %352 = vmatpush1.msra.mxu0 0.0
        %353 = vmatprep.subr.mxu0 0.0
        %354 = vmatpush1.msra.mxu0 0.0
        %355 = vmatprep.subr.mxu0 0.0
        %356 = vmatpush1.msra.mxu0 0.0
        %357 = vmatprep.subr.mxu0 0.0
        %358 = vmatpush1.msra.mxu0 0.0
        %359 = vmatprep.subr.mxu0 0.0
        %360 = vmatpush1.msra.mxu0 0.0
        %361 = vmatprep.subr.mxu0 0.0
        %362 = vmatpush1.msra.mxu0 0.0
        %363 = vmatprep.subr.mxu0 0.0
        %364 = vmatpush1.msra.mxu0 0.0
        %365 = vmatprep.subr.mxu0 0.0
        %366 = vmatpush1.msra.mxu0 0.0
        %367 = vmatprep.subr.mxu0 0.0
        %368 = vmatpush1.msra.mxu0 0.0
        %369 = vmatprep.subr.mxu0 0.0
        %370 = vmatpush1.msra.mxu0 0.0
        %371 = vmatprep.subr.mxu0 0.0
        %372 = vmatpush1.msra.mxu0 0.0
        %373 = vmatprep.subr.mxu0 0.0
        %374 = vmatpush1.msra.mxu0 0.0
        %375 = vmatprep.subr.mxu0 0.0
        %376 = vmatpush1.msra.mxu0 0.0
        %377 = vmatprep.subr.mxu0 0.0
        %378 = vmatpush1.msra.mxu0 0.0
        %379 = vmatprep.subr.mxu0 0.0
        %380 = vmatpush1.msra.mxu0 0.0
        %381 = vmatprep.subr.mxu0 0.0
        %382 = vmatpush1.msra.mxu0 0.0
        %383 = vmatprep.subr.mxu0 0.0
        %384 = vmatpush1.msra.mxu0 0.0
        %385 = vmatprep.subr.mxu0 0.0
        %386 = vmatpush1.msra.mxu0 0.0
        %387 = vmatprep.subr.mxu0 0.0
        %388 = vmatpush1.msra.mxu0 0.0
        %389 = vmatprep.subr.mxu0 0.0
        %390 = vmatpush1.msra.mxu0 0.0
        %391 = vmatprep.subr.mxu0 0.0
        %392 = vmatpush1.msra.mxu0 0.0
        %393 = vmatprep.subr.mxu0 0.0
        %394 = vmatpush1.msra.mxu0 0.0
        %395 = vmatprep.subr.mxu0 0.0
        %396 = vmatpush1.msra.mxu0 0.0
        %397 = vmatprep.subr.mxu0 0.0
        %398 = vmatpush1.msra.mxu0 0.0
        %399 = vmatprep.subr.mxu0 0.0
        %400 = vmatpush1.msra.mxu0 0.0
        %401 = vmatprep.subr.mxu0 0.0
        %402 = vmatpush1.msra.mxu0 0.0
        %403 = vmatprep.mubr.f32.mxu0 0.0
        %404 = vmatmul.mubr.f32.gmra.mrb[0].mxu0 %v337
        %v405 = vpop.f32.mrb[0].mxu0
        %v406 = vadd.f32 0.0, %v405
        %v407 = vpop.f32.mrb[0].mxu0
        %408 = vdwg.mxu0
        %409 = vst.msk [vmem:[%s243] sm:$0xff] %vm262, %v406
        %410 = vmatprep.subr.mxu0 0.0
        %411 = vmatpush1.msra.mxu0 %v249
        %412 = vmatprep.subr.mxu0 0.0
        %413 = vmatpush1.msra.mxu0 %v250
        %414 = vmatprep.subr.mxu0 0.0
        %415 = vmatpush1.msra.mxu0 0.0
        %416 = vmatprep.subr.mxu0 0.0
        %417 = vmatpush1.msra.mxu0 0.0
        %418 = vmatprep.subr.mxu0 0.0
        %419 = vmatpush1.msra.mxu0 0.0
        %420 = vmatprep.subr.mxu0 0.0
        %421 = vmatpush1.msra.mxu0 0.0
        %422 = vmatprep.subr.mxu0 0.0
        %423 = vmatpush1.msra.mxu0 0.0
        %424 = vmatprep.subr.mxu0 0.0
        %425 = vmatpush1.msra.mxu0 0.0
        %426 = vmatprep.subr.mxu0 0.0
        %427 = vmatpush1.msra.mxu0 0.0
        %428 = vmatprep.subr.mxu0 0.0
        %429 = vmatpush1.msra.mxu0 0.0
        %430 = vmatprep.subr.mxu0 0.0
        %431 = vmatpush1.msra.mxu0 0.0
        %432 = vmatprep.subr.mxu0 0.0
        %433 = vmatpush1.msra.mxu0 0.0
        %434 = vmatprep.subr.mxu0 0.0
        %435 = vmatpush1.msra.mxu0 0.0
        %436 = vmatprep.subr.mxu0 0.0
        %437 = vmatpush1.msra.mxu0 0.0
        %438 = vmatprep.subr.mxu0 0.0
        %439 = vmatpush1.msra.mxu0 0.0
        %440 = vmatprep.subr.mxu0 0.0
        %441 = vmatpush1.msra.mxu0 0.0
        %442 = vmatprep.subr.mxu0 0.0
        %443 = vmatpush1.msra.mxu0 0.0
        %444 = vmatprep.subr.mxu0 0.0
        %445 = vmatpush1.msra.mxu0 0.0
        %446 = vmatprep.subr.mxu0 0.0
        %447 = vmatpush1.msra.mxu0 0.0
        %448 = vmatprep.subr.mxu0 0.0
        %449 = vmatpush1.msra.mxu0 0.0
        %450 = vmatprep.subr.mxu0 0.0
        %451 = vmatpush1.msra.mxu0 0.0
        %452 = vmatprep.subr.mxu0 0.0
        %453 = vmatpush1.msra.mxu0 0.0
        %454 = vmatprep.subr.mxu0 0.0
        %455 = vmatpush1.msra.mxu0 0.0
        %456 = vmatprep.subr.mxu0 0.0
        %457 = vmatpush1.msra.mxu0 0.0
        %458 = vmatprep.subr.mxu0 0.0
        %459 = vmatpush1.msra.mxu0 0.0
        %460 = vmatprep.subr.mxu0 0.0
        %461 = vmatpush1.msra.mxu0 0.0
        %462 = vmatprep.subr.mxu0 0.0
        %463 = vmatpush1.msra.mxu0 0.0
        %464 = vmatprep.subr.mxu0 0.0
        %465 = vmatpush1.msra.mxu0 0.0
        %466 = vmatprep.subr.mxu0 0.0
        %467 = vmatpush1.msra.mxu0 0.0
        %468 = vmatprep.subr.mxu0 0.0
        %469 = vmatpush1.msra.mxu0 0.0
        %470 = vmatprep.subr.mxu0 0.0
        %471 = vmatpush1.msra.mxu0 0.0
        %472 = vmatprep.subr.mxu0 0.0
        %473 = vmatpush1.msra.mxu0 0.0
        %474 = vmatprep.mubr.f32.mxu0 0.0
        %475 = vmatmul.mubr.f32.gmra.mrb[0].mxu0 %v264
        %v476 = vpop.f32.mrb[0].mxu0
        %v477 = vadd.f32 0.0, %v476
        %v478 = vpop.f32.mrb[0].mxu0
        %479 = vdwg.mxu0
        %v481 = vsel %vm262, %v477, 0
        %483 = vmatprep.subr.mxu0 0.0
        %484 = vmatpush1.msra.mxu0 %v260
        %485 = vmatprep.subr.mxu0 0.0
        %486 = vmatpush1.msra.mxu0 %v261
        %487 = vmatprep.subr.mxu0 0.0
        %488 = vmatpush1.msra.mxu0 0.0
        %489 = vmatprep.subr.mxu0 0.0
        %490 = vmatpush1.msra.mxu0 0.0
        %491 = vmatprep.subr.mxu0 0.0
        %492 = vmatpush1.msra.mxu0 0.0
        %493 = vmatprep.subr.mxu0 0.0
        %494 = vmatpush1.msra.mxu0 0.0
        %495 = vmatprep.subr.mxu0 0.0
        %496 = vmatpush1.msra.mxu0 0.0
        %497 = vmatprep.subr.mxu0 0.0
        %498 = vmatpush1.msra.mxu0 0.0
        %499 = vmatprep.subr.mxu0 0.0
        %500 = vmatpush1.msra.mxu0 0.0
        %501 = vmatprep.subr.mxu0 0.0
        %502 = vmatpush1.msra.mxu0 0.0
        %503 = vmatprep.subr.mxu0 0.0
        %504 = vmatpush1.msra.mxu0 0.0
        %505 = vmatprep.subr.mxu0 0.0
        %506 = vmatpush1.msra.mxu0 0.0
        %507 = vmatprep.subr.mxu0 0.0
        %508 = vmatpush1.msra.mxu0 0.0
        %509 = vmatprep.subr.mxu0 0.0
        %510 = vmatpush1.msra.mxu0 0.0
        %511 = vmatprep.subr.mxu0 0.0
        %512 = vmatpush1.msra.mxu0 0.0
        %513 = vmatprep.subr.mxu0 0.0
        %514 = vmatpush1.msra.mxu0 0.0
        %515 = vmatprep.subr.mxu0 0.0
        %516 = vmatpush1.msra.mxu0 0.0
        %517 = vmatprep.subr.mxu0 0.0
        %518 = vmatpush1.msra.mxu0 0.0
        %519 = vmatprep.subr.mxu0 0.0
        %520 = vmatpush1.msra.mxu0 0.0
        %521 = vmatprep.subr.mxu0 0.0
        %522 = vmatpush1.msra.mxu0 0.0
        %523 = vmatprep.subr.mxu0 0.0
        %524 = vmatpush1.msra.mxu0 0.0
        %525 = vmatprep.subr.mxu0 0.0
        %526 = vmatpush1.msra.mxu0 0.0
        %527 = vmatprep.subr.mxu0 0.0
        %528 = vmatpush1.msra.mxu0 0.0
        %529 = vmatprep.subr.mxu0 0.0
        %530 = vmatpush1.msra.mxu0 0.0
        %531 = vmatprep.subr.mxu0 0.0
        %532 = vmatpush1.msra.mxu0 0.0
        %533 = vmatprep.subr.mxu0 0.0
        %534 = vmatpush1.msra.mxu0 0.0
        %535 = vmatprep.subr.mxu0 0.0
        %536 = vmatpush1.msra.mxu0 0.0
        %537 = vmatprep.subr.mxu0 0.0
        %538 = vmatpush1.msra.mxu0 0.0
        %539 = vmatprep.subr.mxu0 0.0
        %540 = vmatpush1.msra.mxu0 0.0
        %541 = vmatprep.subr.mxu0 0.0
        %542 = vmatpush1.msra.mxu0 0.0
        %543 = vmatprep.subr.mxu0 0.0
        %544 = vmatpush1.msra.mxu0 0.0
        %545 = vmatprep.subr.mxu0 0.0
        %546 = vmatpush1.msra.mxu0 0.0
        %547 = vmatprep.mubr.f32.mxu0 0.0
        %548 = vmatmul.mubr.f32.gmra.mrb[0].mxu0 %v481
        %v549 = vpop.f32.mrb[0].mxu0
        %v550 = vadd.f32 0.0, %v549
        %v551 = vpop.f32.mrb[0].mxu0
        %552 = vdwg.mxu0
        %s553 = scalar_lea.vmem %s243, 40 [#allocation5]
        %554 = vst.msk [vmem:[%s553] sm:$0xff] %vm262, %v550
        %555 = vmatprep.subr.mxu0 0.0
        %556 = vmatpush1.msra.mxu0 %v251
        %557 = vmatprep.subr.mxu0 0.0
        %558 = vmatpush1.msra.mxu0 %v252
        %559 = vmatprep.subr.mxu0 0.0
        %560 = vmatpush1.msra.mxu0 0.0
        %561 = vmatprep.subr.mxu0 0.0
        %562 = vmatpush1.msra.mxu0 0.0
        %563 = vmatprep.subr.mxu0 0.0
        %564 = vmatpush1.msra.mxu0 0.0
        %565 = vmatprep.subr.mxu0 0.0
        %566 = vmatpush1.msra.mxu0 0.0
        %567 = vmatprep.subr.mxu0 0.0
        %568 = vmatpush1.msra.mxu0 0.0
        %569 = vmatprep.subr.mxu0 0.0
        %570 = vmatpush1.msra.mxu0 0.0
        %571 = vmatprep.subr.mxu0 0.0
        %572 = vmatpush1.msra.mxu0 0.0
        %573 = vmatprep.subr.mxu0 0.0
        %574 = vmatpush1.msra.mxu0 0.0
        %575 = vmatprep.subr.mxu0 0.0
        %576 = vmatpush1.msra.mxu0 0.0
        %577 = vmatprep.subr.mxu0 0.0
        %578 = vmatpush1.msra.mxu0 0.0
        %579 = vmatprep.subr.mxu0 0.0
        %580 = vmatpush1.msra.mxu0 0.0
        %581 = vmatprep.subr.mxu0 0.0
        %582 = vmatpush1.msra.mxu0 0.0
        %583 = vmatprep.subr.mxu0 0.0
        %584 = vmatpush1.msra.mxu0 0.0
        %585 = vmatprep.subr.mxu0 0.0
        %586 = vmatpush1.msra.mxu0 0.0
        %587 = vmatprep.subr.mxu0 0.0
        %588 = vmatpush1.msra.mxu0 0.0
        %589 = vmatprep.subr.mxu0 0.0
        %590 = vmatpush1.msra.mxu0 0.0
        %591 = vmatprep.subr.mxu0 0.0
        %592 = vmatpush1.msra.mxu0 0.0
        %593 = vmatprep.subr.mxu0 0.0
        %594 = vmatpush1.msra.mxu0 0.0
        %595 = vmatprep.subr.mxu0 0.0
        %596 = vmatpush1.msra.mxu0 0.0
        %597 = vmatprep.subr.mxu0 0.0
        %598 = vmatpush1.msra.mxu0 0.0
        %599 = vmatprep.subr.mxu0 0.0
        %600 = vmatpush1.msra.mxu0 0.0
        %601 = vmatprep.subr.mxu0 0.0
        %602 = vmatpush1.msra.mxu0 0.0
        %603 = vmatprep.subr.mxu0 0.0
        %604 = vmatpush1.msra.mxu0 0.0
        %605 = vmatprep.subr.mxu0 0.0
        %606 = vmatpush1.msra.mxu0 0.0
        %607 = vmatprep.subr.mxu0 0.0
        %608 = vmatpush1.msra.mxu0 0.0
        %609 = vmatprep.subr.mxu0 0.0
        %610 = vmatpush1.msra.mxu0 0.0
        %611 = vmatprep.subr.mxu0 0.0
        %612 = vmatpush1.msra.mxu0 0.0
        %613 = vmatprep.subr.mxu0 0.0
        %614 = vmatpush1.msra.mxu0 0.0
        %615 = vmatprep.subr.mxu0 0.0
        %616 = vmatpush1.msra.mxu0 0.0
        %617 = vmatprep.subr.mxu0 0.0
        %618 = vmatpush1.msra.mxu0 0.0
        %619 = vmatprep.mubr.f32.mxu0 0.0
        %620 = vmatmul.mubr.f32.gmra.mrb[0].mxu0 %v264
        %v621 = vpop.f32.mrb[0].mxu0
        %v622 = vadd.f32 0.0, %v621
        %v623 = vpop.f32.mrb[0].mxu0
        %624 = vdwg.mxu0
        %v626 = vsel %vm262, %v622, 0
        %628 = vmatprep.subr.mxu0 0.0
        %629 = vmatpush1.msra.mxu0 %v260
        %630 = vmatprep.subr.mxu0 0.0
        %631 = vmatpush1.msra.mxu0 %v261
        %632 = vmatprep.subr.mxu0 0.0
        %633 = vmatpush1.msra.mxu0 0.0
        %634 = vmatprep.subr.mxu0 0.0
        %635 = vmatpush1.msra.mxu0 0.0
        %636 = vmatprep.subr.mxu0 0.0
        %637 = vmatpush1.msra.mxu0 0.0
        %638 = vmatprep.subr.mxu0 0.0
        %639 = vmatpush1.msra.mxu0 0.0
        %640 = vmatprep.subr.mxu0 0.0
        %641 = vmatpush1.msra.mxu0 0.0
        %642 = vmatprep.subr.mxu0 0.0
        %643 = vmatpush1.msra.mxu0 0.0
        %644 = vmatprep.subr.mxu0 0.0
        %645 = vmatpush1.msra.mxu0 0.0
        %646 = vmatprep.subr.mxu0 0.0
        %647 = vmatpush1.msra.mxu0 0.0
        %648 = vmatprep.subr.mxu0 0.0
        %649 = vmatpush1.msra.mxu0 0.0
        %650 = vmatprep.subr.mxu0 0.0
        %651 = vmatpush1.msra.mxu0 0.0
        %652 = vmatprep.subr.mxu0 0.0
        %653 = vmatpush1.msra.mxu0 0.0
        %654 = vmatprep.subr.mxu0 0.0
        %655 = vmatpush1.msra.mxu0 0.0
        %656 = vmatprep.subr.mxu0 0.0
        %657 = vmatpush1.msra.mxu0 0.0
        %658 = vmatprep.subr.mxu0 0.0
        %659 = vmatpush1.msra.mxu0 0.0
        %660 = vmatprep.subr.mxu0 0.0
        %661 = vmatpush1.msra.mxu0 0.0
        %662 = vmatprep.subr.mxu0 0.0
        %663 = vmatpush1.msra.mxu0 0.0
        %664 = vmatprep.subr.mxu0 0.0
        %665 = vmatpush1.msra.mxu0 0.0
        %666 = vmatprep.subr.mxu0 0.0
        %667 = vmatpush1.msra.mxu0 0.0
        %668 = vmatprep.subr.mxu0 0.0
        %669 = vmatpush1.msra.mxu0 0.0
        %670 = vmatprep.subr.mxu0 0.0
        %671 = vmatpush1.msra.mxu0 0.0
        %672 = vmatprep.subr.mxu0 0.0
        %673 = vmatpush1.msra.mxu0 0.0
        %674 = vmatprep.subr.mxu0 0.0
        %675 = vmatpush1.msra.mxu0 0.0
        %676 = vmatprep.subr.mxu0 0.0
        %677 = vmatpush1.msra.mxu0 0.0
        %678 = vmatprep.subr.mxu0 0.0
        %679 = vmatpush1.msra.mxu0 0.0
        %680 = vmatprep.subr.mxu0 0.0
        %681 = vmatpush1.msra.mxu0 0.0
        %682 = vmatprep.subr.mxu0 0.0
        %683 = vmatpush1.msra.mxu0 0.0
        %684 = vmatprep.subr.mxu0 0.0
        %685 = vmatpush1.msra.mxu0 0.0
        %686 = vmatprep.subr.mxu0 0.0
        %687 = vmatpush1.msra.mxu0 0.0
        %688 = vmatprep.subr.mxu0 0.0
        %689 = vmatpush1.msra.mxu0 0.0
        %690 = vmatprep.subr.mxu0 0.0
        %691 = vmatpush1.msra.mxu0 0.0
        %692 = vmatprep.mubr.f32.mxu0 0.0
        %693 = vmatmul.mubr.f32.gmra.mrb[0].mxu0 %v626
        %v694 = vpop.f32.mrb[0].mxu0
        %v695 = vadd.f32 0.0, %v694
        %v696 = vpop.f32.mrb[0].mxu0
        %697 = vdwg.mxu0
        %s698 = scalar_lea.vmem %s243, 80 [#allocation5]
        %699 = vst.msk [vmem:[%s698] sm:$0xff] %vm262, %v695
        %700 = vmatprep.subr.mxu0 0.0
        %701 = vmatpush1.msra.mxu0 %v253
        %702 = vmatprep.subr.mxu0 0.0
        %703 = vmatpush1.msra.mxu0 %v254
        %704 = vmatprep.subr.mxu0 0.0
        %705 = vmatpush1.msra.mxu0 0.0
        %706 = vmatprep.subr.mxu0 0.0
        %707 = vmatpush1.msra.mxu0 0.0
        %708 = vmatprep.subr.mxu0 0.0
        %709 = vmatpush1.msra.mxu0 0.0
        %710 = vmatprep.subr.mxu0 0.0
        %711 = vmatpush1.msra.mxu0 0.0
        %712 = vmatprep.subr.mxu0 0.0
        %713 = vmatpush1.msra.mxu0 0.0
        %714 = vmatprep.subr.mxu0 0.0
        %715 = vmatpush1.msra.mxu0 0.0
        %716 = vmatprep.subr.mxu0 0.0
        %717 = vmatpush1.msra.mxu0 0.0
        %718 = vmatprep.subr.mxu0 0.0
        %719 = vmatpush1.msra.mxu0 0.0
        %720 = vmatprep.subr.mxu0 0.0
        %721 = vmatpush1.msra.mxu0 0.0
        %722 = vmatprep.subr.mxu0 0.0
        %723 = vmatpush1.msra.mxu0 0.0
        %724 = vmatprep.subr.mxu0 0.0
        %725 = vmatpush1.msra.mxu0 0.0
        %726 = vmatprep.subr.mxu0 0.0
        %727 = vmatpush1.msra.mxu0 0.0
        %728 = vmatprep.subr.mxu0 0.0
        %729 = vmatpush1.msra.mxu0 0.0
        %730 = vmatprep.subr.mxu0 0.0
        %731 = vmatpush1.msra.mxu0 0.0
        %732 = vmatprep.subr.mxu0 0.0
        %733 = vmatpush1.msra.mxu0 0.0
        %734 = vmatprep.subr.mxu0 0.0
        %735 = vmatpush1.msra.mxu0 0.0
        %736 = vmatprep.subr.mxu0 0.0
        %737 = vmatpush1.msra.mxu0 0.0
        %738 = vmatprep.subr.mxu0 0.0
        %739 = vmatpush1.msra.mxu0 0.0
        %740 = vmatprep.subr.mxu0 0.0
        %741 = vmatpush1.msra.mxu0 0.0
        %742 = vmatprep.subr.mxu0 0.0
        %743 = vmatpush1.msra.mxu0 0.0
        %744 = vmatprep.subr.mxu0 0.0
        %745 = vmatpush1.msra.mxu0 0.0
        %746 = vmatprep.subr.mxu0 0.0
        %747 = vmatpush1.msra.mxu0 0.0
        %748 = vmatprep.subr.mxu0 0.0
        %749 = vmatpush1.msra.mxu0 0.0
        %750 = vmatprep.subr.mxu0 0.0
        %751 = vmatpush1.msra.mxu0 0.0
        %752 = vmatprep.subr.mxu0 0.0
        %753 = vmatpush1.msra.mxu0 0.0
        %754 = vmatprep.subr.mxu0 0.0
        %755 = vmatpush1.msra.mxu0 0.0
        %756 = vmatprep.subr.mxu0 0.0
        %757 = vmatpush1.msra.mxu0 0.0
        %758 = vmatprep.subr.mxu0 0.0
        %759 = vmatpush1.msra.mxu0 0.0
        %760 = vmatprep.subr.mxu0 0.0
        %761 = vmatpush1.msra.mxu0 0.0
        %762 = vmatprep.subr.mxu0 0.0
        %763 = vmatpush1.msra.mxu0 0.0
        %764 = vmatprep.mubr.f32.mxu0 0.0
        %765 = vmatmul.mubr.f32.gmra.mrb[0].mxu0 %v264
        %v766 = vpop.f32.mrb[0].mxu0
        %v767 = vadd.f32 0.0, %v766
        %v768 = vpop.f32.mrb[0].mxu0
        %769 = vdwg.mxu0
        %v771 = vsel %vm262, %v767, 0
        %773 = vmatprep.subr.mxu0 0.0
        %774 = vmatpush1.msra.mxu0 %v260
        %775 = vmatprep.subr.mxu0 0.0
        %776 = vmatpush1.msra.mxu0 %v261
        %777 = vmatprep.subr.mxu0 0.0
        %778 = vmatpush1.msra.mxu0 0.0
        %779 = vmatprep.subr.mxu0 0.0
        %780 = vmatpush1.msra.mxu0 0.0
        %781 = vmatprep.subr.mxu0 0.0
        %782 = vmatpush1.msra.mxu0 0.0
        %783 = vmatprep.subr.mxu0 0.0
        %784 = vmatpush1.msra.mxu0 0.0
        %785 = vmatprep.subr.mxu0 0.0
        %786 = vmatpush1.msra.mxu0 0.0
        %787 = vmatprep.subr.mxu0 0.0
        %788 = vmatpush1.msra.mxu0 0.0
        %789 = vmatprep.subr.mxu0 0.0
        %790 = vmatpush1.msra.mxu0 0.0
        %791 = vmatprep.subr.mxu0 0.0
        %792 = vmatpush1.msra.mxu0 0.0
        %793 = vmatprep.subr.mxu0 0.0
        %794 = vmatpush1.msra.mxu0 0.0
        %795 = vmatprep.subr.mxu0 0.0
        %796 = vmatpush1.msra.mxu0 0.0
        %797 = vmatprep.subr.mxu0 0.0
        %798 = vmatpush1.msra.mxu0 0.0
        %799 = vmatprep.subr.mxu0 0.0
        %800 = vmatpush1.msra.mxu0 0.0
        %801 = vmatprep.subr.mxu0 0.0
        %802 = vmatpush1.msra.mxu0 0.0
        %803 = vmatprep.subr.mxu0 0.0
        %804 = vmatpush1.msra.mxu0 0.0
        %805 = vmatprep.subr.mxu0 0.0
        %806 = vmatpush1.msra.mxu0 0.0
        %807 = vmatprep.subr.mxu0 0.0
        %808 = vmatpush1.msra.mxu0 0.0
        %809 = vmatprep.subr.mxu0 0.0
        %810 = vmatpush1.msra.mxu0 0.0
        %811 = vmatprep.subr.mxu0 0.0
        %812 = vmatpush1.msra.mxu0 0.0
        %813 = vmatprep.subr.mxu0 0.0
        %814 = vmatpush1.msra.mxu0 0.0
        %815 = vmatprep.subr.mxu0 0.0
        %816 = vmatpush1.msra.mxu0 0.0
        %817 = vmatprep.subr.mxu0 0.0
        %818 = vmatpush1.msra.mxu0 0.0
        %819 = vmatprep.subr.mxu0 0.0
        %820 = vmatpush1.msra.mxu0 0.0
        %821 = vmatprep.subr.mxu0 0.0
        %822 = vmatpush1.msra.mxu0 0.0
        %823 = vmatprep.subr.mxu0 0.0
        %824 = vmatpush1.msra.mxu0 0.0
        %825 = vmatprep.subr.mxu0 0.0
        %826 = vmatpush1.msra.mxu0 0.0
        %827 = vmatprep.subr.mxu0 0.0
        %828 = vmatpush1.msra.mxu0 0.0
        %829 = vmatprep.subr.mxu0 0.0
        %830 = vmatpush1.msra.mxu0 0.0
        %831 = vmatprep.subr.mxu0 0.0
        %832 = vmatpush1.msra.mxu0 0.0
        %833 = vmatprep.subr.mxu0 0.0
        %834 = vmatpush1.msra.mxu0 0.0
        %835 = vmatprep.subr.mxu0 0.0
        %836 = vmatpush1.msra.mxu0 0.0
        %837 = vmatprep.mubr.f32.mxu0 0.0
        %838 = vmatmul.mubr.f32.gmra.mrb[0].mxu0 %v771
        %v839 = vpop.f32.mrb[0].mxu0
        %v840 = vadd.f32 0.0, %v839
        %v841 = vpop.f32.mrb[0].mxu0
        %842 = vdwg.mxu0
        %s843 = scalar_lea.vmem %s243, 120 [#allocation5]
        %844 = vst.msk [vmem:[%s843] sm:$0xff] %vm262, %v840
        %v845 = vld [vmem:[%s2] sm:$0xf]
        %v846 = vld [vmem:[%s2 + $0x4] sm:$0xf]
        %v849 = vunpack.c.l.b16 %v845
        %v850 = vunpack.c.l.b16 %v846
        %v851 = vpack.c.b16 %v850, %v849
        %v854 = vsel %vm262, %v255, 0
        %v857 = vsel %vm262, %v256, 0
        %v860 = vsel %vm262, %v257, 0
        %v863 = vsel %vm262, %v258, 0
        %865 = vmatprep.subr.bf16.mxu0 0
        %866 = vmatpush1.bf16.msra.mxu0 %v851
        %867 = vmatprep.subr.bf16.mxu0 0
        %868 = vmatpush1.bf16.msra.mxu0 0
        %869 = vmatprep.subr.bf16.mxu0 0
        %870 = vmatpush1.bf16.msra.mxu0 0
        %871 = vmatprep.subr.bf16.mxu0 0
        %872 = vmatpush1.bf16.msra.mxu0 0
        %873 = vmatprep.subr.bf16.mxu0 0
        %874 = vmatpush1.bf16.msra.mxu0 0
        %875 = vmatprep.subr.bf16.mxu0 0
        %876 = vmatpush1.bf16.msra.mxu0 0
        %877 = vmatprep.subr.bf16.mxu0 0
        %878 = vmatpush1.bf16.msra.mxu0 0
        %879 = vmatprep.subr.bf16.mxu0 0
        %880 = vmatpush1.bf16.msra.mxu0 0
        %881 = vmatprep.subr.bf16.mxu0 0
        %882 = vmatpush1.bf16.msra.mxu0 0
        %883 = vmatprep.subr.bf16.mxu0 0
        %884 = vmatpush1.bf16.msra.mxu0 0
        %885 = vmatprep.subr.bf16.mxu0 0
        %886 = vmatpush1.bf16.msra.mxu0 0
        %887 = vmatprep.subr.bf16.mxu0 0
        %888 = vmatpush1.bf16.msra.mxu0 0
        %889 = vmatprep.subr.bf16.mxu0 0
        %890 = vmatpush1.bf16.msra.mxu0 0
        %891 = vmatprep.subr.bf16.mxu0 0
        %892 = vmatpush1.bf16.msra.mxu0 0
        %893 = vmatprep.subr.bf16.mxu0 0
        %894 = vmatpush1.bf16.msra.mxu0 0
        %895 = vmatprep.subr.bf16.mxu0 0
        %896 = vmatpush1.bf16.msra.mxu0 0
        %897 = vmatprep.mubr.bf16.mxu0 0
        %898 = vmatmul.mubr.bf16.gmra.mrb[0].mxu0 %v854
        %v899 = vpop.f32.mrb[0].mxu0
        %v900 = vadd.f32 0.0, %v899
        %v901 = vpop.f32.mrb[0].mxu0
        %v902 = vpop.f32.mrb[0].mxu0
        %v903 = vadd.f32 0.0, %v902
        %v904 = vpop.f32.mrb[0].mxu0
        %905 = vmatprep.mubr.bf16.mxu0 0
        %906 = vmatmul.mubr.bf16.gmra.mrb[0].mxu0 %v857
        %v907 = vpop.f32.mrb[0].mxu0
        %v908 = vadd.f32 0.0, %v907
        %v909 = vpop.f32.mrb[0].mxu0
        %v910 = vpop.f32.mrb[0].mxu0
        %v911 = vadd.f32 0.0, %v910
        %v912 = vpop.f32.mrb[0].mxu0
        %913 = vmatprep.mubr.bf16.mxu0 0
        %914 = vmatmul.mubr.bf16.gmra.mrb[0].mxu0 %v860
        %v915 = vpop.f32.mrb[0].mxu0
        %v916 = vadd.f32 0.0, %v915
        %v917 = vpop.f32.mrb[0].mxu0
        %v918 = vpop.f32.mrb[0].mxu0
        %v919 = vadd.f32 0.0, %v918
        %v920 = vpop.f32.mrb[0].mxu0
        %921 = vmatprep.mubr.bf16.mxu0 0
        %922 = vmatmul.mubr.bf16.gmra.mrb[0].mxu0 %v863
        %v923 = vpop.f32.mrb[0].mxu0
        %v924 = vadd.f32 0.0, %v923
        %v925 = vpop.f32.mrb[0].mxu0
        %v926 = vpop.f32.mrb[0].mxu0
        %v927 = vadd.f32 0.0, %v926
        %v928 = vpop.f32.mrb[0].mxu0
        %929 = vdwg.mxu0
        %v930 = vpack.c.bf16 %v903, %v900
        %v931 = vpack.c.bf16 %v911, %v908
        %v932 = vpack.c.bf16 %v919, %v916
        %v933 = vpack.c.bf16 %v927, %v924
        %v934 = vld [vmem:[%s1] sm:$0xf]
        %v935 = vld [vmem:[%s1 + $0x4] sm:$0xf]
        %v936 = vld [vmem:[%s1 + $0x8] sm:$0xf]
        %v937 = vld [vmem:[%s1 + $0xc] sm:$0xf]
        %v942 = vunpack.c.l.b16 %v934
        %v943 = vunpack.c.l.b16 %v935
        %v944 = vunpack.c.l.b16 %v936
        %v945 = vunpack.c.l.b16 %v937
        %v946 = vpack.c.b16 %v943, %v942
        %v947 = vpack.c.b16 %v945, %v944
        %v949 = vsel %vm262, %v946, 0
        %v952 = vsel %vm262, %v947, 0
        %954 = vmatprep.subr.bf16.mxu0 0
        %955 = vmatpush1.bf16.msra.mxu0 %v930
        %956 = vmatprep.subr.bf16.mxu0 0
        %957 = vmatpush1.bf16.msra.mxu0 0
        %958 = vmatprep.subr.bf16.mxu0 0
        %959 = vmatpush1.bf16.msra.mxu0 0
        %960 = vmatprep.subr.bf16.mxu0 0
        %961 = vmatpush1.bf16.msra.mxu0 0
        %962 = vmatprep.subr.bf16.mxu0 0
        %963 = vmatpush1.bf16.msra.mxu0 0
        %964 = vmatprep.subr.bf16.mxu0 0
        %965 = vmatpush1.bf16.msra.mxu0 0
        %966 = vmatprep.subr.bf16.mxu0 0
        %967 = vmatpush1.bf16.msra.mxu0 0
        %968 = vmatprep.subr.bf16.mxu0 0
        %969 = vmatpush1.bf16.msra.mxu0 0
        %970 = vmatprep.subr.bf16.mxu0 0
        %971 = vmatpush1.bf16.msra.mxu0 0
        %972 = vmatprep.subr.bf16.mxu0 0
        %973 = vmatpush1.bf16.msra.mxu0 0
        %974 = vmatprep.subr.bf16.mxu0 0
        %975 = vmatpush1.bf16.msra.mxu0 0
        %976 = vmatprep.subr.bf16.mxu0 0
        %977 = vmatpush1.bf16.msra.mxu0 0
        %978 = vmatprep.subr.bf16.mxu0 0
        %979 = vmatpush1.bf16.msra.mxu0 0
        %980 = vmatprep.subr.bf16.mxu0 0
        %981 = vmatpush1.bf16.msra.mxu0 0
        %982 = vmatprep.subr.bf16.mxu0 0
        %983 = vmatpush1.bf16.msra.mxu0 0
        %984 = vmatprep.subr.bf16.mxu0 0
        %985 = vmatpush1.bf16.msra.mxu0 0
        %986 = vmatprep.mubr.bf16.mxu0 0
        %987 = vmatmul.mubr.bf16.gmra.mrb[0].mxu0 %v949
        %v988 = vpop.f32.mrb[0].mxu0
        %v989 = vadd.f32 0.0, %v988
        %v990 = vpop.f32.mrb[0].mxu0
        %v991 = vpop.f32.mrb[0].mxu0
        %v992 = vadd.f32 0.0, %v991
        %v993 = vpop.f32.mrb[0].mxu0
        %994 = vmatprep.mubr.bf16.mxu0 0
        %995 = vmatmul.mubr.bf16.gmra.mrb[0].mxu0 %v952
        %v996 = vpop.f32.mrb[0].mxu0
        %v997 = vadd.f32 0.0, %v996
        %v998 = vpop.f32.mrb[0].mxu0
        %v999 = vpop.f32.mrb[0].mxu0
        %v1000 = vadd.f32 0.0, %v999
        %v1001 = vpop.f32.mrb[0].mxu0
        %1002 = vdwg.mxu0
        %1005 = vrot.lane.b32.xlu0 %v997, 112
        %v1006 = vpop.permute.xlu0 %1005
        %1007 = vrot.lane.b32.xlu0 %v1000, 112
        %v1008 = vpop.permute.xlu0 %1007
        %v1011 = vsub.f32 %v989, %v1006
        %v1012 = vsub.f32 %v992, %v1008
        %1013 = vrot.lane.b32.xlu0 %v997, 16
        %v1014 = vpop.permute.xlu0 %1013
        %1015 = vrot.lane.b32.xlu0 %v1000, 16
        %v1016 = vpop.permute.xlu0 %1015
        %v1019 = vadd.f32 %v989, %v1014
        %v1020 = vadd.f32 %v992, %v1016
        %v1021 = vmul.f32 %v1011, %v1011
        %v1022 = vmul.f32 %v1012, %v1012
        %v1023 = vmul.f32 %v1019, %v1019
        %v1024 = vmul.f32 %v1020, %v1020
        %1027 = vrot.lane.b32.xlu0 %v1023, 112
        %v1028 = vpop.permute.xlu0 %1027
        %1029 = vrot.lane.b32.xlu0 %v1024, 112
        %v1030 = vpop.permute.xlu0 %1029
        %v1033 = vadd.f32 %v1021, %v1028
        %v1034 = vadd.f32 %v1022, %v1030
        %v1035 = vrsqrt.pop %v1033
        %v1036 = vmul.f32 %v1033, %v1035
        %vm1037 = vcmp.eq.f32.partialorder %v1033, inf
        %v1038 = vsel %vm1037, %v1033, %v1036
        %vm1039 = vcmp.eq.f32.partialorder %v1033, 0.0
        %v1040 = vand.u32 %v1033, 2147483648
        %v1041 = vsel %vm1039, %v1040, %v1038
        %v1042 = vrsqrt.pop %v1034
        %v1043 = vmul.f32 %v1034, %v1042
        %vm1044 = vcmp.eq.f32.partialorder %v1034, inf
        %v1045 = vsel %vm1044, %v1034, %v1043
        %vm1046 = vcmp.eq.f32.partialorder %v1034, 0.0
        %v1047 = vand.u32 %v1034, 2147483648
        %v1048 = vsel %vm1046, %v1047, %v1045
        %1049 = vmatprep.subr.mxu0 0.0
        %1050 = vmatpush1.msra.mxu0 %v1041
        %1051 = vmatprep.subr.mxu0 0.0
        %1052 = vmatpush1.msra.mxu0 %v1048
        %1053 = vmatprep.subr.mxu0 0.0
        %1054 = vmatpush1.msra.mxu0 0.0
        %1055 = vmatprep.subr.mxu0 0.0
        %1056 = vmatpush1.msra.mxu0 0.0
        %1057 = vmatprep.subr.mxu0 0.0
        %1058 = vmatpush1.msra.mxu0 0.0
        %1059 = vmatprep.subr.mxu0 0.0
        %1060 = vmatpush1.msra.mxu0 0.0
        %1061 = vmatprep.subr.mxu0 0.0
        %1062 = vmatpush1.msra.mxu0 0.0
        %1063 = vmatprep.subr.mxu0 0.0
        %1064 = vmatpush1.msra.mxu0 0.0
        %1065 = vmatprep.subr.mxu0 0.0
        %1066 = vmatpush1.msra.mxu0 0.0
        %1067 = vmatprep.subr.mxu0 0.0
        %1068 = vmatpush1.msra.mxu0 0.0
        %1069 = vmatprep.subr.mxu0 0.0
        %1070 = vmatpush1.msra.mxu0 0.0
        %1071 = vmatprep.subr.mxu0 0.0
        %1072 = vmatpush1.msra.mxu0 0.0
        %1073 = vmatprep.subr.mxu0 0.0
        %1074 = vmatpush1.msra.mxu0 0.0
        %1075 = vmatprep.subr.mxu0 0.0
        %1076 = vmatpush1.msra.mxu0 0.0
        %1077 = vmatprep.subr.mxu0 0.0
        %1078 = vmatpush1.msra.mxu0 0.0
        %1079 = vmatprep.subr.mxu0 0.0
        %1080 = vmatpush1.msra.mxu0 0.0
        %1081 = vmatprep.subr.mxu0 0.0
        %1082 = vmatpush1.msra.mxu0 0.0
        %1083 = vmatprep.subr.mxu0 0.0
        %1084 = vmatpush1.msra.mxu0 0.0
        %1085 = vmatprep.subr.mxu0 0.0
        %1086 = vmatpush1.msra.mxu0 0.0
        %1087 = vmatprep.subr.mxu0 0.0
        %1088 = vmatpush1.msra.mxu0 0.0
        %1089 = vmatprep.subr.mxu0 0.0
        %1090 = vmatpush1.msra.mxu0 0.0
        %1091 = vmatprep.subr.mxu0 0.0
        %1092 = vmatpush1.msra.mxu0 0.0
        %1093 = vmatprep.subr.mxu0 0.0
        %1094 = vmatpush1.msra.mxu0 0.0
        %1095 = vmatprep.subr.mxu0 0.0
        %1096 = vmatpush1.msra.mxu0 0.0
        %1097 = vmatprep.subr.mxu0 0.0
        %1098 = vmatpush1.msra.mxu0 0.0
        %1099 = vmatprep.subr.mxu0 0.0
        %1100 = vmatpush1.msra.mxu0 0.0
        %1101 = vmatprep.subr.mxu0 0.0
        %1102 = vmatpush1.msra.mxu0 0.0
        %1103 = vmatprep.subr.mxu0 0.0
        %1104 = vmatpush1.msra.mxu0 0.0
        %1105 = vmatprep.subr.mxu0 0.0
        %1106 = vmatpush1.msra.mxu0 0.0
        %1107 = vmatprep.subr.mxu0 0.0
        %1108 = vmatpush1.msra.mxu0 0.0
        %1109 = vmatprep.subr.mxu0 0.0
        %1110 = vmatpush1.msra.mxu0 0.0
        %1111 = vmatprep.subr.mxu0 0.0
        %1112 = vmatpush1.msra.mxu0 0.0
        %1113 = vmatprep.mubr.f32.mxu0 0.0
        %1114 = vmatmul.mubr.f32.gmra.mrb[0].mxu0 %v264
        %v1115 = vpop.f32.mrb[0].mxu0
        %v1116 = vadd.f32 0.0, %v1115
        %v1117 = vpop.f32.mrb[0].mxu0
        %1118 = vdwg.mxu0
        %v1120 = vsel %vm262, %v1116, 0
        %1122 = vmatprep.subr.mxu0 0.0
        %1123 = vmatpush1.msra.mxu0 %v260
        %1124 = vmatprep.subr.mxu0 0.0
        %1125 = vmatpush1.msra.mxu0 %v261
        %1126 = vmatprep.subr.mxu0 0.0
        %1127 = vmatpush1.msra.mxu0 0.0
        %1128 = vmatprep.subr.mxu0 0.0
        %1129 = vmatpush1.msra.mxu0 0.0
        %1130 = vmatprep.subr.mxu0 0.0
        %1131 = vmatpush1.msra.mxu0 0.0
        %1132 = vmatprep.subr.mxu0 0.0
        %1133 = vmatpush1.msra.mxu0 0.0
        %1134 = vmatprep.subr.mxu0 0.0
        %1135 = vmatpush1.msra.mxu0 0.0
        %1136 = vmatprep.subr.mxu0 0.0
        %1137 = vmatpush1.msra.mxu0 0.0
        %1138 = vmatprep.subr.mxu0 0.0
        %1139 = vmatpush1.msra.mxu0 0.0
        %1140 = vmatprep.subr.mxu0 0.0
        %1141 = vmatpush1.msra.mxu0 0.0
        %1142 = vmatprep.subr.mxu0 0.0
        %1143 = vmatpush1.msra.mxu0 0.0
        %1144 = vmatprep.subr.mxu0 0.0
        %1145 = vmatpush1.msra.mxu0 0.0
        %1146 = vmatprep.subr.mxu0 0.0
        %1147 = vmatpush1.msra.mxu0 0.0
        %1148 = vmatprep.subr.mxu0 0.0
        %1149 = vmatpush1.msra.mxu0 0.0
        %1150 = vmatprep.subr.mxu0 0.0
        %1151 = vmatpush1.msra.mxu0 0.0
        %1152 = vmatprep.subr.mxu0 0.0
        %1153 = vmatpush1.msra.mxu0 0.0
        %1154 = vmatprep.subr.mxu0 0.0
        %1155 = vmatpush1.msra.mxu0 0.0
        %1156 = vmatprep.subr.mxu0 0.0
        %1157 = vmatpush1.msra.mxu0 0.0
        %1158 = vmatprep.subr.mxu0 0.0
        %1159 = vmatpush1.msra.mxu0 0.0
        %1160 = vmatprep.subr.mxu0 0.0
        %1161 = vmatpush1.msra.mxu0 0.0
        %1162 = vmatprep.subr.mxu0 0.0
        %1163 = vmatpush1.msra.mxu0 0.0
        %1164 = vmatprep.subr.mxu0 0.0
        %1165 = vmatpush1.msra.mxu0 0.0
        %1166 = vmatprep.subr.mxu0 0.0
        %1167 = vmatpush1.msra.mxu0 0.0
        %1168 = vmatprep.subr.mxu0 0.0
        %1169 = vmatpush1.msra.mxu0 0.0
        %1170 = vmatprep.subr.mxu0 0.0
        %1171 = vmatpush1.msra.mxu0 0.0
        %1172 = vmatprep.subr.mxu0 0.0
        %1173 = vmatpush1.msra.mxu0 0.0
        %1174 = vmatprep.subr.mxu0 0.0
        %1175 = vmatpush1.msra.mxu0 0.0
        %1176 = vmatprep.subr.mxu0 0.0
        %1177 = vmatpush1.msra.mxu0 0.0
        %1178 = vmatprep.subr.mxu0 0.0
        %1179 = vmatpush1.msra.mxu0 0.0
        %1180 = vmatprep.subr.mxu0 0.0
        %1181 = vmatpush1.msra.mxu0 0.0
        %1182 = vmatprep.subr.mxu0 0.0
        %1183 = vmatpush1.msra.mxu0 0.0
        %1184 = vmatprep.subr.mxu0 0.0
        %1185 = vmatpush1.msra.mxu0 0.0
        %1186 = vmatprep.mubr.f32.mxu0 0.0
        %1187 = vmatmul.mubr.f32.gmra.mrb[0].mxu0 %v1120
        %v1188 = vpop.f32.mrb[0].mxu0
        %v1189 = vadd.f32 0.0, %v1188
        %v1190 = vpop.f32.mrb[0].mxu0
        %1191 = vdwg.mxu0
        %s1192 = scalar_lea.vmem %s243, 8 [#allocation5]
        %1193 = vst.msk [vmem:[%s1192] sm:$0xff] %vm262, %v1189
        %v1194 = vld [vmem:[%s1] sm:$0xf]
        %v1195 = vld [vmem:[%s1 + $0x4] sm:$0xf]
        %v1196 = vld [vmem:[%s1 + $0x8] sm:$0xf]
        %v1197 = vld [vmem:[%s1 + $0xc] sm:$0xf]
        %v1202 = vunpack.c.l.b16 %v1194
        %v1203 = vunpack.c.l.b16 %v1195
        %v1204 = vunpack.c.l.b16 %v1196
        %v1205 = vunpack.c.l.b16 %v1197
        %v1206 = vpack.c.b16 %v1203, %v1202
        %v1207 = vpack.c.b16 %v1205, %v1204
        %v1209 = vsel %vm262, %v1206, 0
        %v1212 = vsel %vm262, %v1207, 0
        %1214 = vmatprep.subr.bf16.mxu0 0
        %1215 = vmatpush1.bf16.msra.mxu0 %v931
        %1216 = vmatprep.subr.bf16.mxu0 0
        %1217 = vmatpush1.bf16.msra.mxu0 0
        %1218 = vmatprep.subr.bf16.mxu0 0
        %1219 = vmatpush1.bf16.msra.mxu0 0
        %1220 = vmatprep.subr.bf16.mxu0 0
        %1221 = vmatpush1.bf16.msra.mxu0 0
        %1222 = vmatprep.subr.bf16.mxu0 0
        %1223 = vmatpush1.bf16.msra.mxu0 0
        %1224 = vmatprep.subr.bf16.mxu0 0
        %1225 = vmatpush1.bf16.msra.mxu0 0
        %1226 = vmatprep.subr.bf16.mxu0 0
        %1227 = vmatpush1.bf16.msra.mxu0 0
        %1228 = vmatprep.subr.bf16.mxu0 0
        %1229 = vmatpush1.bf16.msra.mxu0 0
        %1230 = vmatprep.subr.bf16.mxu0 0
        %1231 = vmatpush1.bf16.msra.mxu0 0
        %1232 = vmatprep.subr.bf16.mxu0 0
        %1233 = vmatpush1.bf16.msra.mxu0 0
        %1234 = vmatprep.subr.bf16.mxu0 0
        %1235 = vmatpush1.bf16.msra.mxu0 0
        %1236 = vmatprep.subr.bf16.mxu0 0
        %1237 = vmatpush1.bf16.msra.mxu0 0
        %1238 = vmatprep.subr.bf16.mxu0 0
        %1239 = vmatpush1.bf16.msra.mxu0 0
        %1240 = vmatprep.subr.bf16.mxu0 0
        %1241 = vmatpush1.bf16.msra.mxu0 0
        %1242 = vmatprep.subr.bf16.mxu0 0
        %1243 = vmatpush1.bf16.msra.mxu0 0
        %1244 = vmatprep.subr.bf16.mxu0 0
        %1245 = vmatpush1.bf16.msra.mxu0 0
        %1246 = vmatprep.mubr.bf16.mxu0 0
        %1247 = vmatmul.mubr.bf16.gmra.mrb[0].mxu0 %v1209
        %v1248 = vpop.f32.mrb[0].mxu0
        %v1249 = vadd.f32 0.0, %v1248
        %v1250 = vpop.f32.mrb[0].mxu0
        %v1251 = vpop.f32.mrb[0].mxu0
        %v1252 = vadd.f32 0.0, %v1251
        %v1253 = vpop.f32.mrb[0].mxu0
        %1254 = vmatprep.mubr.bf16.mxu0 0
        %1255 = vmatmul.mubr.bf16.gmra.mrb[0].mxu0 %v1212
        %v1256 = vpop.f32.mrb[0].mxu0
        %v1257 = vadd.f32 0.0, %v1256
        %v1258 = vpop.f32.mrb[0].mxu0
        %v1259 = vpop.f32.mrb[0].mxu0
        %v1260 = vadd.f32 0.0, %v1259
        %v1261 = vpop.f32.mrb[0].mxu0
        %1262 = vdwg.mxu0
        %1265 = vrot.lane.b32.xlu0 %v1257, 112
        %v1266 = vpop.permute.xlu0 %1265
        %1267 = vrot.lane.b32.xlu0 %v1260, 112
        %v1268 = vpop.permute.xlu0 %1267
        %v1271 = vsub.f32 %v1249, %v1266
        %v1272 = vsub.f32 %v1252, %v1268
        %1273 = vrot.lane.b32.xlu0 %v1257, 16
        %v1274 = vpop.permute.xlu0 %1273
        %1275 = vrot.lane.b32.xlu0 %v1260, 16
        %v1276 = vpop.permute.xlu0 %1275
        %v1279 = vadd.f32 %v1249, %v1274
        %v1280 = vadd.f32 %v1252, %v1276
        %v1281 = vmul.f32 %v1271, %v1271
        %v1282 = vmul.f32 %v1272, %v1272
        %v1283 = vmul.f32 %v1279, %v1279
        %v1284 = vmul.f32 %v1280, %v1280
        %1287 = vrot.lane.b32.xlu0 %v1283, 112
        %v1288 = vpop.permute.xlu0 %1287
        %1289 = vrot.lane.b32.xlu0 %v1284, 112
        %v1290 = vpop.permute.xlu0 %1289
        %v1293 = vadd.f32 %v1281, %v1288
        %v1294 = vadd.f32 %v1282, %v1290
        %v1295 = vrsqrt.pop %v1293
        %v1296 = vmul.f32 %v1293, %v1295
        %vm1297 = vcmp.eq.f32.partialorder %v1293, inf
        %v1298 = vsel %vm1297, %v1293, %v1296
        %vm1299 = vcmp.eq.f32.partialorder %v1293, 0.0
        %v1300 = vand.u32 %v1293, 2147483648
        %v1301 = vsel %vm1299, %v1300, %v1298
        %v1302 = vrsqrt.pop %v1294
        %v1303 = vmul.f32 %v1294, %v1302
        %vm1304 = vcmp.eq.f32.partialorder %v1294, inf
        %v1305 = vsel %vm1304, %v1294, %v1303
        %vm1306 = vcmp.eq.f32.partialorder %v1294, 0.0
        %v1307 = vand.u32 %v1294, 2147483648
        %v1308 = vsel %vm1306, %v1307, %v1305
        %1309 = vmatprep.subr.mxu0 0.0
        %1310 = vmatpush1.msra.mxu0 %v1301
        %1311 = vmatprep.subr.mxu0 0.0
        %1312 = vmatpush1.msra.mxu0 %v1308
        %1313 = vmatprep.subr.mxu0 0.0
        %1314 = vmatpush1.msra.mxu0 0.0
        %1315 = vmatprep.subr.mxu0 0.0
        %1316 = vmatpush1.msra.mxu0 0.0
        %1317 = vmatprep.subr.mxu0 0.0
        %1318 = vmatpush1.msra.mxu0 0.0
        %1319 = vmatprep.subr.mxu0 0.0
        %1320 = vmatpush1.msra.mxu0 0.0
        %1321 = vmatprep.subr.mxu0 0.0
        %1322 = vmatpush1.msra.mxu0 0.0
        %1323 = vmatprep.subr.mxu0 0.0
        %1324 = vmatpush1.msra.mxu0 0.0
        %1325 = vmatprep.subr.mxu0 0.0
        %1326 = vmatpush1.msra.mxu0 0.0
        %1327 = vmatprep.subr.mxu0 0.0
        %1328 = vmatpush1.msra.mxu0 0.0
        %1329 = vmatprep.subr.mxu0 0.0
        %1330 = vmatpush1.msra.mxu0 0.0
        %1331 = vmatprep.subr.mxu0 0.0
        %1332 = vmatpush1.msra.mxu0 0.0
        %1333 = vmatprep.subr.mxu0 0.0
        %1334 = vmatpush1.msra.mxu0 0.0
        %1335 = vmatprep.subr.mxu0 0.0
        %1336 = vmatpush1.msra.mxu0 0.0
        %1337 = vmatprep.subr.mxu0 0.0
        %1338 = vmatpush1.msra.mxu0 0.0
        %1339 = vmatprep.subr.mxu0 0.0
        %1340 = vmatpush1.msra.mxu0 0.0
        %1341 = vmatprep.subr.mxu0 0.0
        %1342 = vmatpush1.msra.mxu0 0.0
        %1343 = vmatprep.subr.mxu0 0.0
        %1344 = vmatpush1.msra.mxu0 0.0
        %1345 = vmatprep.subr.mxu0 0.0
        %1346 = vmatpush1.msra.mxu0 0.0
        %1347 = vmatprep.subr.mxu0 0.0
        %1348 = vmatpush1.msra.mxu0 0.0
        %1349 = vmatprep.subr.mxu0 0.0
        %1350 = vmatpush1.msra.mxu0 0.0
        %1351 = vmatprep.subr.mxu0 0.0
        %1352 = vmatpush1.msra.mxu0 0.0
        %1353 = vmatprep.subr.mxu0 0.0
        %1354 = vmatpush1.msra.mxu0 0.0
        %1355 = vmatprep.subr.mxu0 0.0
        %1356 = vmatpush1.msra.mxu0 0.0
        %1357 = vmatprep.subr.mxu0 0.0
        %1358 = vmatpush1.msra.mxu0 0.0
        %1359 = vmatprep.subr.mxu0 0.0
        %1360 = vmatpush1.msra.mxu0 0.0
        %1361 = vmatprep.subr.mxu0 0.0
        %1362 = vmatpush1.msra.mxu0 0.0
        %1363 = vmatprep.subr.mxu0 0.0
        %1364 = vmatpush1.msra.mxu0 0.0
        %1365 = vmatprep.subr.mxu0 0.0
        %1366 = vmatpush1.msra.mxu0 0.0
        %1367 = vmatprep.subr.mxu0 0.0
        %1368 = vmatpush1.msra.mxu0 0.0
        %1369 = vmatprep.subr.mxu0 0.0
        %1370 = vmatpush1.msra.mxu0 0.0
        %1371 = vmatprep.subr.mxu0 0.0
        %1372 = vmatpush1.msra.mxu0 0.0
        %1373 = vmatprep.mubr.f32.mxu0 0.0
        %1374 = vmatmul.mubr.f32.gmra.mrb[0].mxu0 %v264
        %v1375 = vpop.f32.mrb[0].mxu0
        %v1376 = vadd.f32 0.0, %v1375
        %v1377 = vpop.f32.mrb[0].mxu0
        %1378 = vdwg.mxu0
        %v1380 = vsel %vm262, %v1376, 0
        %1382 = vmatprep.subr.mxu0 0.0
        %1383 = vmatpush1.msra.mxu0 %v260
        %1384 = vmatprep.subr.mxu0 0.0
        %1385 = vmatpush1.msra.mxu0 %v261
        %1386 = vmatprep.subr.mxu0 0.0
        %1387 = vmatpush1.msra.mxu0 0.0
        %1388 = vmatprep.subr.mxu0 0.0
        %1389 = vmatpush1.msra.mxu0 0.0
        %1390 = vmatprep.subr.mxu0 0.0
        %1391 = vmatpush1.msra.mxu0 0.0
        %1392 = vmatprep.subr.mxu0 0.0
        %1393 = vmatpush1.msra.mxu0 0.0
        %1394 = vmatprep.subr.mxu0 0.0
        %1395 = vmatpush1.msra.mxu0 0.0
        %1396 = vmatprep.subr.mxu0 0.0
        %1397 = vmatpush1.msra.mxu0 0.0
        %1398 = vmatprep.subr.mxu0 0.0
        %1399 = vmatpush1.msra.mxu0 0.0
        %1400 = vmatprep.subr.mxu0 0.0
        %1401 = vmatpush1.msra.mxu0 0.0
        %1402 = vmatprep.subr.mxu0 0.0
        %1403 = vmatpush1.msra.mxu0 0.0
        %1404 = vmatprep.subr.mxu0 0.0
        %1405 = vmatpush1.msra.mxu0 0.0
        %1406 = vmatprep.subr.mxu0 0.0
        %1407 = vmatpush1.msra.mxu0 0.0
        %1408 = vmatprep.subr.mxu0 0.0
        %1409 = vmatpush1.msra.mxu0 0.0
        %1410 = vmatprep.subr.mxu0 0.0
        %1411 = vmatpush1.msra.mxu0 0.0
        %1412 = vmatprep.subr.mxu0 0.0
        %1413 = vmatpush1.msra.mxu0 0.0
        %1414 = vmatprep.subr.mxu0 0.0
        %1415 = vmatpush1.msra.mxu0 0.0
        %1416 = vmatprep.subr.mxu0 0.0
        %1417 = vmatpush1.msra.mxu0 0.0
        %1418 = vmatprep.subr.mxu0 0.0
        %1419 = vmatpush1.msra.mxu0 0.0
        %1420 = vmatprep.subr.mxu0 0.0
        %1421 = vmatpush1.msra.mxu0 0.0
        %1422 = vmatprep.subr.mxu0 0.0
        %1423 = vmatpush1.msra.mxu0 0.0
        %1424 = vmatprep.subr.mxu0 0.0
        %1425 = vmatpush1.msra.mxu0 0.0
        %1426 = vmatprep.subr.mxu0 0.0
        %1427 = vmatpush1.msra.mxu0 0.0
        %1428 = vmatprep.subr.mxu0 0.0
        %1429 = vmatpush1.msra.mxu0 0.0
        %1430 = vmatprep.subr.mxu0 0.0
        %1431 = vmatpush1.msra.mxu0 0.0
        %1432 = vmatprep.subr.mxu0 0.0
        %1433 = vmatpush1.msra.mxu0 0.0
        %1434 = vmatprep.subr.mxu0 0.0
        %1435 = vmatpush1.msra.mxu0 0.0
        %1436 = vmatprep.subr.mxu0 0.0
        %1437 = vmatpush1.msra.mxu0 0.0
        %1438 = vmatprep.subr.mxu0 0.0
        %1439 = vmatpush1.msra.mxu0 0.0
        %1440 = vmatprep.subr.mxu0 0.0
        %1441 = vmatpush1.msra.mxu0 0.0
        %1442 = vmatprep.subr.mxu0 0.0
        %1443 = vmatpush1.msra.mxu0 0.0
        %1444 = vmatprep.subr.mxu0 0.0
        %1445 = vmatpush1.msra.mxu0 0.0
        %1446 = vmatprep.mubr.f32.mxu0 0.0
        %1447 = vmatmul.mubr.f32.gmra.mrb[0].mxu0 %v1380
        %v1448 = vpop.f32.mrb[0].mxu0
        %v1449 = vadd.f32 0.0, %v1448
        %v1450 = vpop.f32.mrb[0].mxu0
        %1451 = vdwg.mxu0
        %s1452 = scalar_lea.vmem %s243, 48 [#allocation5]
        %1453 = vst.msk [vmem:[%s1452] sm:$0xff] %vm262, %v1449
        %v1454 = vld [vmem:[%s1] sm:$0xf]
        %v1455 = vld [vmem:[%s1 + $0x4] sm:$0xf]
        %v1456 = vld [vmem:[%s1 + $0x8] sm:$0xf]
        %v1457 = vld [vmem:[%s1 + $0xc] sm:$0xf]
        %v1462 = vunpack.c.l.b16 %v1454
        %v1463 = vunpack.c.l.b16 %v1455
        %v1464 = vunpack.c.l.b16 %v1456
        %v1465 = vunpack.c.l.b16 %v1457
        %v1466 = vpack.c.b16 %v1463, %v1462
        %v1467 = vpack.c.b16 %v1465, %v1464
        %v1469 = vsel %vm262, %v1466, 0
        %v1472 = vsel %vm262, %v1467, 0
        %1474 = vmatprep.subr.bf16.mxu0 0
        %1475 = vmatpush1.bf16.msra.mxu0 %v932
        %1476 = vmatprep.subr.bf16.mxu0 0
        %1477 = vmatpush1.bf16.msra.mxu0 0
        %1478 = vmatprep.subr.bf16.mxu0 0
        %1479 = vmatpush1.bf16.msra.mxu0 0
        %1480 = vmatprep.subr.bf16.mxu0 0
        %1481 = vmatpush1.bf16.msra.mxu0 0
        %1482 = vmatprep.subr.bf16.mxu0 0
        %1483 = vmatpush1.bf16.msra.mxu0 0
        %1484 = vmatprep.subr.bf16.mxu0 0
        %1485 = vmatpush1.bf16.msra.mxu0 0
        %1486 = vmatprep.subr.bf16.mxu0 0
        %1487 = vmatpush1.bf16.msra.mxu0 0
        %1488 = vmatprep.subr.bf16.mxu0 0
        %1489 = vmatpush1.bf16.msra.mxu0 0
        %1490 = vmatprep.subr.bf16.mxu0 0
        %1491 = vmatpush1.bf16.msra.mxu0 0
        %1492 = vmatprep.subr.bf16.mxu0 0
        %1493 = vmatpush1.bf16.msra.mxu0 0
        %1494 = vmatprep.subr.bf16.mxu0 0
        %1495 = vmatpush1.bf16.msra.mxu0 0
        %1496 = vmatprep.subr.bf16.mxu0 0
        %1497 = vmatpush1.bf16.msra.mxu0 0
        %1498 = vmatprep.subr.bf16.mxu0 0
        %1499 = vmatpush1.bf16.msra.mxu0 0
        %1500 = vmatprep.subr.bf16.mxu0 0
        %1501 = vmatpush1.bf16.msra.mxu0 0
        %1502 = vmatprep.subr.bf16.mxu0 0
        %1503 = vmatpush1.bf16.msra.mxu0 0
        %1504 = vmatprep.subr.bf16.mxu0 0
        %1505 = vmatpush1.bf16.msra.mxu0 0
        %1506 = vmatprep.mubr.bf16.mxu0 0
        %1507 = vmatmul.mubr.bf16.gmra.mrb[0].mxu0 %v1469
        %v1508 = vpop.f32.mrb[0].mxu0
        %v1509 = vadd.f32 0.0, %v1508
        %v1510 = vpop.f32.mrb[0].mxu0
        %v1511 = vpop.f32.mrb[0].mxu0
        %v1512 = vadd.f32 0.0, %v1511
        %v1513 = vpop.f32.mrb[0].mxu0
        %1514 = vmatprep.mubr.bf16.mxu0 0
        %1515 = vmatmul.mubr.bf16.gmra.mrb[0].mxu0 %v1472
        %v1516 = vpop.f32.mrb[0].mxu0
        %v1517 = vadd.f32 0.0, %v1516
        %v1518 = vpop.f32.mrb[0].mxu0
        %v1519 = vpop.f32.mrb[0].mxu0
        %v1520 = vadd.f32 0.0, %v1519
        %v1521 = vpop.f32.mrb[0].mxu0
        %1522 = vdwg.mxu0
        %1525 = vrot.lane.b32.xlu0 %v1517, 112
        %v1526 = vpop.permute.xlu0 %1525
        %1527 = vrot.lane.b32.xlu0 %v1520, 112
        %v1528 = vpop.permute.xlu0 %1527
        %v1531 = vsub.f32 %v1509, %v1526
        %v1532 = vsub.f32 %v1512, %v1528
        %1533 = vrot.lane.b32.xlu0 %v1517, 16
        %v1534 = vpop.permute.xlu0 %1533
        %1535 = vrot.lane.b32.xlu0 %v1520, 16
        %v1536 = vpop.permute.xlu0 %1535
        %v1539 = vadd.f32 %v1509, %v1534
        %v1540 = vadd.f32 %v1512, %v1536
        %v1541 = vmul.f32 %v1531, %v1531
        %v1542 = vmul.f32 %v1532, %v1532
        %v1543 = vmul.f32 %v1539, %v1539
        %v1544 = vmul.f32 %v1540, %v1540
        %1547 = vrot.lane.b32.xlu0 %v1543, 112
        %v1548 = vpop.permute.xlu0 %1547
        %1549 = vrot.lane.b32.xlu0 %v1544, 112
        %v1550 = vpop.permute.xlu0 %1549
        %v1553 = vadd.f32 %v1541, %v1548
        %v1554 = vadd.f32 %v1542, %v1550
        %v1555 = vrsqrt.pop %v1553
        %v1556 = vmul.f32 %v1553, %v1555
        %vm1557 = vcmp.eq.f32.partialorder %v1553, inf
        %v1558 = vsel %vm1557, %v1553, %v1556
        %vm1559 = vcmp.eq.f32.partialorder %v1553, 0.0
        %v1560 = vand.u32 %v1553, 2147483648
        %v1561 = vsel %vm1559, %v1560, %v1558
        %v1562 = vrsqrt.pop %v1554
        %v1563 = vmul.f32 %v1554, %v1562
        %vm1564 = vcmp.eq.f32.partialorder %v1554, inf
        %v1565 = vsel %vm1564, %v1554, %v1563
        %vm1566 = vcmp.eq.f32.partialorder %v1554, 0.0
        %v1567 = vand.u32 %v1554, 2147483648
        %v1568 = vsel %vm1566, %v1567, %v1565
        %1569 = vmatprep.subr.mxu0 0.0
        %1570 = vmatpush1.msra.mxu0 %v1561
        %1571 = vmatprep.subr.mxu0 0.0
        %1572 = vmatpush1.msra.mxu0 %v1568
        %1573 = vmatprep.subr.mxu0 0.0
        %1574 = vmatpush1.msra.mxu0 0.0
        %1575 = vmatprep.subr.mxu0 0.0
        %1576 = vmatpush1.msra.mxu0 0.0
        %1577 = vmatprep.subr.mxu0 0.0
        %1578 = vmatpush1.msra.mxu0 0.0
        %1579 = vmatprep.subr.mxu0 0.0
        %1580 = vmatpush1.msra.mxu0 0.0
        %1581 = vmatprep.subr.mxu0 0.0
        %1582 = vmatpush1.msra.mxu0 0.0
        %1583 = vmatprep.subr.mxu0 0.0
        %1584 = vmatpush1.msra.mxu0 0.0
        %1585 = vmatprep.subr.mxu0 0.0
        %1586 = vmatpush1.msra.mxu0 0.0
        %1587 = vmatprep.subr.mxu0 0.0
        %1588 = vmatpush1.msra.mxu0 0.0
        %1589 = vmatprep.subr.mxu0 0.0
        %1590 = vmatpush1.msra.mxu0 0.0
        %1591 = vmatprep.subr.mxu0 0.0
        %1592 = vmatpush1.msra.mxu0 0.0
        %1593 = vmatprep.subr.mxu0 0.0
        %1594 = vmatpush1.msra.mxu0 0.0
        %1595 = vmatprep.subr.mxu0 0.0
        %1596 = vmatpush1.msra.mxu0 0.0
        %1597 = vmatprep.subr.mxu0 0.0
        %1598 = vmatpush1.msra.mxu0 0.0
        %1599 = vmatprep.subr.mxu0 0.0
        %1600 = vmatpush1.msra.mxu0 0.0
        %1601 = vmatprep.subr.mxu0 0.0
        %1602 = vmatpush1.msra.mxu0 0.0
        %1603 = vmatprep.subr.mxu0 0.0
        %1604 = vmatpush1.msra.mxu0 0.0
        %1605 = vmatprep.subr.mxu0 0.0
        %1606 = vmatpush1.msra.mxu0 0.0
        %1607 = vmatprep.subr.mxu0 0.0
        %1608 = vmatpush1.msra.mxu0 0.0
        %1609 = vmatprep.subr.mxu0 0.0
        %1610 = vmatpush1.msra.mxu0 0.0
        %1611 = vmatprep.subr.mxu0 0.0
        %1612 = vmatpush1.msra.mxu0 0.0
        %1613 = vmatprep.subr.mxu0 0.0
        %1614 = vmatpush1.msra.mxu0 0.0
        %1615 = vmatprep.subr.mxu0 0.0
        %1616 = vmatpush1.msra.mxu0 0.0
        %1617 = vmatprep.subr.mxu0 0.0
        %1618 = vmatpush1.msra.mxu0 0.0
        %1619 = vmatprep.subr.mxu0 0.0
        %1620 = vmatpush1.msra.mxu0 0.0
        %1621 = vmatprep.subr.mxu0 0.0
        %1622 = vmatpush1.msra.mxu0 0.0
        %1623 = vmatprep.subr.mxu0 0.0
        %1624 = vmatpush1.msra.mxu0 0.0
        %1625 = vmatprep.subr.mxu0 0.0
        %1626 = vmatpush1.msra.mxu0 0.0
        %1627 = vmatprep.subr.mxu0 0.0
        %1628 = vmatpush1.msra.mxu0 0.0
        %1629 = vmatprep.subr.mxu0 0.0
        %1630 = vmatpush1.msra.mxu0 0.0
        %1631 = vmatprep.subr.mxu0 0.0
        %1632 = vmatpush1.msra.mxu0 0.0
        %1633 = vmatprep.mubr.f32.mxu0 0.0
        %1634 = vmatmul.mubr.f32.gmra.mrb[0].mxu0 %v264
        %v1635 = vpop.f32.mrb[0].mxu0
        %v1636 = vadd.f32 0.0, %v1635
        %v1637 = vpop.f32.mrb[0].mxu0
        %1638 = vdwg.mxu0
        %v1640 = vsel %vm262, %v1636, 0
        %1642 = vmatprep.subr.mxu0 0.0
        %1643 = vmatpush1.msra.mxu0 %v260
        %1644 = vmatprep.subr.mxu0 0.0
        %1645 = vmatpush1.msra.mxu0 %v261
        %1646 = vmatprep.subr.mxu0 0.0
        %1647 = vmatpush1.msra.mxu0 0.0
        %1648 = vmatprep.subr.mxu0 0.0
        %1649 = vmatpush1.msra.mxu0 0.0
        %1650 = vmatprep.subr.mxu0 0.0
        %1651 = vmatpush1.msra.mxu0 0.0
        %1652 = vmatprep.subr.mxu0 0.0
        %1653 = vmatpush1.msra.mxu0 0.0
        %1654 = vmatprep.subr.mxu0 0.0
        %1655 = vmatpush1.msra.mxu0 0.0
        %1656 = vmatprep.subr.mxu0 0.0
        %1657 = vmatpush1.msra.mxu0 0.0
        %1658 = vmatprep.subr.mxu0 0.0
        %1659 = vmatpush1.msra.mxu0 0.0
        %1660 = vmatprep.subr.mxu0 0.0
        %1661 = vmatpush1.msra.mxu0 0.0
        %1662 = vmatprep.subr.mxu0 0.0
        %1663 = vmatpush1.msra.mxu0 0.0
        %1664 = vmatprep.subr.mxu0 0.0
        %1665 = vmatpush1.msra.mxu0 0.0
        %1666 = vmatprep.subr.mxu0 0.0
        %1667 = vmatpush1.msra.mxu0 0.0
        %1668 = vmatprep.subr.mxu0 0.0
        %1669 = vmatpush1.msra.mxu0 0.0
        %1670 = vmatprep.subr.mxu0 0.0
        %1671 = vmatpush1.msra.mxu0 0.0
        %1672 = vmatprep.subr.mxu0 0.0
        %1673 = vmatpush1.msra.mxu0 0.0
        %1674 = vmatprep.subr.mxu0 0.0
        %1675 = vmatpush1.msra.mxu0 0.0
        %1676 = vmatprep.subr.mxu0 0.0
        %1677 = vmatpush1.msra.mxu0 0.0
        %1678 = vmatprep.subr.mxu0 0.0
        %1679 = vmatpush1.msra.mxu0 0.0
        %1680 = vmatprep.subr.mxu0 0.0
        %1681 = vmatpush1.msra.mxu0 0.0
        %1682 = vmatprep.subr.mxu0 0.0
        %1683 = vmatpush1.msra.mxu0 0.0
        %1684 = vmatprep.subr.mxu0 0.0
        %1685 = vmatpush1.msra.mxu0 0.0
        %1686 = vmatprep.subr.mxu0 0.0
        %1687 = vmatpush1.msra.mxu0 0.0
        %1688 = vmatprep.subr.mxu0 0.0
        %1689 = vmatpush1.msra.mxu0 0.0
        %1690 = vmatprep.subr.mxu0 0.0
        %1691 = vmatpush1.msra.mxu0 0.0
        %1692 = vmatprep.subr.mxu0 0.0
        %1693 = vmatpush1.msra.mxu0 0.0
        %1694 = vmatprep.subr.mxu0 0.0
        %1695 = vmatpush1.msra.mxu0 0.0
        %1696 = vmatprep.subr.mxu0 0.0
        %1697 = vmatpush1.msra.mxu0 0.0
        %1698 = vmatprep.subr.mxu0 0.0
        %1699 = vmatpush1.msra.mxu0 0.0
        %1700 = vmatprep.subr.mxu0 0.0
        %1701 = vmatpush1.msra.mxu0 0.0
        %1702 = vmatprep.subr.mxu0 0.0
        %1703 = vmatpush1.msra.mxu0 0.0
        %1704 = vmatprep.subr.mxu0 0.0
        %1705 = vmatpush1.msra.mxu0 0.0
        %1706 = vmatprep.mubr.f32.mxu0 0.0
        %1707 = vmatmul.mubr.f32.gmra.mrb[0].mxu0 %v1640
        %v1708 = vpop.f32.mrb[0].mxu0
        %v1709 = vadd.f32 0.0, %v1708
        %v1710 = vpop.f32.mrb[0].mxu0
        %1711 = vdwg.mxu0
        %s1712 = scalar_lea.vmem %s243, 88 [#allocation5]
        %1713 = vst.msk [vmem:[%s1712] sm:$0xff] %vm262, %v1709
        %v1714 = vld [vmem:[%s1] sm:$0xf]
        %v1715 = vld [vmem:[%s1 + $0x4] sm:$0xf]
        %v1716 = vld [vmem:[%s1 + $0x8] sm:$0xf]
        %v1717 = vld [vmem:[%s1 + $0xc] sm:$0xf]
        %v1722 = vunpack.c.l.b16 %v1714
        %v1723 = vunpack.c.l.b16 %v1715
        %v1724 = vunpack.c.l.b16 %v1716
        %v1725 = vunpack.c.l.b16 %v1717
        %v1726 = vpack.c.b16 %v1723, %v1722
        %v1727 = vpack.c.b16 %v1725, %v1724
        %v1729 = vsel %vm262, %v1726, 0
        %v1732 = vsel %vm262, %v1727, 0
        %1734 = vmatprep.subr.bf16.mxu0 0
        %1735 = vmatpush1.bf16.msra.mxu0 %v933
        %1736 = vmatprep.subr.bf16.mxu0 0
        %1737 = vmatpush1.bf16.msra.mxu0 0
        %1738 = vmatprep.subr.bf16.mxu0 0
        %1739 = vmatpush1.bf16.msra.mxu0 0
        %1740 = vmatprep.subr.bf16.mxu0 0
        %1741 = vmatpush1.bf16.msra.mxu0 0
        %1742 = vmatprep.subr.bf16.mxu0 0
        %1743 = vmatpush1.bf16.msra.mxu0 0
        %1744 = vmatprep.subr.bf16.mxu0 0
        %1745 = vmatpush1.bf16.msra.mxu0 0
        %1746 = vmatprep.subr.bf16.mxu0 0
        %1747 = vmatpush1.bf16.msra.mxu0 0
        %1748 = vmatprep.subr.bf16.mxu0 0
        %1749 = vmatpush1.bf16.msra.mxu0 0
        %1750 = vmatprep.subr.bf16.mxu0 0
        %1751 = vmatpush1.bf16.msra.mxu0 0
        %1752 = vmatprep.subr.bf16.mxu0 0
        %1753 = vmatpush1.bf16.msra.mxu0 0
        %1754 = vmatprep.subr.bf16.mxu0 0
        %1755 = vmatpush1.bf16.msra.mxu0 0
        %1756 = vmatprep.subr.bf16.mxu0 0
        %1757 = vmatpush1.bf16.msra.mxu0 0
        %1758 = vmatprep.subr.bf16.mxu0 0
        %1759 = vmatpush1.bf16.msra.mxu0 0
        %1760 = vmatprep.subr.bf16.mxu0 0
        %1761 = vmatpush1.bf16.msra.mxu0 0
        %1762 = vmatprep.subr.bf16.mxu0 0
        %1763 = vmatpush1.bf16.msra.mxu0 0
        %1764 = vmatprep.subr.bf16.mxu0 0
        %1765 = vmatpush1.bf16.msra.mxu0 0
        %1766 = vmatprep.mubr.bf16.mxu0 0
        %1767 = vmatmul.mubr.bf16.gmra.mrb[0].mxu0 %v1729
        %v1768 = vpop.f32.mrb[0].mxu0
        %v1769 = vadd.f32 0.0, %v1768
        %v1770 = vpop.f32.mrb[0].mxu0
        %v1771 = vpop.f32.mrb[0].mxu0
        %v1772 = vadd.f32 0.0, %v1771
        %v1773 = vpop.f32.mrb[0].mxu0
        %1774 = vmatprep.mubr.bf16.mxu0 0
        %1775 = vmatmul.mubr.bf16.gmra.mrb[0].mxu0 %v1732
        %v1776 = vpop.f32.mrb[0].mxu0
        %v1777 = vadd.f32 0.0, %v1776
        %v1778 = vpop.f32.mrb[0].mxu0
        %v1779 = vpop.f32.mrb[0].mxu0
        %v1780 = vadd.f32 0.0, %v1779
        %v1781 = vpop.f32.mrb[0].mxu0
        %1782 = vdwg.mxu0
        %1785 = vrot.lane.b32.xlu0 %v1777, 112
        %v1786 = vpop.permute.xlu0 %1785
        %1787 = vrot.lane.b32.xlu0 %v1780, 112
        %v1788 = vpop.permute.xlu0 %1787
        %v1791 = vsub.f32 %v1769, %v1786
        %v1792 = vsub.f32 %v1772, %v1788
        %1793 = vrot.lane.b32.xlu0 %v1777, 16
        %v1794 = vpop.permute.xlu0 %1793
        %1795 = vrot.lane.b32.xlu0 %v1780, 16
        %v1796 = vpop.permute.xlu0 %1795
        %v1799 = vadd.f32 %v1769, %v1794
        %v1800 = vadd.f32 %v1772, %v1796
        %v1801 = vmul.f32 %v1791, %v1791
        %v1802 = vmul.f32 %v1792, %v1792
        %v1803 = vmul.f32 %v1799, %v1799
        %v1804 = vmul.f32 %v1800, %v1800
        %1807 = vrot.lane.b32.xlu0 %v1803, 112
        %v1808 = vpop.permute.xlu0 %1807
        %1809 = vrot.lane.b32.xlu0 %v1804, 112
        %v1810 = vpop.permute.xlu0 %1809
        %v1813 = vadd.f32 %v1801, %v1808
        %v1814 = vadd.f32 %v1802, %v1810
        %v1815 = vrsqrt.pop %v1813
        %v1816 = vmul.f32 %v1813, %v1815
        %vm1817 = vcmp.eq.f32.partialorder %v1813, inf
        %v1818 = vsel %vm1817, %v1813, %v1816
        %vm1819 = vcmp.eq.f32.partialorder %v1813, 0.0
        %v1820 = vand.u32 %v1813, 2147483648
        %v1821 = vsel %vm1819, %v1820, %v1818
        %v1822 = vrsqrt.pop %v1814
        %v1823 = vmul.f32 %v1814, %v1822
        %vm1824 = vcmp.eq.f32.partialorder %v1814, inf
        %v1825 = vsel %vm1824, %v1814, %v1823
        %vm1826 = vcmp.eq.f32.partialorder %v1814, 0.0
        %v1827 = vand.u32 %v1814, 2147483648
        %v1828 = vsel %vm1826, %v1827, %v1825
        %1829 = vmatprep.subr.mxu0 0.0
        %1830 = vmatpush1.msra.mxu0 %v1821
        %1831 = vmatprep.subr.mxu0 0.0
        %1832 = vmatpush1.msra.mxu0 %v1828
        %1833 = vmatprep.subr.mxu0 0.0
        %1834 = vmatpush1.msra.mxu0 0.0
        %1835 = vmatprep.subr.mxu0 0.0
        %1836 = vmatpush1.msra.mxu0 0.0
        %1837 = vmatprep.subr.mxu0 0.0
        %1838 = vmatpush1.msra.mxu0 0.0
        %1839 = vmatprep.subr.mxu0 0.0
        %1840 = vmatpush1.msra.mxu0 0.0
        %1841 = vmatprep.subr.mxu0 0.0
        %1842 = vmatpush1.msra.mxu0 0.0
        %1843 = vmatprep.subr.mxu0 0.0
        %1844 = vmatpush1.msra.mxu0 0.0
        %1845 = vmatprep.subr.mxu0 0.0
        %1846 = vmatpush1.msra.mxu0 0.0
        %1847 = vmatprep.subr.mxu0 0.0
        %1848 = vmatpush1.msra.mxu0 0.0
        %1849 = vmatprep.subr.mxu0 0.0
        %1850 = vmatpush1.msra.mxu0 0.0
        %1851 = vmatprep.subr.mxu0 0.0
        %1852 = vmatpush1.msra.mxu0 0.0
        %1853 = vmatprep.subr.mxu0 0.0
        %1854 = vmatpush1.msra.mxu0 0.0
        %1855 = vmatprep.subr.mxu0 0.0
        %1856 = vmatpush1.msra.mxu0 0.0
        %1857 = vmatprep.subr.mxu0 0.0
        %1858 = vmatpush1.msra.mxu0 0.0
        %1859 = vmatprep.subr.mxu0 0.0
        %1860 = vmatpush1.msra.mxu0 0.0
        %1861 = vmatprep.subr.mxu0 0.0
        %1862 = vmatpush1.msra.mxu0 0.0
        %1863 = vmatprep.subr.mxu0 0.0
        %1864 = vmatpush1.msra.mxu0 0.0
        %1865 = vmatprep.subr.mxu0 0.0
        %1866 = vmatpush1.msra.mxu0 0.0
        %1867 = vmatprep.subr.mxu0 0.0
        %1868 = vmatpush1.msra.mxu0 0.0
        %1869 = vmatprep.subr.mxu0 0.0
        %1870 = vmatpush1.msra.mxu0 0.0
        %1871 = vmatprep.subr.mxu0 0.0
        %1872 = vmatpush1.msra.mxu0 0.0
        %1873 = vmatprep.subr.mxu0 0.0
        %1874 = vmatpush1.msra.mxu0 0.0
        %1875 = vmatprep.subr.mxu0 0.0
        %1876 = vmatpush1.msra.mxu0 0.0
        %1877 = vmatprep.subr.mxu0 0.0
        %1878 = vmatpush1.msra.mxu0 0.0
        %1879 = vmatprep.subr.mxu0 0.0
        %1880 = vmatpush1.msra.mxu0 0.0
        %1881 = vmatprep.subr.mxu0 0.0
        %1882 = vmatpush1.msra.mxu0 0.0
        %1883 = vmatprep.subr.mxu0 0.0
        %1884 = vmatpush1.msra.mxu0 0.0
        %1885 = vmatprep.subr.mxu0 0.0
        %1886 = vmatpush1.msra.mxu0 0.0
        %1887 = vmatprep.subr.mxu0 0.0
        %1888 = vmatpush1.msra.mxu0 0.0
        %1889 = vmatprep.subr.mxu0 0.0
        %1890 = vmatpush1.msra.mxu0 0.0
        %1891 = vmatprep.subr.mxu0 0.0
        %1892 = vmatpush1.msra.mxu0 0.0
        %1893 = vmatprep.mubr.f32.mxu0 0.0
        %1894 = vmatmul.mubr.f32.gmra.mrb[0].mxu0 %v264
        %v1895 = vpop.f32.mrb[0].mxu0
        %v1896 = vadd.f32 0.0, %v1895
        %v1897 = vpop.f32.mrb[0].mxu0
        %1898 = vdwg.mxu0
        %v1900 = vsel %vm262, %v1896, 0
        %1902 = vmatprep.subr.mxu0 0.0
        %1903 = vmatpush1.msra.mxu0 %v260
        %1904 = vmatprep.subr.mxu0 0.0
        %1905 = vmatpush1.msra.mxu0 %v261
        %1906 = vmatprep.subr.mxu0 0.0
        %1907 = vmatpush1.msra.mxu0 0.0
        %1908 = vmatprep.subr.mxu0 0.0
        %1909 = vmatpush1.msra.mxu0 0.0
        %1910 = vmatprep.subr.mxu0 0.0
        %1911 = vmatpush1.msra.mxu0 0.0
        %1912 = vmatprep.subr.mxu0 0.0
        %1913 = vmatpush1.msra.mxu0 0.0
        %1914 = vmatprep.subr.mxu0 0.0
        %1915 = vmatpush1.msra.mxu0 0.0
        %1916 = vmatprep.subr.mxu0 0.0
        %1917 = vmatpush1.msra.mxu0 0.0
        %1918 = vmatprep.subr.mxu0 0.0
        %1919 = vmatpush1.msra.mxu0 0.0
        %1920 = vmatprep.subr.mxu0 0.0
        %1921 = vmatpush1.msra.mxu0 0.0
        %1922 = vmatprep.subr.mxu0 0.0
        %1923 = vmatpush1.msra.mxu0 0.0
        %1924 = vmatprep.subr.mxu0 0.0
        %1925 = vmatpush1.msra.mxu0 0.0
        %1926 = vmatprep.subr.mxu0 0.0
        %1927 = vmatpush1.msra.mxu0 0.0
        %1928 = vmatprep.subr.mxu0 0.0
        %1929 = vmatpush1.msra.mxu0 0.0
        %1930 = vmatprep.subr.mxu0 0.0
        %1931 = vmatpush1.msra.mxu0 0.0
        %1932 = vmatprep.subr.mxu0 0.0
        %1933 = vmatpush1.msra.mxu0 0.0
        %1934 = vmatprep.subr.mxu0 0.0
        %1935 = vmatpush1.msra.mxu0 0.0
        %1936 = vmatprep.subr.mxu0 0.0
        %1937 = vmatpush1.msra.mxu0 0.0
        %1938 = vmatprep.subr.mxu0 0.0
        %1939 = vmatpush1.msra.mxu0 0.0
        %1940 = vmatprep.subr.mxu0 0.0
        %1941 = vmatpush1.msra.mxu0 0.0
        %1942 = vmatprep.subr.mxu0 0.0
        %1943 = vmatpush1.msra.mxu0 0.0
        %1944 = vmatprep.subr.mxu0 0.0
        %1945 = vmatpush1.msra.mxu0 0.0
        %1946 = vmatprep.subr.mxu0 0.0
        %1947 = vmatpush1.msra.mxu0 0.0
        %1948 = vmatprep.subr.mxu0 0.0
        %1949 = vmatpush1.msra.mxu0 0.0
        %1950 = vmatprep.subr.mxu0 0.0
        %1951 = vmatpush1.msra.mxu0 0.0
        %1952 = vmatprep.subr.mxu0 0.0
        %1953 = vmatpush1.msra.mxu0 0.0
        %1954 = vmatprep.subr.mxu0 0.0
        %1955 = vmatpush1.msra.mxu0 0.0
        %1956 = vmatprep.subr.mxu0 0.0
        %1957 = vmatpush1.msra.mxu0 0.0
        %1958 = vmatprep.subr.mxu0 0.0
        %1959 = vmatpush1.msra.mxu0 0.0
        %1960 = vmatprep.subr.mxu0 0.0
        %1961 = vmatpush1.msra.mxu0 0.0
        %1962 = vmatprep.subr.mxu0 0.0
        %1963 = vmatpush1.msra.mxu0 0.0
        %1964 = vmatprep.subr.mxu0 0.0
        %1965 = vmatpush1.msra.mxu0 0.0
        %1966 = vmatprep.mubr.f32.mxu0 0.0
        %1967 = vmatmul.mubr.f32.gmra.mrb[0].mxu0 %v1900
        %v1968 = vpop.f32.mrb[0].mxu0
        %v1969 = vadd.f32 0.0, %v1968
        %v1970 = vpop.f32.mrb[0].mxu0
        %1971 = vdwg.mxu0
        %s1972 = scalar_lea.vmem %s243, 128 [#allocation5]
        %1973 = vst.msk [vmem:[%s1972] sm:$0xff] %vm262, %v1969
        %s1974 = scalar_lea.vmem %s2, 8
        %v1975 = vld [vmem:[%s1974] sm:$0xf]
        %v1976 = vld [vmem:[%s1974 + $0x4] sm:$0xf]
        %v1979 = vunpack.c.l.b16 %v1975
        %v1980 = vunpack.c.l.b16 %v1976
        %v1981 = vpack.c.b16 %v1980, %v1979
        %1983 = vmatprep.subr.bf16.mxu0 0
        %1984 = vmatpush1.bf16.msra.mxu0 %v1981
        %1985 = vmatprep.subr.bf16.mxu0 0
        %1986 = vmatpush1.bf16.msra.mxu0 0
        %1987 = vmatprep.subr.bf16.mxu0 0
        %1988 = vmatpush1.bf16.msra.mxu0 0
        %1989 = vmatprep.subr.bf16.mxu0 0
        %1990 = vmatpush1.bf16.msra.mxu0 0
        %1991 = vmatprep.subr.bf16.mxu0 0
        %1992 = vmatpush1.bf16.msra.mxu0 0
        %1993 = vmatprep.subr.bf16.mxu0 0
        %1994 = vmatpush1.bf16.msra.mxu0 0
        %1995 = vmatprep.subr.bf16.mxu0 0
        %1996 = vmatpush1.bf16.msra.mxu0 0
        %1997 = vmatprep.subr.bf16.mxu0 0
        %1998 = vmatpush1.bf16.msra.mxu0 0
        %1999 = vmatprep.subr.bf16.mxu0 0
        %2000 = vmatpush1.bf16.msra.mxu0 0
        %2001 = vmatprep.subr.bf16.mxu0 0
        %2002 = vmatpush1.bf16.msra.mxu0 0
        %2003 = vmatprep.subr.bf16.mxu0 0
        %2004 = vmatpush1.bf16.msra.mxu0 0
        %2005 = vmatprep.subr.bf16.mxu0 0
        %2006 = vmatpush1.bf16.msra.mxu0 0
        %2007 = vmatprep.subr.bf16.mxu0 0
        %2008 = vmatpush1.bf16.msra.mxu0 0
        %2009 = vmatprep.subr.bf16.mxu0 0
        %2010 = vmatpush1.bf16.msra.mxu0 0
        %2011 = vmatprep.subr.bf16.mxu0 0
        %2012 = vmatpush1.bf16.msra.mxu0 0
        %2013 = vmatprep.subr.bf16.mxu0 0
        %2014 = vmatpush1.bf16.msra.mxu0 0
        %2015 = vmatprep.mubr.bf16.mxu0 0
        %2016 = vmatmul.mubr.bf16.gmra.mrb[0].mxu0 %v854
        %v2017 = vpop.f32.mrb[0].mxu0
        %v2018 = vadd.f32 0.0, %v2017
        %v2019 = vpop.f32.mrb[0].mxu0
        %v2020 = vpop.f32.mrb[0].mxu0
        %v2021 = vadd.f32 0.0, %v2020
        %v2022 = vpop.f32.mrb[0].mxu0
        %2023 = vmatprep.mubr.bf16.mxu0 0
        %2024 = vmatmul.mubr.bf16.gmra.mrb[0].mxu0 %v857
        %v2025 = vpop.f32.mrb[0].mxu0
        %v2026 = vadd.f32 0.0, %v2025
        %v2027 = vpop.f32.mrb[0].mxu0
        %v2028 = vpop.f32.mrb[0].mxu0
        %v2029 = vadd.f32 0.0, %v2028
        %v2030 = vpop.f32.mrb[0].mxu0
        %2031 = vmatprep.mubr.bf16.mxu0 0
        %2032 = vmatmul.mubr.bf16.gmra.mrb[0].mxu0 %v860
        %v2033 = vpop.f32.mrb[0].mxu0
        %v2034 = vadd.f32 0.0, %v2033
        %v2035 = vpop.f32.mrb[0].mxu0
        %v2036 = vpop.f32.mrb[0].mxu0
        %v2037 = vadd.f32 0.0, %v2036
        %v2038 = vpop.f32.mrb[0].mxu0
        %2039 = vmatprep.mubr.bf16.mxu0 0
        %2040 = vmatmul.mubr.bf16.gmra.mrb[0].mxu0 %v863
        %v2041 = vpop.f32.mrb[0].mxu0
        %v2042 = vadd.f32 0.0, %v2041
        %v2043 = vpop.f32.mrb[0].mxu0
        %v2044 = vpop.f32.mrb[0].mxu0
        %v2045 = vadd.f32 0.0, %v2044
        %v2046 = vpop.f32.mrb[0].mxu0
        %2047 = vdwg.mxu0
        %v2048 = vpack.c.bf16 %v2021, %v2018
        %v2049 = vpack.c.bf16 %v2029, %v2026
        %v2050 = vpack.c.bf16 %v2037, %v2034
        %v2051 = vpack.c.bf16 %v2045, %v2042
        %s2052 = scalar_lea.vmem %s1, 16
        %v2053 = vld [vmem:[%s2052] sm:$0xf]
        %v2054 = vld [vmem:[%s2052 + $0x4] sm:$0xf]
        %v2055 = vld [vmem:[%s2052 + $0x8] sm:$0xf]
        %v2056 = vld [vmem:[%s2052 + $0xc] sm:$0xf]
        %v2061 = vunpack.c.l.b16 %v2053
        %v2062 = vunpack.c.l.b16 %v2054
        %v2063 = vunpack.c.l.b16 %v2055
        %v2064 = vunpack.c.l.b16 %v2056
        %v2065 = vpack.c.b16 %v2062, %v2061
        %v2066 = vpack.c.b16 %v2064, %v2063
        %v2068 = vsel %vm262, %v2065, 0
        %v2071 = vsel %vm262, %v2066, 0
        %2073 = vmatprep.subr.bf16.mxu0 0
        %2074 = vmatpush1.bf16.msra.mxu0 %v2048
        %2075 = vmatprep.subr.bf16.mxu0 0
        %2076 = vmatpush1.bf16.msra.mxu0 0
        %2077 = vmatprep.subr.bf16.mxu0 0
        %2078 = vmatpush1.bf16.msra.mxu0 0
        %2079 = vmatprep.subr.bf16.mxu0 0
        %2080 = vmatpush1.bf16.msra.mxu0 0
        %2081 = vmatprep.subr.bf16.mxu0 0
        %2082 = vmatpush1.bf16.msra.mxu0 0
        %2083 = vmatprep.subr.bf16.mxu0 0
        %2084 = vmatpush1.bf16.msra.mxu0 0
        %2085 = vmatprep.subr.bf16.mxu0 0
        %2086 = vmatpush1.bf16.msra.mxu0 0
        %2087 = vmatprep.subr.bf16.mxu0 0
        %2088 = vmatpush1.bf16.msra.mxu0 0
        %2089 = vmatprep.subr.bf16.mxu0 0
        %2090 = vmatpush1.bf16.msra.mxu0 0
        %2091 = vmatprep.subr.bf16.mxu0 0
        %2092 = vmatpush1.bf16.msra.mxu0 0
        %2093 = vmatprep.subr.bf16.mxu0 0
        %2094 = vmatpush1.bf16.msra.mxu0 0
        %2095 = vmatprep.subr.bf16.mxu0 0
        %2096 = vmatpush1.bf16.msra.mxu0 0
        %2097 = vmatprep.subr.bf16.mxu0 0
        %2098 = vmatpush1.bf16.msra.mxu0 0
        %2099 = vmatprep.subr.bf16.mxu0 0
        %2100 = vmatpush1.bf16.msra.mxu0 0
        %2101 = vmatprep.subr.bf16.mxu0 0
        %2102 = vmatpush1.bf16.msra.mxu0 0
        %2103 = vmatprep.subr.bf16.mxu0 0
        %2104 = vmatpush1.bf16.msra.mxu0 0
        %2105 = vmatprep.mubr.bf16.mxu0 0
        %2106 = vmatmul.mubr.bf16.gmra.mrb[0].mxu0 %v2068
        %v2107 = vpop.f32.mrb[0].mxu0
        %v2108 = vadd.f32 0.0, %v2107
        %v2109 = vpop.f32.mrb[0].mxu0
        %v2110 = vpop.f32.mrb[0].mxu0
        %v2111 = vadd.f32 0.0, %v2110
        %v2112 = vpop.f32.mrb[0].mxu0
        %2113 = vmatprep.mubr.bf16.mxu0 0
        %2114 = vmatmul.mubr.bf16.gmra.mrb[0].mxu0 %v2071
        %v2115 = vpop.f32.mrb[0].mxu0
        %v2116 = vadd.f32 0.0, %v2115
        %v2117 = vpop.f32.mrb[0].mxu0
        %v2118 = vpop.f32.mrb[0].mxu0
        %v2119 = vadd.f32 0.0, %v2118
        %v2120 = vpop.f32.mrb[0].mxu0
        %2121 = vdwg.mxu0
        %2124 = vrot.lane.b32.xlu0 %v2116, 112
        %v2125 = vpop.permute.xlu0 %2124
        %2126 = vrot.lane.b32.xlu0 %v2119, 112
        %v2127 = vpop.permute.xlu0 %2126
        %v2130 = vsub.f32 %v2108, %v2125
        %v2131 = vsub.f32 %v2111, %v2127
        %2132 = vrot.lane.b32.xlu0 %v2116, 16
        %v2133 = vpop.permute.xlu0 %2132
        %2134 = vrot.lane.b32.xlu0 %v2119, 16
        %v2135 = vpop.permute.xlu0 %2134
        %v2138 = vadd.f32 %v2108, %v2133
        %v2139 = vadd.f32 %v2111, %v2135
        %v2140 = vmul.f32 %v2130, %v2130
        %v2141 = vmul.f32 %v2131, %v2131
        %v2142 = vmul.f32 %v2138, %v2138
        %v2143 = vmul.f32 %v2139, %v2139
        %2146 = vrot.lane.b32.xlu0 %v2142, 112
        %v2147 = vpop.permute.xlu0 %2146
        %2148 = vrot.lane.b32.xlu0 %v2143, 112
        %v2149 = vpop.permute.xlu0 %2148
        %v2152 = vadd.f32 %v2140, %v2147
        %v2153 = vadd.f32 %v2141, %v2149
        %v2154 = vrsqrt.pop %v2152
        %v2155 = vmul.f32 %v2152, %v2154
        %vm2156 = vcmp.eq.f32.partialorder %v2152, inf
        %v2157 = vsel %vm2156, %v2152, %v2155
        %vm2158 = vcmp.eq.f32.partialorder %v2152, 0.0
        %v2159 = vand.u32 %v2152, 2147483648
        %v2160 = vsel %vm2158, %v2159, %v2157
        %v2161 = vrsqrt.pop %v2153
        %v2162 = vmul.f32 %v2153, %v2161
        %vm2163 = vcmp.eq.f32.partialorder %v2153, inf
        %v2164 = vsel %vm2163, %v2153, %v2162
        %vm2165 = vcmp.eq.f32.partialorder %v2153, 0.0
        %v2166 = vand.u32 %v2153, 2147483648
        %v2167 = vsel %vm2165, %v2166, %v2164
        %2168 = vmatprep.subr.mxu0 0.0
        %2169 = vmatpush1.msra.mxu0 %v2160
        %2170 = vmatprep.subr.mxu0 0.0
        %2171 = vmatpush1.msra.mxu0 %v2167
        %2172 = vmatprep.subr.mxu0 0.0
        %2173 = vmatpush1.msra.mxu0 0.0
        %2174 = vmatprep.subr.mxu0 0.0
        %2175 = vmatpush1.msra.mxu0 0.0
        %2176 = vmatprep.subr.mxu0 0.0
        %2177 = vmatpush1.msra.mxu0 0.0
        %2178 = vmatprep.subr.mxu0 0.0
        %2179 = vmatpush1.msra.mxu0 0.0
        %2180 = vmatprep.subr.mxu0 0.0
        %2181 = vmatpush1.msra.mxu0 0.0
        %2182 = vmatprep.subr.mxu0 0.0
        %2183 = vmatpush1.msra.mxu0 0.0
        %2184 = vmatprep.subr.mxu0 0.0
        %2185 = vmatpush1.msra.mxu0 0.0
        %2186 = vmatprep.subr.mxu0 0.0
        %2187 = vmatpush1.msra.mxu0 0.0
        %2188 = vmatprep.subr.mxu0 0.0
        %2189 = vmatpush1.msra.mxu0 0.0
        %2190 = vmatprep.subr.mxu0 0.0
        %2191 = vmatpush1.msra.mxu0 0.0
        %2192 = vmatprep.subr.mxu0 0.0
        %2193 = vmatpush1.msra.mxu0 0.0
        %2194 = vmatprep.subr.mxu0 0.0
        %2195 = vmatpush1.msra.mxu0 0.0
        %2196 = vmatprep.subr.mxu0 0.0
        %2197 = vmatpush1.msra.mxu0 0.0
        %2198 = vmatprep.subr.mxu0 0.0
        %2199 = vmatpush1.msra.mxu0 0.0
        %2200 = vmatprep.subr.mxu0 0.0
        %2201 = vmatpush1.msra.mxu0 0.0
        %2202 = vmatprep.subr.mxu0 0.0
        %2203 = vmatpush1.msra.mxu0 0.0
        %2204 = vmatprep.subr.mxu0 0.0
        %2205 = vmatpush1.msra.mxu0 0.0
        %2206 = vmatprep.subr.mxu0 0.0
        %2207 = vmatpush1.msra.mxu0 0.0
        %2208 = vmatprep.subr.mxu0 0.0
        %2209 = vmatpush1.msra.mxu0 0.0
        %2210 = vmatprep.subr.mxu0 0.0
        %2211 = vmatpush1.msra.mxu0 0.0
        %2212 = vmatprep.subr.mxu0 0.0
        %2213 = vmatpush1.msra.mxu0 0.0
        %2214 = vmatprep.subr.mxu0 0.0
        %2215 = vmatpush1.msra.mxu0 0.0
        %2216 = vmatprep.subr.mxu0 0.0
        %2217 = vmatpush1.msra.mxu0 0.0
        %2218 = vmatprep.subr.mxu0 0.0
        %2219 = vmatpush1.msra.mxu0 0.0
        %2220 = vmatprep.subr.mxu0 0.0
        %2221 = vmatpush1.msra.mxu0 0.0
        %2222 = vmatprep.subr.mxu0 0.0
        %2223 = vmatpush1.msra.mxu0 0.0
        %2224 = vmatprep.subr.mxu0 0.0
        %2225 = vmatpush1.msra.mxu0 0.0
        %2226 = vmatprep.subr.mxu0 0.0
        %2227 = vmatpush1.msra.mxu0 0.0
        %2228 = vmatprep.subr.mxu0 0.0
        %2229 = vmatpush1.msra.mxu0 0.0
        %2230 = vmatprep.subr.mxu0 0.0
        %2231 = vmatpush1.msra.mxu0 0.0
        %2232 = vmatprep.mubr.f32.mxu0 0.0
        %2233 = vmatmul.mubr.f32.gmra.mrb[0].mxu0 %v264
        %v2234 = vpop.f32.mrb[0].mxu0
        %v2235 = vadd.f32 0.0, %v2234
        %v2236 = vpop.f32.mrb[0].mxu0
        %2237 = vdwg.mxu0
        %v2239 = vsel %vm262, %v2235, 0
        %2241 = vmatprep.subr.mxu0 0.0
        %2242 = vmatpush1.msra.mxu0 %v260
        %2243 = vmatprep.subr.mxu0 0.0
        %2244 = vmatpush1.msra.mxu0 %v261
        %2245 = vmatprep.subr.mxu0 0.0
        %2246 = vmatpush1.msra.mxu0 0.0
        %2247 = vmatprep.subr.mxu0 0.0
        %2248 = vmatpush1.msra.mxu0 0.0
        %2249 = vmatprep.subr.mxu0 0.0
        %2250 = vmatpush1.msra.mxu0 0.0
        %2251 = vmatprep.subr.mxu0 0.0
        %2252 = vmatpush1.msra.mxu0 0.0
        %2253 = vmatprep.subr.mxu0 0.0
        %2254 = vmatpush1.msra.mxu0 0.0
        %2255 = vmatprep.subr.mxu0 0.0
        %2256 = vmatpush1.msra.mxu0 0.0
        %2257 = vmatprep.subr.mxu0 0.0
        %2258 = vmatpush1.msra.mxu0 0.0
        %2259 = vmatprep.subr.mxu0 0.0
        %2260 = vmatpush1.msra.mxu0 0.0
        %2261 = vmatprep.subr.mxu0 0.0
        %2262 = vmatpush1.msra.mxu0 0.0
        %2263 = vmatprep.subr.mxu0 0.0
        %2264 = vmatpush1.msra.mxu0 0.0
        %2265 = vmatprep.subr.mxu0 0.0
        %2266 = vmatpush1.msra.mxu0 0.0
        %2267 = vmatprep.subr.mxu0 0.0
        %2268 = vmatpush1.msra.mxu0 0.0
        %2269 = vmatprep.subr.mxu0 0.0
        %2270 = vmatpush1.msra.mxu0 0.0
        %2271 = vmatprep.subr.mxu0 0.0
        %2272 = vmatpush1.msra.mxu0 0.0
        %2273 = vmatprep.subr.mxu0 0.0
        %2274 = vmatpush1.msra.mxu0 0.0
        %2275 = vmatprep.subr.mxu0 0.0
        %2276 = vmatpush1.msra.mxu0 0.0
        %2277 = vmatprep.subr.mxu0 0.0
        %2278 = vmatpush1.msra.mxu0 0.0
        %2279 = vmatprep.subr.mxu0 0.0
        %2280 = vmatpush1.msra.mxu0 0.0
        %2281 = vmatprep.subr.mxu0 0.0
        %2282 = vmatpush1.msra.mxu0 0.0
        %2283 = vmatprep.subr.mxu0 0.0
        %2284 = vmatpush1.msra.mxu0 0.0
        %2285 = vmatprep.subr.mxu0 0.0
        %2286 = vmatpush1.msra.mxu0 0.0
        %2287 = vmatprep.subr.mxu0 0.0
        %2288 = vmatpush1.msra.mxu0 0.0
        %2289 = vmatprep.subr.mxu0 0.0
        %2290 = vmatpush1.msra.mxu0 0.0
        %2291 = vmatprep.subr.mxu0 0.0
        %2292 = vmatpush1.msra.mxu0 0.0
        %2293 = vmatprep.subr.mxu0 0.0
        %2294 = vmatpush1.msra.mxu0 0.0
        %2295 = vmatprep.subr.mxu0 0.0
        %2296 = vmatpush1.msra.mxu0 0.0
        %2297 = vmatprep.subr.mxu0 0.0
        %2298 = vmatpush1.msra.mxu0 0.0
        %2299 = vmatprep.subr.mxu0 0.0
        %2300 = vmatpush1.msra.mxu0 0.0
        %2301 = vmatprep.subr.mxu0 0.0
        %2302 = vmatpush1.msra.mxu0 0.0
        %2303 = vmatprep.subr.mxu0 0.0
        %2304 = vmatpush1.msra.mxu0 0.0
        %2305 = vmatprep.mubr.f32.mxu0 0.0
        %2306 = vmatmul.mubr.f32.gmra.mrb[0].mxu0 %v2239
        %v2307 = vpop.f32.mrb[0].mxu0
        %v2308 = vadd.f32 0.0, %v2307
        %v2309 = vpop.f32.mrb[0].mxu0
        %2310 = vdwg.mxu0
        %s2311 = scalar_lea.vmem %s243, 16 [#allocation5]
        %2312 = vst.msk [vmem:[%s2311] sm:$0xff] %vm262, %v2308
        %v2313 = vld [vmem:[%s2052] sm:$0xf]
        %v2314 = vld [vmem:[%s2052 + $0x4] sm:$0xf]
        %v2315 = vld [vmem:[%s2052 + $0x8] sm:$0xf]
        %v2316 = vld [vmem:[%s2052 + $0xc] sm:$0xf]
        %v2321 = vunpack.c.l.b16 %v2313
        %v2322 = vunpack.c.l.b16 %v2314
        %v2323 = vunpack.c.l.b16 %v2315
        %v2324 = vunpack.c.l.b16 %v2316
        %v2325 = vpack.c.b16 %v2322, %v2321
        %v2326 = vpack.c.b16 %v2324, %v2323
        %v2328 = vsel %vm262, %v2325, 0
        %v2331 = vsel %vm262, %v2326, 0
        %2333 = vmatprep.subr.bf16.mxu0 0
        %2334 = vmatpush1.bf16.msra.mxu0 %v2049
        %2335 = vmatprep.subr.bf16.mxu0 0
        %2336 = vmatpush1.bf16.msra.mxu0 0
        %2337 = vmatprep.subr.bf16.mxu0 0
        %2338 = vmatpush1.bf16.msra.mxu0 0
        %2339 = vmatprep.subr.bf16.mxu0 0
        %2340 = vmatpush1.bf16.msra.mxu0 0
        %2341 = vmatprep.subr.bf16.mxu0 0
        %2342 = vmatpush1.bf16.msra.mxu0 0
        %2343 = vmatprep.subr.bf16.mxu0 0
        %2344 = vmatpush1.bf16.msra.mxu0 0
        %2345 = vmatprep.subr.bf16.mxu0 0
        %2346 = vmatpush1.bf16.msra.mxu0 0
        %2347 = vmatprep.subr.bf16.mxu0 0
        %2348 = vmatpush1.bf16.msra.mxu0 0
        %2349 = vmatprep.subr.bf16.mxu0 0
        %2350 = vmatpush1.bf16.msra.mxu0 0
        %2351 = vmatprep.subr.bf16.mxu0 0
        %2352 = vmatpush1.bf16.msra.mxu0 0
        %2353 = vmatprep.subr.bf16.mxu0 0
        %2354 = vmatpush1.bf16.msra.mxu0 0
        %2355 = vmatprep.subr.bf16.mxu0 0
        %2356 = vmatpush1.bf16.msra.mxu0 0
        %2357 = vmatprep.subr.bf16.mxu0 0
        %2358 = vmatpush1.bf16.msra.mxu0 0
        %2359 = vmatprep.subr.bf16.mxu0 0
        %2360 = vmatpush1.bf16.msra.mxu0 0
        %2361 = vmatprep.subr.bf16.mxu0 0
        %2362 = vmatpush1.bf16.msra.mxu0 0
        %2363 = vmatprep.subr.bf16.mxu0 0
        %2364 = vmatpush1.bf16.msra.mxu0 0
        %2365 = vmatprep.mubr.bf16.mxu0 0
        %2366 = vmatmul.mubr.bf16.gmra.mrb[0].mxu0 %v2328
        %v2367 = vpop.f32.mrb[0].mxu0
        %v2368 = vadd.f32 0.0, %v2367
        %v2369 = vpop.f32.mrb[0].mxu0
        %v2370 = vpop.f32.mrb[0].mxu0
        %v2371 = vadd.f32 0.0, %v2370
        %v2372 = vpop.f32.mrb[0].mxu0
        %2373 = vmatprep.mubr.bf16.mxu0 0
        %2374 = vmatmul.mubr.bf16.gmra.mrb[0].mxu0 %v2331
        %v2375 = vpop.f32.mrb[0].mxu0
        %v2376 = vadd.f32 0.0, %v2375
        %v2377 = vpop.f32.mrb[0].mxu0
        %v2378 = vpop.f32.mrb[0].mxu0
        %v2379 = vadd.f32 0.0, %v2378
        %v2380 = vpop.f32.mrb[0].mxu0
        %2381 = vdwg.mxu0
        %2384 = vrot.lane.b32.xlu0 %v2376, 112
        %v2385 = vpop.permute.xlu0 %2384
        %2386 = vrot.lane.b32.xlu0 %v2379, 112
        %v2387 = vpop.permute.xlu0 %2386
        %v2390 = vsub.f32 %v2368, %v2385
        %v2391 = vsub.f32 %v2371, %v2387
        %2392 = vrot.lane.b32.xlu0 %v2376, 16
        %v2393 = vpop.permute.xlu0 %2392
        %2394 = vrot.lane.b32.xlu0 %v2379, 16
        %v2395 = vpop.permute.xlu0 %2394
        %v2398 = vadd.f32 %v2368, %v2393
        %v2399 = vadd.f32 %v2371, %v2395
        %v2400 = vmul.f32 %v2390, %v2390
        %v2401 = vmul.f32 %v2391, %v2391
        %v2402 = vmul.f32 %v2398, %v2398
        %v2403 = vmul.f32 %v2399, %v2399
        %2406 = vrot.lane.b32.xlu0 %v2402, 112
        %v2407 = vpop.permute.xlu0 %2406
        %2408 = vrot.lane.b32.xlu0 %v2403, 112
        %v2409 = vpop.permute.xlu0 %2408
        %v2412 = vadd.f32 %v2400, %v2407
        %v2413 = vadd.f32 %v2401, %v2409
        %v2414 = vrsqrt.pop %v2412
        %v2415 = vmul.f32 %v2412, %v2414
        %vm2416 = vcmp.eq.f32.partialorder %v2412, inf
        %v2417 = vsel %vm2416, %v2412, %v2415
        %vm2418 = vcmp.eq.f32.partialorder %v2412, 0.0
        %v2419 = vand.u32 %v2412, 2147483648
        %v2420 = vsel %vm2418, %v2419, %v2417
        %v2421 = vrsqrt.pop %v2413
        %v2422 = vmul.f32 %v2413, %v2421
        %vm2423 = vcmp.eq.f32.partialorder %v2413, inf
        %v2424 = vsel %vm2423, %v2413, %v2422
        %vm2425 = vcmp.eq.f32.partialorder %v2413, 0.0
        %v2426 = vand.u32 %v2413, 2147483648
        %v2427 = vsel %vm2425, %v2426, %v2424
        %2428 = vmatprep.subr.mxu0 0.0
        %2429 = vmatpush1.msra.mxu0 %v2420
        %2430 = vmatprep.subr.mxu0 0.0
        %2431 = vmatpush1.msra.mxu0 %v2427
        %2432 = vmatprep.subr.mxu0 0.0
        %2433 = vmatpush1.msra.mxu0 0.0
        %2434 = vmatprep.subr.mxu0 0.0
        %2435 = vmatpush1.msra.mxu0 0.0
        %2436 = vmatprep.subr.mxu0 0.0
        %2437 = vmatpush1.msra.mxu0 0.0
        %2438 = vmatprep.subr.mxu0 0.0
        %2439 = vmatpush1.msra.mxu0 0.0
        %2440 = vmatprep.subr.mxu0 0.0
        %2441 = vmatpush1.msra.mxu0 0.0
        %2442 = vmatprep.subr.mxu0 0.0
        %2443 = vmatpush1.msra.mxu0 0.0
        %2444 = vmatprep.subr.mxu0 0.0
        %2445 = vmatpush1.msra.mxu0 0.0
        %2446 = vmatprep.subr.mxu0 0.0
        %2447 = vmatpush1.msra.mxu0 0.0
        %2448 = vmatprep.subr.mxu0 0.0
        %2449 = vmatpush1.msra.mxu0 0.0
        %2450 = vmatprep.subr.mxu0 0.0
        %2451 = vmatpush1.msra.mxu0 0.0
        %2452 = vmatprep.subr.mxu0 0.0
        %2453 = vmatpush1.msra.mxu0 0.0
        %2454 = vmatprep.subr.mxu0 0.0
        %2455 = vmatpush1.msra.mxu0 0.0
        %2456 = vmatprep.subr.mxu0 0.0
        %2457 = vmatpush1.msra.mxu0 0.0
        %2458 = vmatprep.subr.mxu0 0.0
        %2459 = vmatpush1.msra.mxu0 0.0
        %2460 = vmatprep.subr.mxu0 0.0
        %2461 = vmatpush1.msra.mxu0 0.0
        %2462 = vmatprep.subr.mxu0 0.0
        %2463 = vmatpush1.msra.mxu0 0.0
        %2464 = vmatprep.subr.mxu0 0.0
        %2465 = vmatpush1.msra.mxu0 0.0
        %2466 = vmatprep.subr.mxu0 0.0
        %2467 = vmatpush1.msra.mxu0 0.0
        %2468 = vmatprep.subr.mxu0 0.0
        %2469 = vmatpush1.msra.mxu0 0.0
        %2470 = vmatprep.subr.mxu0 0.0
        %2471 = vmatpush1.msra.mxu0 0.0
        %2472 = vmatprep.subr.mxu0 0.0
        %2473 = vmatpush1.msra.mxu0 0.0
        %2474 = vmatprep.subr.mxu0 0.0
        %2475 = vmatpush1.msra.mxu0 0.0
        %2476 = vmatprep.subr.mxu0 0.0
        %2477 = vmatpush1.msra.mxu0 0.0
        %2478 = vmatprep.subr.mxu0 0.0
        %2479 = vmatpush1.msra.mxu0 0.0
        %2480 = vmatprep.subr.mxu0 0.0
        %2481 = vmatpush1.msra.mxu0 0.0
        %2482 = vmatprep.subr.mxu0 0.0
        %2483 = vmatpush1.msra.mxu0 0.0
        %2484 = vmatprep.subr.mxu0 0.0
        %2485 = vmatpush1.msra.mxu0 0.0
        %2486 = vmatprep.subr.mxu0 0.0
        %2487 = vmatpush1.msra.mxu0 0.0
        %2488 = vmatprep.subr.mxu0 0.0
        %2489 = vmatpush1.msra.mxu0 0.0
        %2490 = vmatprep.subr.mxu0 0.0
        %2491 = vmatpush1.msra.mxu0 0.0
        %2492 = vmatprep.mubr.f32.mxu0 0.0
        %2493 = vmatmul.mubr.f32.gmra.mrb[0].mxu0 %v264
        %v2494 = vpop.f32.mrb[0].mxu0
        %v2495 = vadd.f32 0.0, %v2494
        %v2496 = vpop.f32.mrb[0].mxu0
        %2497 = vdwg.mxu0
        %v2499 = vsel %vm262, %v2495, 0
        %2501 = vmatprep.subr.mxu0 0.0
        %2502 = vmatpush1.msra.mxu0 %v260
        %2503 = vmatprep.subr.mxu0 0.0
        %2504 = vmatpush1.msra.mxu0 %v261
        %2505 = vmatprep.subr.mxu0 0.0
        %2506 = vmatpush1.msra.mxu0 0.0
        %2507 = vmatprep.subr.mxu0 0.0
        %2508 = vmatpush1.msra.mxu0 0.0
        %2509 = vmatprep.subr.mxu0 0.0
        %2510 = vmatpush1.msra.mxu0 0.0
        %2511 = vmatprep.subr.mxu0 0.0
        %2512 = vmatpush1.msra.mxu0 0.0
        %2513 = vmatprep.subr.mxu0 0.0
        %2514 = vmatpush1.msra.mxu0 0.0
        %2515 = vmatprep.subr.mxu0 0.0
        %2516 = vmatpush1.msra.mxu0 0.0
        %2517 = vmatprep.subr.mxu0 0.0
        %2518 = vmatpush1.msra.mxu0 0.0
        %2519 = vmatprep.subr.mxu0 0.0
        %2520 = vmatpush1.msra.mxu0 0.0
        %2521 = vmatprep.subr.mxu0 0.0
        %2522 = vmatpush1.msra.mxu0 0.0
        %2523 = vmatprep.subr.mxu0 0.0
        %2524 = vmatpush1.msra.mxu0 0.0
        %2525 = vmatprep.subr.mxu0 0.0
        %2526 = vmatpush1.msra.mxu0 0.0
        %2527 = vmatprep.subr.mxu0 0.0
        %2528 = vmatpush1.msra.mxu0 0.0
        %2529 = vmatprep.subr.mxu0 0.0
        %2530 = vmatpush1.msra.mxu0 0.0
        %2531 = vmatprep.subr.mxu0 0.0
        %2532 = vmatpush1.msra.mxu0 0.0
        %2533 = vmatprep.subr.mxu0 0.0
        %2534 = vmatpush1.msra.mxu0 0.0
        %2535 = vmatprep.subr.mxu0 0.0
        %2536 = vmatpush1.msra.mxu0 0.0
        %2537 = vmatprep.subr.mxu0 0.0
        %2538 = vmatpush1.msra.mxu0 0.0
        %2539 = vmatprep.subr.mxu0 0.0
        %2540 = vmatpush1.msra.mxu0 0.0
        %2541 = vmatprep.subr.mxu0 0.0
        %2542 = vmatpush1.msra.mxu0 0.0
        %2543 = vmatprep.subr.mxu0 0.0
        %2544 = vmatpush1.msra.mxu0 0.0
        %2545 = vmatprep.subr.mxu0 0.0
        %2546 = vmatpush1.msra.mxu0 0.0
        %2547 = vmatprep.subr.mxu0 0.0
        %2548 = vmatpush1.msra.mxu0 0.0
        %2549 = vmatprep.subr.mxu0 0.0
        %2550 = vmatpush1.msra.mxu0 0.0
        %2551 = vmatprep.subr.mxu0 0.0
        %2552 = vmatpush1.msra.mxu0 0.0
        %2553 = vmatprep.subr.mxu0 0.0
        %2554 = vmatpush1.msra.mxu0 0.0
        %2555 = vmatprep.subr.mxu0 0.0
        %2556 = vmatpush1.msra.mxu0 0.0
        %2557 = vmatprep.subr.mxu0 0.0
        %2558 = vmatpush1.msra.mxu0 0.0
        %2559 = vmatprep.subr.mxu0 0.0
        %2560 = vmatpush1.msra.mxu0 0.0
        %2561 = vmatprep.subr.mxu0 0.0
        %2562 = vmatpush1.msra.mxu0 0.0
        %2563 = vmatprep.subr.mxu0 0.0
        %2564 = vmatpush1.msra.mxu0 0.0
        %2565 = vmatprep.mubr.f32.mxu0 0.0
        %2566 = vmatmul.mubr.f32.gmra.mrb[0].mxu0 %v2499
        %v2567 = vpop.f32.mrb[0].mxu0
        %v2568 = vadd.f32 0.0, %v2567
        %v2569 = vpop.f32.mrb[0].mxu0
        %2570 = vdwg.mxu0
        %s2571 = scalar_lea.vmem %s243, 56 [#allocation5]
        %2572 = vst.msk [vmem:[%s2571] sm:$0xff] %vm262, %v2568
        %v2573 = vld [vmem:[%s2052] sm:$0xf]
        %v2574 = vld [vmem:[%s2052 + $0x4] sm:$0xf]
        %v2575 = vld [vmem:[%s2052 + $0x8] sm:$0xf]
        %v2576 = vld [vmem:[%s2052 + $0xc] sm:$0xf]
        %v2581 = vunpack.c.l.b16 %v2573
        %v2582 = vunpack.c.l.b16 %v2574
        %v2583 = vunpack.c.l.b16 %v2575
        %v2584 = vunpack.c.l.b16 %v2576
        %v2585 = vpack.c.b16 %v2582, %v2581
        %v2586 = vpack.c.b16 %v2584, %v2583
        %v2588 = vsel %vm262, %v2585, 0
        %v2591 = vsel %vm262, %v2586, 0
        %2593 = vmatprep.subr.bf16.mxu0 0
        %2594 = vmatpush1.bf16.msra.mxu0 %v2050
        %2595 = vmatprep.subr.bf16.mxu0 0
        %2596 = vmatpush1.bf16.msra.mxu0 0
        %2597 = vmatprep.subr.bf16.mxu0 0
        %2598 = vmatpush1.bf16.msra.mxu0 0
        %2599 = vmatprep.subr.bf16.mxu0 0
        %2600 = vmatpush1.bf16.msra.mxu0 0
        %2601 = vmatprep.subr.bf16.mxu0 0
        %2602 = vmatpush1.bf16.msra.mxu0 0
        %2603 = vmatprep.subr.bf16.mxu0 0
        %2604 = vmatpush1.bf16.msra.mxu0 0
        %2605 = vmatprep.subr.bf16.mxu0 0
        %2606 = vmatpush1.bf16.msra.mxu0 0
        %2607 = vmatprep.subr.bf16.mxu0 0
        %2608 = vmatpush1.bf16.msra.mxu0 0
        %2609 = vmatprep.subr.bf16.mxu0 0
        %2610 = vmatpush1.bf16.msra.mxu0 0
        %2611 = vmatprep.subr.bf16.mxu0 0
        %2612 = vmatpush1.bf16.msra.mxu0 0
        %2613 = vmatprep.subr.bf16.mxu0 0
        %2614 = vmatpush1.bf16.msra.mxu0 0
        %2615 = vmatprep.subr.bf16.mxu0 0
        %2616 = vmatpush1.bf16.msra.mxu0 0
        %2617 = vmatprep.subr.bf16.mxu0 0
        %2618 = vmatpush1.bf16.msra.mxu0 0
        %2619 = vmatprep.subr.bf16.mxu0 0
        %2620 = vmatpush1.bf16.msra.mxu0 0
        %2621 = vmatprep.subr.bf16.mxu0 0
        %2622 = vmatpush1.bf16.msra.mxu0 0
        %2623 = vmatprep.subr.bf16.mxu0 0
        %2624 = vmatpush1.bf16.msra.mxu0 0
        %2625 = vmatprep.mubr.bf16.mxu0 0
        %2626 = vmatmul.mubr.bf16.gmra.mrb[0].mxu0 %v2588
        %v2627 = vpop.f32.mrb[0].mxu0
        %v2628 = vadd.f32 0.0, %v2627
        %v2629 = vpop.f32.mrb[0].mxu0
        %v2630 = vpop.f32.mrb[0].mxu0
        %v2631 = vadd.f32 0.0, %v2630
        %v2632 = vpop.f32.mrb[0].mxu0
        %2633 = vmatprep.mubr.bf16.mxu0 0
        %2634 = vmatmul.mubr.bf16.gmra.mrb[0].mxu0 %v2591
        %v2635 = vpop.f32.mrb[0].mxu0
        %v2636 = vadd.f32 0.0, %v2635
        %v2637 = vpop.f32.mrb[0].mxu0
        %v2638 = vpop.f32.mrb[0].mxu0
        %v2639 = vadd.f32 0.0, %v2638
        %v2640 = vpop.f32.mrb[0].mxu0
        %2641 = vdwg.mxu0
        %2644 = vrot.lane.b32.xlu0 %v2636, 112
        %v2645 = vpop.permute.xlu0 %2644
        %2646 = vrot.lane.b32.xlu0 %v2639, 112
        %v2647 = vpop.permute.xlu0 %2646
        %v2650 = vsub.f32 %v2628, %v2645
        %v2651 = vsub.f32 %v2631, %v2647
        %2652 = vrot.lane.b32.xlu0 %v2636, 16
        %v2653 = vpop.permute.xlu0 %2652
        %2654 = vrot.lane.b32.xlu0 %v2639, 16
        %v2655 = vpop.permute.xlu0 %2654
        %v2658 = vadd.f32 %v2628, %v2653
        %v2659 = vadd.f32 %v2631, %v2655
        %v2660 = vmul.f32 %v2650, %v2650
        %v2661 = vmul.f32 %v2651, %v2651
        %v2662 = vmul.f32 %v2658, %v2658
        %v2663 = vmul.f32 %v2659, %v2659
        %2666 = vrot.lane.b32.xlu0 %v2662, 112
        %v2667 = vpop.permute.xlu0 %2666
        %2668 = vrot.lane.b32.xlu0 %v2663, 112
        %v2669 = vpop.permute.xlu0 %2668
        %v2672 = vadd.f32 %v2660, %v2667
        %v2673 = vadd.f32 %v2661, %v2669
        %v2674 = vrsqrt.pop %v2672
        %v2675 = vmul.f32 %v2672, %v2674
        %vm2676 = vcmp.eq.f32.partialorder %v2672, inf
        %v2677 = vsel %vm2676, %v2672, %v2675
        %vm2678 = vcmp.eq.f32.partialorder %v2672, 0.0
        %v2679 = vand.u32 %v2672, 2147483648
        %v2680 = vsel %vm2678, %v2679, %v2677
        %v2681 = vrsqrt.pop %v2673
        %v2682 = vmul.f32 %v2673, %v2681
        %vm2683 = vcmp.eq.f32.partialorder %v2673, inf
        %v2684 = vsel %vm2683, %v2673, %v2682
        %vm2685 = vcmp.eq.f32.partialorder %v2673, 0.0
        %v2686 = vand.u32 %v2673, 2147483648
        %v2687 = vsel %vm2685, %v2686, %v2684
        %2688 = vmatprep.subr.mxu0 0.0
        %2689 = vmatpush1.msra.mxu0 %v2680
        %2690 = vmatprep.subr.mxu0 0.0
        %2691 = vmatpush1.msra.mxu0 %v2687
        %2692 = vmatprep.subr.mxu0 0.0
        %2693 = vmatpush1.msra.mxu0 0.0
        %2694 = vmatprep.subr.mxu0 0.0
        %2695 = vmatpush1.msra.mxu0 0.0
        %2696 = vmatprep.subr.mxu0 0.0
        %2697 = vmatpush1.msra.mxu0 0.0
        %2698 = vmatprep.subr.mxu0 0.0
        %2699 = vmatpush1.msra.mxu0 0.0
        %2700 = vmatprep.subr.mxu0 0.0
        %2701 = vmatpush1.msra.mxu0 0.0
        %2702 = vmatprep.subr.mxu0 0.0
        %2703 = vmatpush1.msra.mxu0 0.0
        %2704 = vmatprep.subr.mxu0 0.0
        %2705 = vmatpush1.msra.mxu0 0.0
        %2706 = vmatprep.subr.mxu0 0.0
        %2707 = vmatpush1.msra.mxu0 0.0
        %2708 = vmatprep.subr.mxu0 0.0
        %2709 = vmatpush1.msra.mxu0 0.0
        %2710 = vmatprep.subr.mxu0 0.0
        %2711 = vmatpush1.msra.mxu0 0.0
        %2712 = vmatprep.subr.mxu0 0.0
        %2713 = vmatpush1.msra.mxu0 0.0
        %2714 = vmatprep.subr.mxu0 0.0
        %2715 = vmatpush1.msra.mxu0 0.0
        %2716 = vmatprep.subr.mxu0 0.0
        %2717 = vmatpush1.msra.mxu0 0.0
        %2718 = vmatprep.subr.mxu0 0.0
        %2719 = vmatpush1.msra.mxu0 0.0
        %2720 = vmatprep.subr.mxu0 0.0
        %2721 = vmatpush1.msra.mxu0 0.0
        %2722 = vmatprep.subr.mxu0 0.0
        %2723 = vmatpush1.msra.mxu0 0.0
        %2724 = vmatprep.subr.mxu0 0.0
        %2725 = vmatpush1.msra.mxu0 0.0
        %2726 = vmatprep.subr.mxu0 0.0
        %2727 = vmatpush1.msra.mxu0 0.0
        %2728 = vmatprep.subr.mxu0 0.0
        %2729 = vmatpush1.msra.mxu0 0.0
        %2730 = vmatprep.subr.mxu0 0.0
        %2731 = vmatpush1.msra.mxu0 0.0
        %2732 = vmatprep.subr.mxu0 0.0
        %2733 = vmatpush1.msra.mxu0 0.0
        %2734 = vmatprep.subr.mxu0 0.0
        %2735 = vmatpush1.msra.mxu0 0.0
        %2736 = vmatprep.subr.mxu0 0.0
        %2737 = vmatpush1.msra.mxu0 0.0
        %2738 = vmatprep.subr.mxu0 0.0
        %2739 = vmatpush1.msra.mxu0 0.0
        %2740 = vmatprep.subr.mxu0 0.0
        %2741 = vmatpush1.msra.mxu0 0.0
        %2742 = vmatprep.subr.mxu0 0.0
        %2743 = vmatpush1.msra.mxu0 0.0
        %2744 = vmatprep.subr.mxu0 0.0
        %2745 = vmatpush1.msra.mxu0 0.0
        %2746 = vmatprep.subr.mxu0 0.0
        %2747 = vmatpush1.msra.mxu0 0.0
        %2748 = vmatprep.subr.mxu0 0.0
        %2749 = vmatpush1.msra.mxu0 0.0
        %2750 = vmatprep.subr.mxu0 0.0
        %2751 = vmatpush1.msra.mxu0 0.0
        %2752 = vmatprep.mubr.f32.mxu0 0.0
        %2753 = vmatmul.mubr.f32.gmra.mrb[0].mxu0 %v264
        %v2754 = vpop.f32.mrb[0].mxu0
        %v2755 = vadd.f32 0.0, %v2754
        %v2756 = vpop.f32.mrb[0].mxu0
        %2757 = vdwg.mxu0
        %v2759 = vsel %vm262, %v2755, 0
        %2761 = vmatprep.subr.mxu0 0.0
        %2762 = vmatpush1.msra.mxu0 %v260
        %2763 = vmatprep.subr.mxu0 0.0
        %2764 = vmatpush1.msra.mxu0 %v261
        %2765 = vmatprep.subr.mxu0 0.0
        %2766 = vmatpush1.msra.mxu0 0.0
        %2767 = vmatprep.subr.mxu0 0.0
        %2768 = vmatpush1.msra.mxu0 0.0
        %2769 = vmatprep.subr.mxu0 0.0
        %2770 = vmatpush1.msra.mxu0 0.0
        %2771 = vmatprep.subr.mxu0 0.0
        %2772 = vmatpush1.msra.mxu0 0.0
        %2773 = vmatprep.subr.mxu0 0.0
        %2774 = vmatpush1.msra.mxu0 0.0
        %2775 = vmatprep.subr.mxu0 0.0
        %2776 = vmatpush1.msra.mxu0 0.0
        %2777 = vmatprep.subr.mxu0 0.0
        %2778 = vmatpush1.msra.mxu0 0.0
        %2779 = vmatprep.subr.mxu0 0.0
        %2780 = vmatpush1.msra.mxu0 0.0
        %2781 = vmatprep.subr.mxu0 0.0
        %2782 = vmatpush1.msra.mxu0 0.0
        %2783 = vmatprep.subr.mxu0 0.0
        %2784 = vmatpush1.msra.mxu0 0.0
        %2785 = vmatprep.subr.mxu0 0.0
        %2786 = vmatpush1.msra.mxu0 0.0
        %2787 = vmatprep.subr.mxu0 0.0
        %2788 = vmatpush1.msra.mxu0 0.0
        %2789 = vmatprep.subr.mxu0 0.0
        %2790 = vmatpush1.msra.mxu0 0.0
        %2791 = vmatprep.subr.mxu0 0.0
        %2792 = vmatpush1.msra.mxu0 0.0
        %2793 = vmatprep.subr.mxu0 0.0
        %2794 = vmatpush1.msra.mxu0 0.0
        %2795 = vmatprep.subr.mxu0 0.0
        %2796 = vmatpush1.msra.mxu0 0.0
        %2797 = vmatprep.subr.mxu0 0.0
        %2798 = vmatpush1.msra.mxu0 0.0
        %2799 = vmatprep.subr.mxu0 0.0
        %2800 = vmatpush1.msra.mxu0 0.0
        %2801 = vmatprep.subr.mxu0 0.0
        %2802 = vmatpush1.msra.mxu0 0.0
        %2803 = vmatprep.subr.mxu0 0.0
        %2804 = vmatpush1.msra.mxu0 0.0
        %2805 = vmatprep.subr.mxu0 0.0
        %2806 = vmatpush1.msra.mxu0 0.0
        %2807 = vmatprep.subr.mxu0 0.0
        %2808 = vmatpush1.msra.mxu0 0.0
        %2809 = vmatprep.subr.mxu0 0.0
        %2810 = vmatpush1.msra.mxu0 0.0
        %2811 = vmatprep.subr.mxu0 0.0
        %2812 = vmatpush1.msra.mxu0 0.0
        %2813 = vmatprep.subr.mxu0 0.0
        %2814 = vmatpush1.msra.mxu0 0.0
        %2815 = vmatprep.subr.mxu0 0.0
        %2816 = vmatpush1.msra.mxu0 0.0
        %2817 = vmatprep.subr.mxu0 0.0
        %2818 = vmatpush1.msra.mxu0 0.0
        %2819 = vmatprep.subr.mxu0 0.0
        %2820 = vmatpush1.msra.mxu0 0.0
        %2821 = vmatprep.subr.mxu0 0.0
        %2822 = vmatpush1.msra.mxu0 0.0
        %2823 = vmatprep.subr.mxu0 0.0
        %2824 = vmatpush1.msra.mxu0 0.0
        %2825 = vmatprep.mubr.f32.mxu0 0.0
        %2826 = vmatmul.mubr.f32.gmra.mrb[0].mxu0 %v2759
        %v2827 = vpop.f32.mrb[0].mxu0
        %v2828 = vadd.f32 0.0, %v2827
        %v2829 = vpop.f32.mrb[0].mxu0
        %2830 = vdwg.mxu0
        %s2831 = scalar_lea.vmem %s243, 96 [#allocation5]
        %2832 = vst.msk [vmem:[%s2831] sm:$0xff] %vm262, %v2828
        %v2833 = vld [vmem:[%s2052] sm:$0xf]
        %v2834 = vld [vmem:[%s2052 + $0x4] sm:$0xf]
        %v2835 = vld [vmem:[%s2052 + $0x8] sm:$0xf]
        %v2836 = vld [vmem:[%s2052 + $0xc] sm:$0xf]
        %v2841 = vunpack.c.l.b16 %v2833
        %v2842 = vunpack.c.l.b16 %v2834
        %v2843 = vunpack.c.l.b16 %v2835
        %v2844 = vunpack.c.l.b16 %v2836
        %v2845 = vpack.c.b16 %v2842, %v2841
        %v2846 = vpack.c.b16 %v2844, %v2843
        %v2848 = vsel %vm262, %v2845, 0
        %v2851 = vsel %vm262, %v2846, 0
        %2853 = vmatprep.subr.bf16.mxu0 0
        %2854 = vmatpush1.bf16.msra.mxu0 %v2051
        %2855 = vmatprep.subr.bf16.mxu0 0
        %2856 = vmatpush1.bf16.msra.mxu0 0
        %2857 = vmatprep.subr.bf16.mxu0 0
        %2858 = vmatpush1.bf16.msra.mxu0 0
        %2859 = vmatprep.subr.bf16.mxu0 0
        %2860 = vmatpush1.bf16.msra.mxu0 0
        %2861 = vmatprep.subr.bf16.mxu0 0
        %2862 = vmatpush1.bf16.msra.mxu0 0
        %2863 = vmatprep.subr.bf16.mxu0 0
        %2864 = vmatpush1.bf16.msra.mxu0 0
        %2865 = vmatprep.subr.bf16.mxu0 0
        %2866 = vmatpush1.bf16.msra.mxu0 0
        %2867 = vmatprep.subr.bf16.mxu0 0
        %2868 = vmatpush1.bf16.msra.mxu0 0
        %2869 = vmatprep.subr.bf16.mxu0 0
        %2870 = vmatpush1.bf16.msra.mxu0 0
        %2871 = vmatprep.subr.bf16.mxu0 0
        %2872 = vmatpush1.bf16.msra.mxu0 0
        %2873 = vmatprep.subr.bf16.mxu0 0
        %2874 = vmatpush1.bf16.msra.mxu0 0
        %2875 = vmatprep.subr.bf16.mxu0 0
        %2876 = vmatpush1.bf16.msra.mxu0 0
        %2877 = vmatprep.subr.bf16.mxu0 0
        %2878 = vmatpush1.bf16.msra.mxu0 0
        %2879 = vmatprep.subr.bf16.mxu0 0
        %2880 = vmatpush1.bf16.msra.mxu0 0
        %2881 = vmatprep.subr.bf16.mxu0 0
        %2882 = vmatpush1.bf16.msra.mxu0 0
        %2883 = vmatprep.subr.bf16.mxu0 0
        %2884 = vmatpush1.bf16.msra.mxu0 0
        %2885 = vmatprep.mubr.bf16.mxu0 0
        %2886 = vmatmul.mubr.bf16.gmra.mrb[0].mxu0 %v2848
        %v2887 = vpop.f32.mrb[0].mxu0
        %v2888 = vadd.f32 0.0, %v2887
        %v2889 = vpop.f32.mrb[0].mxu0
        %v2890 = vpop.f32.mrb[0].mxu0
        %v2891 = vadd.f32 0.0, %v2890
        %v2892 = vpop.f32.mrb[0].mxu0
        %2893 = vmatprep.mubr.bf16.mxu0 0
        %2894 = vmatmul.mubr.bf16.gmra.mrb[0].mxu0 %v2851
        %v2895 = vpop.f32.mrb[0].mxu0
        %v2896 = vadd.f32 0.0, %v2895
        %v2897 = vpop.f32.mrb[0].mxu0
        %v2898 = vpop.f32.mrb[0].mxu0
        %v2899 = vadd.f32 0.0, %v2898
        %v2900 = vpop.f32.mrb[0].mxu0
        %2901 = vdwg.mxu0
        %2904 = vrot.lane.b32.xlu0 %v2896, 112
        %v2905 = vpop.permute.xlu0 %2904
        %2906 = vrot.lane.b32.xlu0 %v2899, 112
        %v2907 = vpop.permute.xlu0 %2906
        %v2910 = vsub.f32 %v2888, %v2905
        %v2911 = vsub.f32 %v2891, %v2907
        %2912 = vrot.lane.b32.xlu0 %v2896, 16
        %v2913 = vpop.permute.xlu0 %2912
        %2914 = vrot.lane.b32.xlu0 %v2899, 16
        %v2915 = vpop.permute.xlu0 %2914
        %v2918 = vadd.f32 %v2888, %v2913
        %v2919 = vadd.f32 %v2891, %v2915
        %v2920 = vmul.f32 %v2910, %v2910
        %v2921 = vmul.f32 %v2911, %v2911
        %v2922 = vmul.f32 %v2918, %v2918
        %v2923 = vmul.f32 %v2919, %v2919
        %2926 = vrot.lane.b32.xlu0 %v2922, 112
        %v2927 = vpop.permute.xlu0 %2926
        %2928 = vrot.lane.b32.xlu0 %v2923, 112
        %v2929 = vpop.permute.xlu0 %2928
        %v2932 = vadd.f32 %v2920, %v2927
        %v2933 = vadd.f32 %v2921, %v2929
        %v2934 = vrsqrt.pop %v2932
        %v2935 = vmul.f32 %v2932, %v2934
        %vm2936 = vcmp.eq.f32.partialorder %v2932, inf
        %v2937 = vsel %vm2936, %v2932, %v2935
        %vm2938 = vcmp.eq.f32.partialorder %v2932, 0.0
        %v2939 = vand.u32 %v2932, 2147483648
        %v2940 = vsel %vm2938, %v2939, %v2937
        %v2941 = vrsqrt.pop %v2933
        %v2942 = vmul.f32 %v2933, %v2941
        %vm2943 = vcmp.eq.f32.partialorder %v2933, inf
        %v2944 = vsel %vm2943, %v2933, %v2942
        %vm2945 = vcmp.eq.f32.partialorder %v2933, 0.0
        %v2946 = vand.u32 %v2933, 2147483648
        %v2947 = vsel %vm2945, %v2946, %v2944
        %2948 = vmatprep.subr.mxu0 0.0
        %2949 = vmatpush1.msra.mxu0 %v2940
        %2950 = vmatprep.subr.mxu0 0.0
        %2951 = vmatpush1.msra.mxu0 %v2947
        %2952 = vmatprep.subr.mxu0 0.0
        %2953 = vmatpush1.msra.mxu0 0.0
        %2954 = vmatprep.subr.mxu0 0.0
        %2955 = vmatpush1.msra.mxu0 0.0
        %2956 = vmatprep.subr.mxu0 0.0
        %2957 = vmatpush1.msra.mxu0 0.0
        %2958 = vmatprep.subr.mxu0 0.0
        %2959 = vmatpush1.msra.mxu0 0.0
        %2960 = vmatprep.subr.mxu0 0.0
        %2961 = vmatpush1.msra.mxu0 0.0
        %2962 = vmatprep.subr.mxu0 0.0
        %2963 = vmatpush1.msra.mxu0 0.0
        %2964 = vmatprep.subr.mxu0 0.0
        %2965 = vmatpush1.msra.mxu0 0.0
        %2966 = vmatprep.subr.mxu0 0.0
        %2967 = vmatpush1.msra.mxu0 0.0
        %2968 = vmatprep.subr.mxu0 0.0
        %2969 = vmatpush1.msra.mxu0 0.0
        %2970 = vmatprep.subr.mxu0 0.0
        %2971 = vmatpush1.msra.mxu0 0.0
        %2972 = vmatprep.subr.mxu0 0.0
        %2973 = vmatpush1.msra.mxu0 0.0
        %2974 = vmatprep.subr.mxu0 0.0
        %2975 = vmatpush1.msra.mxu0 0.0
        %2976 = vmatprep.subr.mxu0 0.0
        %2977 = vmatpush1.msra.mxu0 0.0
        %2978 = vmatprep.subr.mxu0 0.0
        %2979 = vmatpush1.msra.mxu0 0.0
        %2980 = vmatprep.subr.mxu0 0.0
        %2981 = vmatpush1.msra.mxu0 0.0
        %2982 = vmatprep.subr.mxu0 0.0
        %2983 = vmatpush1.msra.mxu0 0.0
        %2984 = vmatprep.subr.mxu0 0.0
        %2985 = vmatpush1.msra.mxu0 0.0
        %2986 = vmatprep.subr.mxu0 0.0
        %2987 = vmatpush1.msra.mxu0 0.0
        %2988 = vmatprep.subr.mxu0 0.0
        %2989 = vmatpush1.msra.mxu0 0.0
        %2990 = vmatprep.subr.mxu0 0.0
        %2991 = vmatpush1.msra.mxu0 0.0
        %2992 = vmatprep.subr.mxu0 0.0
        %2993 = vmatpush1.msra.mxu0 0.0
        %2994 = vmatprep.subr.mxu0 0.0
        %2995 = vmatpush1.msra.mxu0 0.0
        %2996 = vmatprep.subr.mxu0 0.0
        %2997 = vmatpush1.msra.mxu0 0.0
        %2998 = vmatprep.subr.mxu0 0.0
        %2999 = vmatpush1.msra.mxu0 0.0
        %3000 = vmatprep.subr.mxu0 0.0
        %3001 = vmatpush1.msra.mxu0 0.0
        %3002 = vmatprep.subr.mxu0 0.0
        %3003 = vmatpush1.msra.mxu0 0.0
        %3004 = vmatprep.subr.mxu0 0.0
        %3005 = vmatpush1.msra.mxu0 0.0
        %3006 = vmatprep.subr.mxu0 0.0
        %3007 = vmatpush1.msra.mxu0 0.0
        %3008 = vmatprep.subr.mxu0 0.0
        %3009 = vmatpush1.msra.mxu0 0.0
        %3010 = vmatprep.subr.mxu0 0.0
        %3011 = vmatpush1.msra.mxu0 0.0
        %3012 = vmatprep.mubr.f32.mxu0 0.0
        %3013 = vmatmul.mubr.f32.gmra.mrb[0].mxu0 %v264
        %v3014 = vpop.f32.mrb[0].mxu0
        %v3015 = vadd.f32 0.0, %v3014
        %v3016 = vpop.f32.mrb[0].mxu0
        %3017 = vdwg.mxu0
        %v3019 = vsel %vm262, %v3015, 0
        %3021 = vmatprep.subr.mxu0 0.0
        %3022 = vmatpush1.msra.mxu0 %v260
        %3023 = vmatprep.subr.mxu0 0.0
        %3024 = vmatpush1.msra.mxu0 %v261
        %3025 = vmatprep.subr.mxu0 0.0
        %3026 = vmatpush1.msra.mxu0 0.0
        %3027 = vmatprep.subr.mxu0 0.0
        %3028 = vmatpush1.msra.mxu0 0.0
        %3029 = vmatprep.subr.mxu0 0.0
        %3030 = vmatpush1.msra.mxu0 0.0
        %3031 = vmatprep.subr.mxu0 0.0
        %3032 = vmatpush1.msra.mxu0 0.0
        %3033 = vmatprep.subr.mxu0 0.0
        %3034 = vmatpush1.msra.mxu0 0.0
        %3035 = vmatprep.subr.mxu0 0.0
        %3036 = vmatpush1.msra.mxu0 0.0
        %3037 = vmatprep.subr.mxu0 0.0
        %3038 = vmatpush1.msra.mxu0 0.0
        %3039 = vmatprep.subr.mxu0 0.0
        %3040 = vmatpush1.msra.mxu0 0.0
        %3041 = vmatprep.subr.mxu0 0.0
        %3042 = vmatpush1.msra.mxu0 0.0
        %3043 = vmatprep.subr.mxu0 0.0
        %3044 = vmatpush1.msra.mxu0 0.0
        %3045 = vmatprep.subr.mxu0 0.0
        %3046 = vmatpush1.msra.mxu0 0.0
        %3047 = vmatprep.subr.mxu0 0.0
        %3048 = vmatpush1.msra.mxu0 0.0
        %3049 = vmatprep.subr.mxu0 0.0
        %3050 = vmatpush1.msra.mxu0 0.0
        %3051 = vmatprep.subr.mxu0 0.0
        %3052 = vmatpush1.msra.mxu0 0.0
        %3053 = vmatprep.subr.mxu0 0.0
        %3054 = vmatpush1.msra.mxu0 0.0
        %3055 = vmatprep.subr.mxu0 0.0
        %3056 = vmatpush1.msra.mxu0 0.0
        %3057 = vmatprep.subr.mxu0 0.0
        %3058 = vmatpush1.msra.mxu0 0.0
        %3059 = vmatprep.subr.mxu0 0.0
        %3060 = vmatpush1.msra.mxu0 0.0
        %3061 = vmatprep.subr.mxu0 0.0
        %3062 = vmatpush1.msra.mxu0 0.0
        %3063 = vmatprep.subr.mxu0 0.0
        %3064 = vmatpush1.msra.mxu0 0.0
        %3065 = vmatprep.subr.mxu0 0.0
        %3066 = vmatpush1.msra.mxu0 0.0
        %3067 = vmatprep.subr.mxu0 0.0
        %3068 = vmatpush1.msra.mxu0 0.0
        %3069 = vmatprep.subr.mxu0 0.0
        %3070 = vmatpush1.msra.mxu0 0.0
        %3071 = vmatprep.subr.mxu0 0.0
        %3072 = vmatpush1.msra.mxu0 0.0
        %3073 = vmatprep.subr.mxu0 0.0
        %3074 = vmatpush1.msra.mxu0 0.0
        %3075 = vmatprep.subr.mxu0 0.0
        %3076 = vmatpush1.msra.mxu0 0.0
        %3077 = vmatprep.subr.mxu0 0.0
        %3078 = vmatpush1.msra.mxu0 0.0
        %3079 = vmatprep.subr.mxu0 0.0
        %3080 = vmatpush1.msra.mxu0 0.0
        %3081 = vmatprep.subr.mxu0 0.0
        %3082 = vmatpush1.msra.mxu0 0.0
        %3083 = vmatprep.subr.mxu0 0.0
        %3084 = vmatpush1.msra.mxu0 0.0
        %3085 = vmatprep.mubr.f32.mxu0 0.0
        %3086 = vmatmul.mubr.f32.gmra.mrb[0].mxu0 %v3019
        %v3087 = vpop.f32.mrb[0].mxu0
        %v3088 = vadd.f32 0.0, %v3087
        %v3089 = vpop.f32.mrb[0].mxu0
        %3090 = vdwg.mxu0
        %s3091 = scalar_lea.vmem %s243, 136 [#allocation5]
        %3092 = vst.msk [vmem:[%s3091] sm:$0xff] %vm262, %v3088
        %s3093 = scalar_lea.vmem %s2, 16
        %v3094 = vld [vmem:[%s3093] sm:$0xf]
        %v3095 = vld [vmem:[%s3093 + $0x4] sm:$0xf]
        %v3098 = vunpack.c.l.b16 %v3094
        %v3099 = vunpack.c.l.b16 %v3095
        %v3100 = vpack.c.b16 %v3099, %v3098
        %3102 = vmatprep.subr.bf16.mxu0 0
        %3103 = vmatpush1.bf16.msra.mxu0 %v3100
        %3104 = vmatprep.subr.bf16.mxu0 0
        %3105 = vmatpush1.bf16.msra.mxu0 0
        %3106 = vmatprep.subr.bf16.mxu0 0
        %3107 = vmatpush1.bf16.msra.mxu0 0
        %3108 = vmatprep.subr.bf16.mxu0 0
        %3109 = vmatpush1.bf16.msra.mxu0 0
        %3110 = vmatprep.subr.bf16.mxu0 0
        %3111 = vmatpush1.bf16.msra.mxu0 0
        %3112 = vmatprep.subr.bf16.mxu0 0
        %3113 = vmatpush1.bf16.msra.mxu0 0
        %3114 = vmatprep.subr.bf16.mxu0 0
        %3115 = vmatpush1.bf16.msra.mxu0 0
        %3116 = vmatprep.subr.bf16.mxu0 0
        %3117 = vmatpush1.bf16.msra.mxu0 0
        %3118 = vmatprep.subr.bf16.mxu0 0
        %3119 = vmatpush1.bf16.msra.mxu0 0
        %3120 = vmatprep.subr.bf16.mxu0 0
        %3121 = vmatpush1.bf16.msra.mxu0 0
        %3122 = vmatprep.subr.bf16.mxu0 0
        %3123 = vmatpush1.bf16.msra.mxu0 0
        %3124 = vmatprep.subr.bf16.mxu0 0
        %3125 = vmatpush1.bf16.msra.mxu0 0
        %3126 = vmatprep.subr.bf16.mxu0 0
        %3127 = vmatpush1.bf16.msra.mxu0 0
        %3128 = vmatprep.subr.bf16.mxu0 0
        %3129 = vmatpush1.bf16.msra.mxu0 0
        %3130 = vmatprep.subr.bf16.mxu0 0
        %3131 = vmatpush1.bf16.msra.mxu0 0
        %3132 = vmatprep.subr.bf16.mxu0 0
        %3133 = vmatpush1.bf16.msra.mxu0 0
        %3134 = vmatprep.mubr.bf16.mxu0 0
        %3135 = vmatmul.mubr.bf16.gmra.mrb[0].mxu0 %v854
        %v3136 = vpop.f32.mrb[0].mxu0
        %v3137 = vadd.f32 0.0, %v3136
        %v3138 = vpop.f32.mrb[0].mxu0
        %v3139 = vpop.f32.mrb[0].mxu0
        %v3140 = vadd.f32 0.0, %v3139
        %v3141 = vpop.f32.mrb[0].mxu0
        %3142 = vmatprep.mubr.bf16.mxu0 0
        %3143 = vmatmul.mubr.bf16.gmra.mrb[0].mxu0 %v857
        %v3144 = vpop.f32.mrb[0].mxu0
        %v3145 = vadd.f32 0.0, %v3144
        %v3146 = vpop.f32.mrb[0].mxu0
        %v3147 = vpop.f32.mrb[0].mxu0
        %v3148 = vadd.f32 0.0, %v3147
        %v3149 = vpop.f32.mrb[0].mxu0
        %3150 = vmatprep.mubr.bf16.mxu0 0
        %3151 = vmatmul.mubr.bf16.gmra.mrb[0].mxu0 %v860
        %v3152 = vpop.f32.mrb[0].mxu0
        %v3153 = vadd.f32 0.0, %v3152
        %v3154 = vpop.f32.mrb[0].mxu0
        %v3155 = vpop.f32.mrb[0].mxu0
        %v3156 = vadd.f32 0.0, %v3155
        %v3157 = vpop.f32.mrb[0].mxu0
        %3158 = vmatprep.mubr.bf16.mxu0 0
        %3159 = vmatmul.mubr.bf16.gmra.mrb[0].mxu0 %v863
        %v3160 = vpop.f32.mrb[0].mxu0
        %v3161 = vadd.f32 0.0, %v3160
        %v3162 = vpop.f32.mrb[0].mxu0
        %v3163 = vpop.f32.mrb[0].mxu0
        %v3164 = vadd.f32 0.0, %v3163
        %v3165 = vpop.f32.mrb[0].mxu0
        %3166 = vdwg.mxu0
        %v3167 = vpack.c.bf16 %v3140, %v3137
        %v3168 = vpack.c.bf16 %v3148, %v3145
        %v3169 = vpack.c.bf16 %v3156, %v3153
        %v3170 = vpack.c.bf16 %v3164, %v3161
        %s3171 = scalar_lea.vmem %s1, 32
        %v3172 = vld [vmem:[%s3171] sm:$0xf]
        %v3173 = vld [vmem:[%s3171 + $0x4] sm:$0xf]
        %v3174 = vld [vmem:[%s3171 + $0x8] sm:$0xf]
        %v3175 = vld [vmem:[%s3171 + $0xc] sm:$0xf]
        %v3180 = vunpack.c.l.b16 %v3172
        %v3181 = vunpack.c.l.b16 %v3173
        %v3182 = vunpack.c.l.b16 %v3174
        %v3183 = vunpack.c.l.b16 %v3175
        %v3184 = vpack.c.b16 %v3181, %v3180
        %v3185 = vpack.c.b16 %v3183, %v3182
        %v3187 = vsel %vm262, %v3184, 0
        %v3190 = vsel %vm262, %v3185, 0
        %3192 = vmatprep.subr.bf16.mxu0 0
        %3193 = vmatpush1.bf16.msra.mxu0 %v3167
        %3194 = vmatprep.subr.bf16.mxu0 0
        %3195 = vmatpush1.bf16.msra.mxu0 0
        %3196 = vmatprep.subr.bf16.mxu0 0
        %3197 = vmatpush1.bf16.msra.mxu0 0
        %3198 = vmatprep.subr.bf16.mxu0 0
        %3199 = vmatpush1.bf16.msra.mxu0 0
        %3200 = vmatprep.subr.bf16.mxu0 0
        %3201 = vmatpush1.bf16.msra.mxu0 0
        %3202 = vmatprep.subr.bf16.mxu0 0
        %3203 = vmatpush1.bf16.msra.mxu0 0
        %3204 = vmatprep.subr.bf16.mxu0 0
        %3205 = vmatpush1.bf16.msra.mxu0 0
        %3206 = vmatprep.subr.bf16.mxu0 0
        %3207 = vmatpush1.bf16.msra.mxu0 0
        %3208 = vmatprep.subr.bf16.mxu0 0
        %3209 = vmatpush1.bf16.msra.mxu0 0
        %3210 = vmatprep.subr.bf16.mxu0 0
        %3211 = vmatpush1.bf16.msra.mxu0 0
        %3212 = vmatprep.subr.bf16.mxu0 0
        %3213 = vmatpush1.bf16.msra.mxu0 0
        %3214 = vmatprep.subr.bf16.mxu0 0
        %3215 = vmatpush1.bf16.msra.mxu0 0
        %3216 = vmatprep.subr.bf16.mxu0 0
        %3217 = vmatpush1.bf16.msra.mxu0 0
        %3218 = vmatprep.subr.bf16.mxu0 0
        %3219 = vmatpush1.bf16.msra.mxu0 0
        %3220 = vmatprep.subr.bf16.mxu0 0
        %3221 = vmatpush1.bf16.msra.mxu0 0
        %3222 = vmatprep.subr.bf16.mxu0 0
        %3223 = vmatpush1.bf16.msra.mxu0 0
        %3224 = vmatprep.mubr.bf16.mxu0 0
        %3225 = vmatmul.mubr.bf16.gmra.mrb[0].mxu0 %v3187
        %v3226 = vpop.f32.mrb[0].mxu0
        %v3227 = vadd.f32 0.0, %v3226
        %v3228 = vpop.f32.mrb[0].mxu0
        %v3229 = vpop.f32.mrb[0].mxu0
        %v3230 = vadd.f32 0.0, %v3229
        %v3231 = vpop.f32.mrb[0].mxu0
        %3232 = vmatprep.mubr.bf16.mxu0 0
        %3233 = vmatmul.mubr.bf16.gmra.mrb[0].mxu0 %v3190
        %v3234 = vpop.f32.mrb[0].mxu0
        %v3235 = vadd.f32 0.0, %v3234
        %v3236 = vpop.f32.mrb[0].mxu0
        %v3237 = vpop.f32.mrb[0].mxu0
        %v3238 = vadd.f32 0.0, %v3237
        %v3239 = vpop.f32.mrb[0].mxu0
        %3240 = vdwg.mxu0
        %3243 = vrot.lane.b32.xlu0 %v3235, 112
        %v3244 = vpop.permute.xlu0 %3243
        %3245 = vrot.lane.b32.xlu0 %v3238, 112
        %v3246 = vpop.permute.xlu0 %3245
        %v3249 = vsub.f32 %v3227, %v3244
        %v3250 = vsub.f32 %v3230, %v3246
        %3251 = vrot.lane.b32.xlu0 %v3235, 16
        %v3252 = vpop.permute.xlu0 %3251
        %3253 = vrot.lane.b32.xlu0 %v3238, 16
        %v3254 = vpop.permute.xlu0 %3253
        %v3257 = vadd.f32 %v3227, %v3252
        %v3258 = vadd.f32 %v3230, %v3254
        %v3259 = vmul.f32 %v3249, %v3249
        %v3260 = vmul.f32 %v3250, %v3250
        %v3261 = vmul.f32 %v3257, %v3257
        %v3262 = vmul.f32 %v3258, %v3258
        %3265 = vrot.lane.b32.xlu0 %v3261, 112
        %v3266 = vpop.permute.xlu0 %3265
        %3267 = vrot.lane.b32.xlu0 %v3262, 112
        %v3268 = vpop.permute.xlu0 %3267
        %v3271 = vadd.f32 %v3259, %v3266
        %v3272 = vadd.f32 %v3260, %v3268
        %v3273 = vrsqrt.pop %v3271
        %v3274 = vmul.f32 %v3271, %v3273
        %vm3275 = vcmp.eq.f32.partialorder %v3271, inf
        %v3276 = vsel %vm3275, %v3271, %v3274
        %vm3277 = vcmp.eq.f32.partialorder %v3271, 0.0
        %v3278 = vand.u32 %v3271, 2147483648
        %v3279 = vsel %vm3277, %v3278, %v3276
        %v3280 = vrsqrt.pop %v3272
        %v3281 = vmul.f32 %v3272, %v3280
        %vm3282 = vcmp.eq.f32.partialorder %v3272, inf
        %v3283 = vsel %vm3282, %v3272, %v3281
        %vm3284 = vcmp.eq.f32.partialorder %v3272, 0.0
        %v3285 = vand.u32 %v3272, 2147483648
        %v3286 = vsel %vm3284, %v3285, %v3283
        %3287 = vmatprep.subr.mxu0 0.0
        %3288 = vmatpush1.msra.mxu0 %v3279
        %3289 = vmatprep.subr.mxu0 0.0
        %3290 = vmatpush1.msra.mxu0 %v3286
        %3291 = vmatprep.subr.mxu0 0.0
        %3292 = vmatpush1.msra.mxu0 0.0
        %3293 = vmatprep.subr.mxu0 0.0
        %3294 = vmatpush1.msra.mxu0 0.0
        %3295 = vmatprep.subr.mxu0 0.0
        %3296 = vmatpush1.msra.mxu0 0.0
        %3297 = vmatprep.subr.mxu0 0.0
        %3298 = vmatpush1.msra.mxu0 0.0
        %3299 = vmatprep.subr.mxu0 0.0
        %3300 = vmatpush1.msra.mxu0 0.0
        %3301 = vmatprep.subr.mxu0 0.0
        %3302 = vmatpush1.msra.mxu0 0.0
        %3303 = vmatprep.subr.mxu0 0.0
        %3304 = vmatpush1.msra.mxu0 0.0
        %3305 = vmatprep.subr.mxu0 0.0
        %3306 = vmatpush1.msra.mxu0 0.0
        %3307 = vmatprep.subr.mxu0 0.0
        %3308 = vmatpush1.msra.mxu0 0.0
        %3309 = vmatprep.subr.mxu0 0.0
        %3310 = vmatpush1.msra.mxu0 0.0
        %3311 = vmatprep.subr.mxu0 0.0
        %3312 = vmatpush1.msra.mxu0 0.0
        %3313 = vmatprep.subr.mxu0 0.0
        %3314 = vmatpush1.msra.mxu0 0.0
        %3315 = vmatprep.subr.mxu0 0.0
        %3316 = vmatpush1.msra.mxu0 0.0
        %3317 = vmatprep.subr.mxu0 0.0
        %3318 = vmatpush1.msra.mxu0 0.0
        %3319 = vmatprep.subr.mxu0 0.0
        %3320 = vmatpush1.msra.mxu0 0.0
        %3321 = vmatprep.subr.mxu0 0.0
        %3322 = vmatpush1.msra.mxu0 0.0
        %3323 = vmatprep.subr.mxu0 0.0
        %3324 = vmatpush1.msra.mxu0 0.0
        %3325 = vmatprep.subr.mxu0 0.0
        %3326 = vmatpush1.msra.mxu0 0.0
        %3327 = vmatprep.subr.mxu0 0.0
        %3328 = vmatpush1.msra.mxu0 0.0
        %3329 = vmatprep.subr.mxu0 0.0
        %3330 = vmatpush1.msra.mxu0 0.0
        %3331 = vmatprep.subr.mxu0 0.0
        %3332 = vmatpush1.msra.mxu0 0.0
        %3333 = vmatprep.subr.mxu0 0.0
        %3334 = vmatpush1.msra.mxu0 0.0
        %3335 = vmatprep.subr.mxu0 0.0
        %3336 = vmatpush1.msra.mxu0 0.0
        %3337 = vmatprep.subr.mxu0 0.0
        %3338 = vmatpush1.msra.mxu0 0.0
        %3339 = vmatprep.subr.mxu0 0.0
        %3340 = vmatpush1.msra.mxu0 0.0
        %3341 = vmatprep.subr.mxu0 0.0
        %3342 = vmatpush1.msra.mxu0 0.0
        %3343 = vmatprep.subr.mxu0 0.0
        %3344 = vmatpush1.msra.mxu0 0.0
        %3345 = vmatprep.subr.mxu0 0.0
        %3346 = vmatpush1.msra.mxu0 0.0
        %3347 = vmatprep.subr.mxu0 0.0
        %3348 = vmatpush1.msra.mxu0 0.0
        %3349 = vmatprep.subr.mxu0 0.0
        %3350 = vmatpush1.msra.mxu0 0.0
        %3351 = vmatprep.mubr.f32.mxu0 0.0
        %3352 = vmatmul.mubr.f32.gmra.mrb[0].mxu0 %v264
        %v3353 = vpop.f32.mrb[0].mxu0
        %v3354 = vadd.f32 0.0, %v3353
        %v3355 = vpop.f32.mrb[0].mxu0
        %3356 = vdwg.mxu0
        %v3358 = vsel %vm262, %v3354, 0
        %3360 = vmatprep.subr.mxu0 0.0
        %3361 = vmatpush1.msra.mxu0 %v260
        %3362 = vmatprep.subr.mxu0 0.0
        %3363 = vmatpush1.msra.mxu0 %v261
        %3364 = vmatprep.subr.mxu0 0.0
        %3365 = vmatpush1.msra.mxu0 0.0
        %3366 = vmatprep.subr.mxu0 0.0
        %3367 = vmatpush1.msra.mxu0 0.0
        %3368 = vmatprep.subr.mxu0 0.0
        %3369 = vmatpush1.msra.mxu0 0.0
        %3370 = vmatprep.subr.mxu0 0.0
        %3371 = vmatpush1.msra.mxu0 0.0
        %3372 = vmatprep.subr.mxu0 0.0
        %3373 = vmatpush1.msra.mxu0 0.0
        %3374 = vmatprep.subr.mxu0 0.0
        %3375 = vmatpush1.msra.mxu0 0.0
        %3376 = vmatprep.subr.mxu0 0.0
        %3377 = vmatpush1.msra.mxu0 0.0
        %3378 = vmatprep.subr.mxu0 0.0
        %3379 = vmatpush1.msra.mxu0 0.0
        %3380 = vmatprep.subr.mxu0 0.0
        %3381 = vmatpush1.msra.mxu0 0.0
        %3382 = vmatprep.subr.mxu0 0.0
        %3383 = vmatpush1.msra.mxu0 0.0
        %3384 = vmatprep.subr.mxu0 0.0
        %3385 = vmatpush1.msra.mxu0 0.0
        %3386 = vmatprep.subr.mxu0 0.0
        %3387 = vmatpush1.msra.mxu0 0.0
        %3388 = vmatprep.subr.mxu0 0.0
        %3389 = vmatpush1.msra.mxu0 0.0
        %3390 = vmatprep.subr.mxu0 0.0
        %3391 = vmatpush1.msra.mxu0 0.0
        %3392 = vmatprep.subr.mxu0 0.0
        %3393 = vmatpush1.msra.mxu0 0.0
        %3394 = vmatprep.subr.mxu0 0.0
        %3395 = vmatpush1.msra.mxu0 0.0
        %3396 = vmatprep.subr.mxu0 0.0
        %3397 = vmatpush1.msra.mxu0 0.0
        %3398 = vmatprep.subr.mxu0 0.0
        %3399 = vmatpush1.msra.mxu0 0.0
        %3400 = vmatprep.subr.mxu0 0.0
        %3401 = vmatpush1.msra.mxu0 0.0
        %3402 = vmatprep.subr.mxu0 0.0
        %3403 = vmatpush1.msra.mxu0 0.0
        %3404 = vmatprep.subr.mxu0 0.0
        %3405 = vmatpush1.msra.mxu0 0.0
        %3406 = vmatprep.subr.mxu0 0.0
        %3407 = vmatpush1.msra.mxu0 0.0
        %3408 = vmatprep.subr.mxu0 0.0
        %3409 = vmatpush1.msra.mxu0 0.0
        %3410 = vmatprep.subr.mxu0 0.0
        %3411 = vmatpush1.msra.mxu0 0.0
        %3412 = vmatprep.subr.mxu0 0.0
        %3413 = vmatpush1.msra.mxu0 0.0
        %3414 = vmatprep.subr.mxu0 0.0
        %3415 = vmatpush1.msra.mxu0 0.0
        %3416 = vmatprep.subr.mxu0 0.0
        %3417 = vmatpush1.msra.mxu0 0.0
        %3418 = vmatprep.subr.mxu0 0.0
        %3419 = vmatpush1.msra.mxu0 0.0
        %3420 = vmatprep.subr.mxu0 0.0
        %3421 = vmatpush1.msra.mxu0 0.0
        %3422 = vmatprep.subr.mxu0 0.0
        %3423 = vmatpush1.msra.mxu0 0.0
        %3424 = vmatprep.mubr.f32.mxu0 0.0
        %3425 = vmatmul.mubr.f32.gmra.mrb[0].mxu0 %v3358
        %v3426 = vpop.f32.mrb[0].mxu0
        %v3427 = vadd.f32 0.0, %v3426
        %v3428 = vpop.f32.mrb[0].mxu0
        %3429 = vdwg.mxu0
        %s3430 = scalar_lea.vmem %s243, 24 [#allocation5]
        %3431 = vst.msk [vmem:[%s3430] sm:$0xff] %vm262, %v3427
        %v3432 = vld [vmem:[%s3171] sm:$0xf]
        %v3433 = vld [vmem:[%s3171 + $0x4] sm:$0xf]
        %v3434 = vld [vmem:[%s3171 + $0x8] sm:$0xf]
        %v3435 = vld [vmem:[%s3171 + $0xc] sm:$0xf]
        %v3440 = vunpack.c.l.b16 %v3432
        %v3441 = vunpack.c.l.b16 %v3433
        %v3442 = vunpack.c.l.b16 %v3434
        %v3443 = vunpack.c.l.b16 %v3435
        %v3444 = vpack.c.b16 %v3441, %v3440
        %v3445 = vpack.c.b16 %v3443, %v3442
        %v3447 = vsel %vm262, %v3444, 0
        %v3450 = vsel %vm262, %v3445, 0
        %3452 = vmatprep.subr.bf16.mxu0 0
        %3453 = vmatpush1.bf16.msra.mxu0 %v3168
        %3454 = vmatprep.subr.bf16.mxu0 0
        %3455 = vmatpush1.bf16.msra.mxu0 0
        %3456 = vmatprep.subr.bf16.mxu0 0
        %3457 = vmatpush1.bf16.msra.mxu0 0
        %3458 = vmatprep.subr.bf16.mxu0 0
        %3459 = vmatpush1.bf16.msra.mxu0 0
        %3460 = vmatprep.subr.bf16.mxu0 0
        %3461 = vmatpush1.bf16.msra.mxu0 0
        %3462 = vmatprep.subr.bf16.mxu0 0
        %3463 = vmatpush1.bf16.msra.mxu0 0
        %3464 = vmatprep.subr.bf16.mxu0 0
        %3465 = vmatpush1.bf16.msra.mxu0 0
        %3466 = vmatprep.subr.bf16.mxu0 0
        %3467 = vmatpush1.bf16.msra.mxu0 0
        %3468 = vmatprep.subr.bf16.mxu0 0
        %3469 = vmatpush1.bf16.msra.mxu0 0
        %3470 = vmatprep.subr.bf16.mxu0 0
        %3471 = vmatpush1.bf16.msra.mxu0 0
        %3472 = vmatprep.subr.bf16.mxu0 0
        %3473 = vmatpush1.bf16.msra.mxu0 0
        %3474 = vmatprep.subr.bf16.mxu0 0
        %3475 = vmatpush1.bf16.msra.mxu0 0
        %3476 = vmatprep.subr.bf16.mxu0 0
        %3477 = vmatpush1.bf16.msra.mxu0 0
        %3478 = vmatprep.subr.bf16.mxu0 0
        %3479 = vmatpush1.bf16.msra.mxu0 0
        %3480 = vmatprep.subr.bf16.mxu0 0
        %3481 = vmatpush1.bf16.msra.mxu0 0
        %3482 = vmatprep.subr.bf16.mxu0 0
        %3483 = vmatpush1.bf16.msra.mxu0 0
        %3484 = vmatprep.mubr.bf16.mxu0 0
        %3485 = vmatmul.mubr.bf16.gmra.mrb[0].mxu0 %v3447
        %v3486 = vpop.f32.mrb[0].mxu0
        %v3487 = vadd.f32 0.0, %v3486
        %v3488 = vpop.f32.mrb[0].mxu0
        %v3489 = vpop.f32.mrb[0].mxu0
        %v3490 = vadd.f32 0.0, %v3489
        %v3491 = vpop.f32.mrb[0].mxu0
        %3492 = vmatprep.mubr.bf16.mxu0 0
        %3493 = vmatmul.mubr.bf16.gmra.mrb[0].mxu0 %v3450
        %v3494 = vpop.f32.mrb[0].mxu0
        %v3495 = vadd.f32 0.0, %v3494
        %v3496 = vpop.f32.mrb[0].mxu0
        %v3497 = vpop.f32.mrb[0].mxu0
        %v3498 = vadd.f32 0.0, %v3497
        %v3499 = vpop.f32.mrb[0].mxu0
        %3500 = vdwg.mxu0
        %3503 = vrot.lane.b32.xlu0 %v3495, 112
        %v3504 = vpop.permute.xlu0 %3503
        %3505 = vrot.lane.b32.xlu0 %v3498, 112
        %v3506 = vpop.permute.xlu0 %3505
        %v3509 = vsub.f32 %v3487, %v3504
        %v3510 = vsub.f32 %v3490, %v3506
        %3511 = vrot.lane.b32.xlu0 %v3495, 16
        %v3512 = vpop.permute.xlu0 %3511
        %3513 = vrot.lane.b32.xlu0 %v3498, 16
        %v3514 = vpop.permute.xlu0 %3513
        %v3517 = vadd.f32 %v3487, %v3512
        %v3518 = vadd.f32 %v3490, %v3514
        %v3519 = vmul.f32 %v3509, %v3509
        %v3520 = vmul.f32 %v3510, %v3510
        %v3521 = vmul.f32 %v3517, %v3517
        %v3522 = vmul.f32 %v3518, %v3518
        %3525 = vrot.lane.b32.xlu0 %v3521, 112
        %v3526 = vpop.permute.xlu0 %3525
        %3527 = vrot.lane.b32.xlu0 %v3522, 112
        %v3528 = vpop.permute.xlu0 %3527
        %v3531 = vadd.f32 %v3519, %v3526
        %v3532 = vadd.f32 %v3520, %v3528
        %v3533 = vrsqrt.pop %v3531
        %v3534 = vmul.f32 %v3531, %v3533
        %vm3535 = vcmp.eq.f32.partialorder %v3531, inf
        %v3536 = vsel %vm3535, %v3531, %v3534
        %vm3537 = vcmp.eq.f32.partialorder %v3531, 0.0
        %v3538 = vand.u32 %v3531, 2147483648
        %v3539 = vsel %vm3537, %v3538, %v3536
        %v3540 = vrsqrt.pop %v3532
        %v3541 = vmul.f32 %v3532, %v3540
        %vm3542 = vcmp.eq.f32.partialorder %v3532, inf
        %v3543 = vsel %vm3542, %v3532, %v3541
        %vm3544 = vcmp.eq.f32.partialorder %v3532, 0.0
        %v3545 = vand.u32 %v3532, 2147483648
        %v3546 = vsel %vm3544, %v3545, %v3543
        %3547 = vmatprep.subr.mxu0 0.0
        %3548 = vmatpush1.msra.mxu0 %v3539
        %3549 = vmatprep.subr.mxu0 0.0
        %3550 = vmatpush1.msra.mxu0 %v3546
        %3551 = vmatprep.subr.mxu0 0.0
        %3552 = vmatpush1.msra.mxu0 0.0
        %3553 = vmatprep.subr.mxu0 0.0
        %3554 = vmatpush1.msra.mxu0 0.0
        %3555 = vmatprep.subr.mxu0 0.0
        %3556 = vmatpush1.msra.mxu0 0.0
        %3557 = vmatprep.subr.mxu0 0.0
        %3558 = vmatpush1.msra.mxu0 0.0
        %3559 = vmatprep.subr.mxu0 0.0
        %3560 = vmatpush1.msra.mxu0 0.0
        %3561 = vmatprep.subr.mxu0 0.0
        %3562 = vmatpush1.msra.mxu0 0.0
        %3563 = vmatprep.subr.mxu0 0.0
        %3564 = vmatpush1.msra.mxu0 0.0
        %3565 = vmatprep.subr.mxu0 0.0
        %3566 = vmatpush1.msra.mxu0 0.0
        %3567 = vmatprep.subr.mxu0 0.0
        %3568 = vmatpush1.msra.mxu0 0.0
        %3569 = vmatprep.subr.mxu0 0.0
        %3570 = vmatpush1.msra.mxu0 0.0
        %3571 = vmatprep.subr.mxu0 0.0
        %3572 = vmatpush1.msra.mxu0 0.0
        %3573 = vmatprep.subr.mxu0 0.0
        %3574 = vmatpush1.msra.mxu0 0.0
        %3575 = vmatprep.subr.mxu0 0.0
        %3576 = vmatpush1.msra.mxu0 0.0
        %3577 = vmatprep.subr.mxu0 0.0
        %3578 = vmatpush1.msra.mxu0 0.0
        %3579 = vmatprep.subr.mxu0 0.0
        %3580 = vmatpush1.msra.mxu0 0.0
        %3581 = vmatprep.subr.mxu0 0.0
        %3582 = vmatpush1.msra.mxu0 0.0
        %3583 = vmatprep.subr.mxu0 0.0
        %3584 = vmatpush1.msra.mxu0 0.0
        %3585 = vmatprep.subr.mxu0 0.0
        %3586 = vmatpush1.msra.mxu0 0.0
        %3587 = vmatprep.subr.mxu0 0.0
        %3588 = vmatpush1.msra.mxu0 0.0
        %3589 = vmatprep.subr.mxu0 0.0
        %3590 = vmatpush1.msra.mxu0 0.0
        %3591 = vmatprep.subr.mxu0 0.0
        %3592 = vmatpush1.msra.mxu0 0.0
        %3593 = vmatprep.subr.mxu0 0.0
        %3594 = vmatpush1.msra.mxu0 0.0
        %3595 = vmatprep.subr.mxu0 0.0
        %3596 = vmatpush1.msra.mxu0 0.0
        %3597 = vmatprep.subr.mxu0 0.0
        %3598 = vmatpush1.msra.mxu0 0.0
        %3599 = vmatprep.subr.mxu0 0.0
        %3600 = vmatpush1.msra.mxu0 0.0
        %3601 = vmatprep.subr.mxu0 0.0
        %3602 = vmatpush1.msra.mxu0 0.0
        %3603 = vmatprep.subr.mxu0 0.0
        %3604 = vmatpush1.msra.mxu0 0.0
        %3605 = vmatprep.subr.mxu0 0.0
        %3606 = vmatpush1.msra.mxu0 0.0
        %3607 = vmatprep.subr.mxu0 0.0
        %3608 = vmatpush1.msra.mxu0 0.0
        %3609 = vmatprep.subr.mxu0 0.0
        %3610 = vmatpush1.msra.mxu0 0.0
        %3611 = vmatprep.mubr.f32.mxu0 0.0
        %3612 = vmatmul.mubr.f32.gmra.mrb[0].mxu0 %v264
        %v3613 = vpop.f32.mrb[0].mxu0
        %v3614 = vadd.f32 0.0, %v3613
        %v3615 = vpop.f32.mrb[0].mxu0
        %3616 = vdwg.mxu0
        %v3618 = vsel %vm262, %v3614, 0
        %3620 = vmatprep.subr.mxu0 0.0
        %3621 = vmatpush1.msra.mxu0 %v260
        %3622 = vmatprep.subr.mxu0 0.0
        %3623 = vmatpush1.msra.mxu0 %v261
        %3624 = vmatprep.subr.mxu0 0.0
        %3625 = vmatpush1.msra.mxu0 0.0
        %3626 = vmatprep.subr.mxu0 0.0
        %3627 = vmatpush1.msra.mxu0 0.0
        %3628 = vmatprep.subr.mxu0 0.0
        %3629 = vmatpush1.msra.mxu0 0.0
        %3630 = vmatprep.subr.mxu0 0.0
        %3631 = vmatpush1.msra.mxu0 0.0
        %3632 = vmatprep.subr.mxu0 0.0
        %3633 = vmatpush1.msra.mxu0 0.0
        %3634 = vmatprep.subr.mxu0 0.0
        %3635 = vmatpush1.msra.mxu0 0.0
        %3636 = vmatprep.subr.mxu0 0.0
        %3637 = vmatpush1.msra.mxu0 0.0
        %3638 = vmatprep.subr.mxu0 0.0
        %3639 = vmatpush1.msra.mxu0 0.0
        %3640 = vmatprep.subr.mxu0 0.0
        %3641 = vmatpush1.msra.mxu0 0.0
        %3642 = vmatprep.subr.mxu0 0.0
        %3643 = vmatpush1.msra.mxu0 0.0
        %3644 = vmatprep.subr.mxu0 0.0
        %3645 = vmatpush1.msra.mxu0 0.0
        %3646 = vmatprep.subr.mxu0 0.0
        %3647 = vmatpush1.msra.mxu0 0.0
        %3648 = vmatprep.subr.mxu0 0.0
        %3649 = vmatpush1.msra.mxu0 0.0
        %3650 = vmatprep.subr.mxu0 0.0
        %3651 = vmatpush1.msra.mxu0 0.0
        %3652 = vmatprep.subr.mxu0 0.0
        %3653 = vmatpush1.msra.mxu0 0.0
        %3654 = vmatprep.subr.mxu0 0.0
        %3655 = vmatpush1.msra.mxu0 0.0
        %3656 = vmatprep.subr.mxu0 0.0
        %3657 = vmatpush1.msra.mxu0 0.0
        %3658 = vmatprep.subr.mxu0 0.0
        %3659 = vmatpush1.msra.mxu0 0.0
        %3660 = vmatprep.subr.mxu0 0.0
        %3661 = vmatpush1.msra.mxu0 0.0
        %3662 = vmatprep.subr.mxu0 0.0
        %3663 = vmatpush1.msra.mxu0 0.0
        %3664 = vmatprep.subr.mxu0 0.0
        %3665 = vmatpush1.msra.mxu0 0.0
        %3666 = vmatprep.subr.mxu0 0.0
        %3667 = vmatpush1.msra.mxu0 0.0
        %3668 = vmatprep.subr.mxu0 0.0
        %3669 = vmatpush1.msra.mxu0 0.0
        %3670 = vmatprep.subr.mxu0 0.0
        %3671 = vmatpush1.msra.mxu0 0.0
        %3672 = vmatprep.subr.mxu0 0.0
        %3673 = vmatpush1.msra.mxu0 0.0
        %3674 = vmatprep.subr.mxu0 0.0
        %3675 = vmatpush1.msra.mxu0 0.0
        %3676 = vmatprep.subr.mxu0 0.0
        %3677 = vmatpush1.msra.mxu0 0.0
        %3678 = vmatprep.subr.mxu0 0.0
        %3679 = vmatpush1.msra.mxu0 0.0
        %3680 = vmatprep.subr.mxu0 0.0
        %3681 = vmatpush1.msra.mxu0 0.0
        %3682 = vmatprep.subr.mxu0 0.0
        %3683 = vmatpush1.msra.mxu0 0.0
        %3684 = vmatprep.mubr.f32.mxu0 0.0
        %3685 = vmatmul.mubr.f32.gmra.mrb[0].mxu0 %v3618
        %v3686 = vpop.f32.mrb[0].mxu0
        %v3687 = vadd.f32 0.0, %v3686
        %v3688 = vpop.f32.mrb[0].mxu0
        %3689 = vdwg.mxu0
        %s3690 = scalar_lea.vmem %s243, 64 [#allocation5]
        %3691 = vst.msk [vmem:[%s3690] sm:$0xff] %vm262, %v3687
        %v3692 = vld [vmem:[%s3171] sm:$0xf]
        %v3693 = vld [vmem:[%s3171 + $0x4] sm:$0xf]
        %v3694 = vld [vmem:[%s3171 + $0x8] sm:$0xf]
        %v3695 = vld [vmem:[%s3171 + $0xc] sm:$0xf]
        %v3700 = vunpack.c.l.b16 %v3692
        %v3701 = vunpack.c.l.b16 %v3693
        %v3702 = vunpack.c.l.b16 %v3694
        %v3703 = vunpack.c.l.b16 %v3695
        %v3704 = vpack.c.b16 %v3701, %v3700
        %v3705 = vpack.c.b16 %v3703, %v3702
        %v3707 = vsel %vm262, %v3704, 0
        %v3710 = vsel %vm262, %v3705, 0
        %3712 = vmatprep.subr.bf16.mxu0 0
        %3713 = vmatpush1.bf16.msra.mxu0 %v3169
        %3714 = vmatprep.subr.bf16.mxu0 0
        %3715 = vmatpush1.bf16.msra.mxu0 0
        %3716 = vmatprep.subr.bf16.mxu0 0
        %3717 = vmatpush1.bf16.msra.mxu0 0
        %3718 = vmatprep.subr.bf16.mxu0 0
        %3719 = vmatpush1.bf16.msra.mxu0 0
        %3720 = vmatprep.subr.bf16.mxu0 0
        %3721 = vmatpush1.bf16.msra.mxu0 0
        %3722 = vmatprep.subr.bf16.mxu0 0
        %3723 = vmatpush1.bf16.msra.mxu0 0
        %3724 = vmatprep.subr.bf16.mxu0 0
        %3725 = vmatpush1.bf16.msra.mxu0 0
        %3726 = vmatprep.subr.bf16.mxu0 0
        %3727 = vmatpush1.bf16.msra.mxu0 0
        %3728 = vmatprep.subr.bf16.mxu0 0
        %3729 = vmatpush1.bf16.msra.mxu0 0
        %3730 = vmatprep.subr.bf16.mxu0 0
        %3731 = vmatpush1.bf16.msra.mxu0 0
        %3732 = vmatprep.subr.bf16.mxu0 0
        %3733 = vmatpush1.bf16.msra.mxu0 0
        %3734 = vmatprep.subr.bf16.mxu0 0
        %3735 = vmatpush1.bf16.msra.mxu0 0
        %3736 = vmatprep.subr.bf16.mxu0 0
        %3737 = vmatpush1.bf16.msra.mxu0 0
        %3738 = vmatprep.subr.bf16.mxu0 0
        %3739 = vmatpush1.bf16.msra.mxu0 0
        %3740 = vmatprep.subr.bf16.mxu0 0
        %3741 = vmatpush1.bf16.msra.mxu0 0
        %3742 = vmatprep.subr.bf16.mxu0 0
        %3743 = vmatpush1.bf16.msra.mxu0 0
        %3744 = vmatprep.mubr.bf16.mxu0 0
        %3745 = vmatmul.mubr.bf16.gmra.mrb[0].mxu0 %v3707
        %v3746 = vpop.f32.mrb[0].mxu0
        %v3747 = vadd.f32 0.0, %v3746
        %v3748 = vpop.f32.mrb[0].mxu0
        %v3749 = vpop.f32.mrb[0].mxu0
        %v3750 = vadd.f32 0.0, %v3749
        %v3751 = vpop.f32.mrb[0].mxu0
        %3752 = vmatprep.mubr.bf16.mxu0 0
        %3753 = vmatmul.mubr.bf16.gmra.mrb[0].mxu0 %v3710
        %v3754 = vpop.f32.mrb[0].mxu0
        %v3755 = vadd.f32 0.0, %v3754
        %v3756 = vpop.f32.mrb[0].mxu0
        %v3757 = vpop.f32.mrb[0].mxu0
        %v3758 = vadd.f32 0.0, %v3757
        %v3759 = vpop.f32.mrb[0].mxu0
        %3760 = vdwg.mxu0
        %3763 = vrot.lane.b32.xlu0 %v3755, 112
        %v3764 = vpop.permute.xlu0 %3763
        %3765 = vrot.lane.b32.xlu0 %v3758, 112
        %v3766 = vpop.permute.xlu0 %3765
        %v3769 = vsub.f32 %v3747, %v3764
        %v3770 = vsub.f32 %v3750, %v3766
        %3771 = vrot.lane.b32.xlu0 %v3755, 16
        %v3772 = vpop.permute.xlu0 %3771
        %3773 = vrot.lane.b32.xlu0 %v3758, 16
        %v3774 = vpop.permute.xlu0 %3773
        %v3777 = vadd.f32 %v3747, %v3772
        %v3778 = vadd.f32 %v3750, %v3774
        %v3779 = vmul.f32 %v3769, %v3769
        %v3780 = vmul.f32 %v3770, %v3770
        %v3781 = vmul.f32 %v3777, %v3777
        %v3782 = vmul.f32 %v3778, %v3778
        %3785 = vrot.lane.b32.xlu0 %v3781, 112
        %v3786 = vpop.permute.xlu0 %3785
        %3787 = vrot.lane.b32.xlu0 %v3782, 112
        %v3788 = vpop.permute.xlu0 %3787
        %v3791 = vadd.f32 %v3779, %v3786
        %v3792 = vadd.f32 %v3780, %v3788
        %v3793 = vrsqrt.pop %v3791
        %v3794 = vmul.f32 %v3791, %v3793
        %vm3795 = vcmp.eq.f32.partialorder %v3791, inf
        %v3796 = vsel %vm3795, %v3791, %v3794
        %vm3797 = vcmp.eq.f32.partialorder %v3791, 0.0
        %v3798 = vand.u32 %v3791, 2147483648
        %v3799 = vsel %vm3797, %v3798, %v3796
        %v3800 = vrsqrt.pop %v3792
        %v3801 = vmul.f32 %v3792, %v3800
        %vm3802 = vcmp.eq.f32.partialorder %v3792, inf
        %v3803 = vsel %vm3802, %v3792, %v3801
        %vm3804 = vcmp.eq.f32.partialorder %v3792, 0.0
        %v3805 = vand.u32 %v3792, 2147483648
        %v3806 = vsel %vm3804, %v3805, %v3803
        %3807 = vmatprep.subr.mxu0 0.0
        %3808 = vmatpush1.msra.mxu0 %v3799
        %3809 = vmatprep.subr.mxu0 0.0
        %3810 = vmatpush1.msra.mxu0 %v3806
        %3811 = vmatprep.subr.mxu0 0.0
        %3812 = vmatpush1.msra.mxu0 0.0
        %3813 = vmatprep.subr.mxu0 0.0
        %3814 = vmatpush1.msra.mxu0 0.0
        %3815 = vmatprep.subr.mxu0 0.0
        %3816 = vmatpush1.msra.mxu0 0.0
        %3817 = vmatprep.subr.mxu0 0.0
        %3818 = vmatpush1.msra.mxu0 0.0
        %3819 = vmatprep.subr.mxu0 0.0
        %3820 = vmatpush1.msra.mxu0 0.0
        %3821 = vmatprep.subr.mxu0 0.0
        %3822 = vmatpush1.msra.mxu0 0.0
        %3823 = vmatprep.subr.mxu0 0.0
        %3824 = vmatpush1.msra.mxu0 0.0
        %3825 = vmatprep.subr.mxu0 0.0
        %3826 = vmatpush1.msra.mxu0 0.0
        %3827 = vmatprep.subr.mxu0 0.0
        %3828 = vmatpush1.msra.mxu0 0.0
        %3829 = vmatprep.subr.mxu0 0.0
        %3830 = vmatpush1.msra.mxu0 0.0
        %3831 = vmatprep.subr.mxu0 0.0
        %3832 = vmatpush1.msra.mxu0 0.0
        %3833 = vmatprep.subr.mxu0 0.0
        %3834 = vmatpush1.msra.mxu0 0.0
        %3835 = vmatprep.subr.mxu0 0.0
        %3836 = vmatpush1.msra.mxu0 0.0
        %3837 = vmatprep.subr.mxu0 0.0
        %3838 = vmatpush1.msra.mxu0 0.0
        %3839 = vmatprep.subr.mxu0 0.0
        %3840 = vmatpush1.msra.mxu0 0.0
        %3841 = vmatprep.subr.mxu0 0.0
        %3842 = vmatpush1.msra.mxu0 0.0
        %3843 = vmatprep.subr.mxu0 0.0
        %3844 = vmatpush1.msra.mxu0 0.0
        %3845 = vmatprep.subr.mxu0 0.0
        %3846 = vmatpush1.msra.mxu0 0.0
        %3847 = vmatprep.subr.mxu0 0.0
        %3848 = vmatpush1.msra.mxu0 0.0
        %3849 = vmatprep.subr.mxu0 0.0
        %3850 = vmatpush1.msra.mxu0 0.0
        %3851 = vmatprep.subr.mxu0 0.0
        %3852 = vmatpush1.msra.mxu0 0.0
        %3853 = vmatprep.subr.mxu0 0.0
        %3854 = vmatpush1.msra.mxu0 0.0
        %3855 = vmatprep.subr.mxu0 0.0
        %3856 = vmatpush1.msra.mxu0 0.0
        %3857 = vmatprep.subr.mxu0 0.0
        %3858 = vmatpush1.msra.mxu0 0.0
        %3859 = vmatprep.subr.mxu0 0.0
        %3860 = vmatpush1.msra.mxu0 0.0
        %3861 = vmatprep.subr.mxu0 0.0
        %3862 = vmatpush1.msra.mxu0 0.0
        %3863 = vmatprep.subr.mxu0 0.0
        %3864 = vmatpush1.msra.mxu0 0.0
        %3865 = vmatprep.subr.mxu0 0.0
        %3866 = vmatpush1.msra.mxu0 0.0
        %3867 = vmatprep.subr.mxu0 0.0
        %3868 = vmatpush1.msra.mxu0 0.0
        %3869 = vmatprep.subr.mxu0 0.0
        %3870 = vmatpush1.msra.mxu0 0.0
        %3871 = vmatprep.mubr.f32.mxu0 0.0
        %3872 = vmatmul.mubr.f32.gmra.mrb[0].mxu0 %v264
        %v3873 = vpop.f32.mrb[0].mxu0
        %v3874 = vadd.f32 0.0, %v3873
        %v3875 = vpop.f32.mrb[0].mxu0
        %3876 = vdwg.mxu0
        %v3878 = vsel %vm262, %v3874, 0
        %3880 = vmatprep.subr.mxu0 0.0
        %3881 = vmatpush1.msra.mxu0 %v260
        %3882 = vmatprep.subr.mxu0 0.0
        %3883 = vmatpush1.msra.mxu0 %v261
        %3884 = vmatprep.subr.mxu0 0.0
        %3885 = vmatpush1.msra.mxu0 0.0
        %3886 = vmatprep.subr.mxu0 0.0
        %3887 = vmatpush1.msra.mxu0 0.0
        %3888 = vmatprep.subr.mxu0 0.0
        %3889 = vmatpush1.msra.mxu0 0.0
        %3890 = vmatprep.subr.mxu0 0.0
        %3891 = vmatpush1.msra.mxu0 0.0
        %3892 = vmatprep.subr.mxu0 0.0
        %3893 = vmatpush1.msra.mxu0 0.0
        %3894 = vmatprep.subr.mxu0 0.0
        %3895 = vmatpush1.msra.mxu0 0.0
        %3896 = vmatprep.subr.mxu0 0.0
        %3897 = vmatpush1.msra.mxu0 0.0
        %3898 = vmatprep.subr.mxu0 0.0
        %3899 = vmatpush1.msra.mxu0 0.0
        %3900 = vmatprep.subr.mxu0 0.0
        %3901 = vmatpush1.msra.mxu0 0.0
        %3902 = vmatprep.subr.mxu0 0.0
        %3903 = vmatpush1.msra.mxu0 0.0
        %3904 = vmatprep.subr.mxu0 0.0
        %3905 = vmatpush1.msra.mxu0 0.0
        %3906 = vmatprep.subr.mxu0 0.0
        %3907 = vmatpush1.msra.mxu0 0.0
        %3908 = vmatprep.subr.mxu0 0.0
        %3909 = vmatpush1.msra.mxu0 0.0
        %3910 = vmatprep.subr.mxu0 0.0
        %3911 = vmatpush1.msra.mxu0 0.0
        %3912 = vmatprep.subr.mxu0 0.0
        %3913 = vmatpush1.msra.mxu0 0.0
        %3914 = vmatprep.subr.mxu0 0.0
        %3915 = vmatpush1.msra.mxu0 0.0
        %3916 = vmatprep.subr.mxu0 0.0
        %3917 = vmatpush1.msra.mxu0 0.0
        %3918 = vmatprep.subr.mxu0 0.0
        %3919 = vmatpush1.msra.mxu0 0.0
        %3920 = vmatprep.subr.mxu0 0.0
        %3921 = vmatpush1.msra.mxu0 0.0
        %3922 = vmatprep.subr.mxu0 0.0
        %3923 = vmatpush1.msra.mxu0 0.0
        %3924 = vmatprep.subr.mxu0 0.0
        %3925 = vmatpush1.msra.mxu0 0.0
        %3926 = vmatprep.subr.mxu0 0.0
        %3927 = vmatpush1.msra.mxu0 0.0
        %3928 = vmatprep.subr.mxu0 0.0
        %3929 = vmatpush1.msra.mxu0 0.0
        %3930 = vmatprep.subr.mxu0 0.0
        %3931 = vmatpush1.msra.mxu0 0.0
        %3932 = vmatprep.subr.mxu0 0.0
        %3933 = vmatpush1.msra.mxu0 0.0
        %3934 = vmatprep.subr.mxu0 0.0
        %3935 = vmatpush1.msra.mxu0 0.0
        %3936 = vmatprep.subr.mxu0 0.0
        %3937 = vmatpush1.msra.mxu0 0.0
        %3938 = vmatprep.subr.mxu0 0.0
        %3939 = vmatpush1.msra.mxu0 0.0
        %3940 = vmatprep.subr.mxu0 0.0
        %3941 = vmatpush1.msra.mxu0 0.0
        %3942 = vmatprep.subr.mxu0 0.0
        %3943 = vmatpush1.msra.mxu0 0.0
        %3944 = vmatprep.mubr.f32.mxu0 0.0
        %3945 = vmatmul.mubr.f32.gmra.mrb[0].mxu0 %v3878
        %v3946 = vpop.f32.mrb[0].mxu0
        %v3947 = vadd.f32 0.0, %v3946
        %v3948 = vpop.f32.mrb[0].mxu0
        %3949 = vdwg.mxu0
        %s3950 = scalar_lea.vmem %s243, 104 [#allocation5]
        %3951 = vst.msk [vmem:[%s3950] sm:$0xff] %vm262, %v3947
        %v3952 = vld [vmem:[%s3171] sm:$0xf]
        %v3953 = vld [vmem:[%s3171 + $0x4] sm:$0xf]
        %v3954 = vld [vmem:[%s3171 + $0x8] sm:$0xf]
        %v3955 = vld [vmem:[%s3171 + $0xc] sm:$0xf]
        %v3960 = vunpack.c.l.b16 %v3952
        %v3961 = vunpack.c.l.b16 %v3953
        %v3962 = vunpack.c.l.b16 %v3954
        %v3963 = vunpack.c.l.b16 %v3955
        %v3964 = vpack.c.b16 %v3961, %v3960
        %v3965 = vpack.c.b16 %v3963, %v3962
        %v3967 = vsel %vm262, %v3964, 0
        %v3970 = vsel %vm262, %v3965, 0
        %3972 = vmatprep.subr.bf16.mxu0 0
        %3973 = vmatpush1.bf16.msra.mxu0 %v3170
        %3974 = vmatprep.subr.bf16.mxu0 0
        %3975 = vmatpush1.bf16.msra.mxu0 0
        %3976 = vmatprep.subr.bf16.mxu0 0
        %3977 = vmatpush1.bf16.msra.mxu0 0
        %3978 = vmatprep.subr.bf16.mxu0 0
        %3979 = vmatpush1.bf16.msra.mxu0 0
        %3980 = vmatprep.subr.bf16.mxu0 0
        %3981 = vmatpush1.bf16.msra.mxu0 0
        %3982 = vmatprep.subr.bf16.mxu0 0
        %3983 = vmatpush1.bf16.msra.mxu0 0
        %3984 = vmatprep.subr.bf16.mxu0 0
        %3985 = vmatpush1.bf16.msra.mxu0 0
        %3986 = vmatprep.subr.bf16.mxu0 0
        %3987 = vmatpush1.bf16.msra.mxu0 0
        %3988 = vmatprep.subr.bf16.mxu0 0
        %3989 = vmatpush1.bf16.msra.mxu0 0
        %3990 = vmatprep.subr.bf16.mxu0 0
        %3991 = vmatpush1.bf16.msra.mxu0 0
        %3992 = vmatprep.subr.bf16.mxu0 0
        %3993 = vmatpush1.bf16.msra.mxu0 0
        %3994 = vmatprep.subr.bf16.mxu0 0
        %3995 = vmatpush1.bf16.msra.mxu0 0
        %3996 = vmatprep.subr.bf16.mxu0 0
        %3997 = vmatpush1.bf16.msra.mxu0 0
        %3998 = vmatprep.subr.bf16.mxu0 0
        %3999 = vmatpush1.bf16.msra.mxu0 0
        %4000 = vmatprep.subr.bf16.mxu0 0
        %4001 = vmatpush1.bf16.msra.mxu0 0
        %4002 = vmatprep.subr.bf16.mxu0 0
        %4003 = vmatpush1.bf16.msra.mxu0 0
        %4004 = vmatprep.mubr.bf16.mxu0 0
        %4005 = vmatmul.mubr.bf16.gmra.mrb[0].mxu0 %v3967
        %v4006 = vpop.f32.mrb[0].mxu0
        %v4007 = vadd.f32 0.0, %v4006
        %v4008 = vpop.f32.mrb[0].mxu0
        %v4009 = vpop.f32.mrb[0].mxu0
        %v4010 = vadd.f32 0.0, %v4009
        %v4011 = vpop.f32.mrb[0].mxu0
        %4012 = vmatprep.mubr.bf16.mxu0 0
        %4013 = vmatmul.mubr.bf16.gmra.mrb[0].mxu0 %v3970
        %v4014 = vpop.f32.mrb[0].mxu0
        %v4015 = vadd.f32 0.0, %v4014
        %v4016 = vpop.f32.mrb[0].mxu0
        %v4017 = vpop.f32.mrb[0].mxu0
        %v4018 = vadd.f32 0.0, %v4017
        %v4019 = vpop.f32.mrb[0].mxu0
        %4020 = vdwg.mxu0
        %4023 = vrot.lane.b32.xlu0 %v4015, 112
        %v4024 = vpop.permute.xlu0 %4023
        %4025 = vrot.lane.b32.xlu0 %v4018, 112
        %v4026 = vpop.permute.xlu0 %4025
        %v4029 = vsub.f32 %v4007, %v4024
        %v4030 = vsub.f32 %v4010, %v4026
        %4031 = vrot.lane.b32.xlu0 %v4015, 16
        %v4032 = vpop.permute.xlu0 %4031
        %4033 = vrot.lane.b32.xlu0 %v4018, 16
        %v4034 = vpop.permute.xlu0 %4033
        %v4037 = vadd.f32 %v4007, %v4032
        %v4038 = vadd.f32 %v4010, %v4034
        %v4039 = vmul.f32 %v4029, %v4029
        %v4040 = vmul.f32 %v4030, %v4030
        %v4041 = vmul.f32 %v4037, %v4037
        %v4042 = vmul.f32 %v4038, %v4038
        %4045 = vrot.lane.b32.xlu0 %v4041, 112
        %v4046 = vpop.permute.xlu0 %4045
        %4047 = vrot.lane.b32.xlu0 %v4042, 112
        %v4048 = vpop.permute.xlu0 %4047
        %v4051 = vadd.f32 %v4039, %v4046
        %v4052 = vadd.f32 %v4040, %v4048
        %v4053 = vrsqrt.pop %v4051
        %v4054 = vmul.f32 %v4051, %v4053
        %vm4055 = vcmp.eq.f32.partialorder %v4051, inf
        %v4056 = vsel %vm4055, %v4051, %v4054
        %vm4057 = vcmp.eq.f32.partialorder %v4051, 0.0
        %v4058 = vand.u32 %v4051, 2147483648
        %v4059 = vsel %vm4057, %v4058, %v4056
        %v4060 = vrsqrt.pop %v4052
        %v4061 = vmul.f32 %v4052, %v4060
        %vm4062 = vcmp.eq.f32.partialorder %v4052, inf
        %v4063 = vsel %vm4062, %v4052, %v4061
        %vm4064 = vcmp.eq.f32.partialorder %v4052, 0.0
        %v4065 = vand.u32 %v4052, 2147483648
        %v4066 = vsel %vm4064, %v4065, %v4063
        %4067 = vmatprep.subr.mxu0 0.0
        %4068 = vmatpush1.msra.mxu0 %v4059
        %4069 = vmatprep.subr.mxu0 0.0
        %4070 = vmatpush1.msra.mxu0 %v4066
        %4071 = vmatprep.subr.mxu0 0.0
        %4072 = vmatpush1.msra.mxu0 0.0
        %4073 = vmatprep.subr.mxu0 0.0
        %4074 = vmatpush1.msra.mxu0 0.0
        %4075 = vmatprep.subr.mxu0 0.0
        %4076 = vmatpush1.msra.mxu0 0.0
        %4077 = vmatprep.subr.mxu0 0.0
        %4078 = vmatpush1.msra.mxu0 0.0
        %4079 = vmatprep.subr.mxu0 0.0
        %4080 = vmatpush1.msra.mxu0 0.0
        %4081 = vmatprep.subr.mxu0 0.0
        %4082 = vmatpush1.msra.mxu0 0.0
        %4083 = vmatprep.subr.mxu0 0.0
        %4084 = vmatpush1.msra.mxu0 0.0
        %4085 = vmatprep.subr.mxu0 0.0
        %4086 = vmatpush1.msra.mxu0 0.0
        %4087 = vmatprep.subr.mxu0 0.0
        %4088 = vmatpush1.msra.mxu0 0.0
        %4089 = vmatprep.subr.mxu0 0.0
        %4090 = vmatpush1.msra.mxu0 0.0
        %4091 = vmatprep.subr.mxu0 0.0
        %4092 = vmatpush1.msra.mxu0 0.0
        %4093 = vmatprep.subr.mxu0 0.0
        %4094 = vmatpush1.msra.mxu0 0.0
        %4095 = vmatprep.subr.mxu0 0.0
        %4096 = vmatpush1.msra.mxu0 0.0
        %4097 = vmatprep.subr.mxu0 0.0
        %4098 = vmatpush1.msra.mxu0 0.0
        %4099 = vmatprep.subr.mxu0 0.0
        %4100 = vmatpush1.msra.mxu0 0.0
        %4101 = vmatprep.subr.mxu0 0.0
        %4102 = vmatpush1.msra.mxu0 0.0
        %4103 = vmatprep.subr.mxu0 0.0
        %4104 = vmatpush1.msra.mxu0 0.0
        %4105 = vmatprep.subr.mxu0 0.0
        %4106 = vmatpush1.msra.mxu0 0.0
        %4107 = vmatprep.subr.mxu0 0.0
        %4108 = vmatpush1.msra.mxu0 0.0
        %4109 = vmatprep.subr.mxu0 0.0
        %4110 = vmatpush1.msra.mxu0 0.0
        %4111 = vmatprep.subr.mxu0 0.0
        %4112 = vmatpush1.msra.mxu0 0.0
        %4113 = vmatprep.subr.mxu0 0.0
        %4114 = vmatpush1.msra.mxu0 0.0
        %4115 = vmatprep.subr.mxu0 0.0
        %4116 = vmatpush1.msra.mxu0 0.0
        %4117 = vmatprep.subr.mxu0 0.0
        %4118 = vmatpush1.msra.mxu0 0.0
        %4119 = vmatprep.subr.mxu0 0.0
        %4120 = vmatpush1.msra.mxu0 0.0
        %4121 = vmatprep.subr.mxu0 0.0
        %4122 = vmatpush1.msra.mxu0 0.0
        %4123 = vmatprep.subr.mxu0 0.0
        %4124 = vmatpush1.msra.mxu0 0.0
        %4125 = vmatprep.subr.mxu0 0.0
        %4126 = vmatpush1.msra.mxu0 0.0
        %4127 = vmatprep.subr.mxu0 0.0
        %4128 = vmatpush1.msra.mxu0 0.0
        %4129 = vmatprep.subr.mxu0 0.0
        %4130 = vmatpush1.msra.mxu0 0.0
        %4131 = vmatprep.mubr.f32.mxu0 0.0
        %4132 = vmatmul.mubr.f32.gmra.mrb[0].mxu0 %v264
        %v4133 = vpop.f32.mrb[0].mxu0
        %v4134 = vadd.f32 0.0, %v4133
        %v4135 = vpop.f32.mrb[0].mxu0
        %4136 = vdwg.mxu0
        %v4138 = vsel %vm262, %v4134, 0
        %4140 = vmatprep.subr.mxu0 0.0
        %4141 = vmatpush1.msra.mxu0 %v260
        %4142 = vmatprep.subr.mxu0 0.0
        %4143 = vmatpush1.msra.mxu0 %v261
        %4144 = vmatprep.subr.mxu0 0.0
        %4145 = vmatpush1.msra.mxu0 0.0
        %4146 = vmatprep.subr.mxu0 0.0
        %4147 = vmatpush1.msra.mxu0 0.0
        %4148 = vmatprep.subr.mxu0 0.0
        %4149 = vmatpush1.msra.mxu0 0.0
        %4150 = vmatprep.subr.mxu0 0.0
        %4151 = vmatpush1.msra.mxu0 0.0
        %4152 = vmatprep.subr.mxu0 0.0
        %4153 = vmatpush1.msra.mxu0 0.0
        %4154 = vmatprep.subr.mxu0 0.0
        %4155 = vmatpush1.msra.mxu0 0.0
        %4156 = vmatprep.subr.mxu0 0.0
        %4157 = vmatpush1.msra.mxu0 0.0
        %4158 = vmatprep.subr.mxu0 0.0
        %4159 = vmatpush1.msra.mxu0 0.0
        %4160 = vmatprep.subr.mxu0 0.0
        %4161 = vmatpush1.msra.mxu0 0.0
        %4162 = vmatprep.subr.mxu0 0.0
        %4163 = vmatpush1.msra.mxu0 0.0
        %4164 = vmatprep.subr.mxu0 0.0
        %4165 = vmatpush1.msra.mxu0 0.0
        %4166 = vmatprep.subr.mxu0 0.0
        %4167 = vmatpush1.msra.mxu0 0.0
        %4168 = vmatprep.subr.mxu0 0.0
        %4169 = vmatpush1.msra.mxu0 0.0
        %4170 = vmatprep.subr.mxu0 0.0
        %4171 = vmatpush1.msra.mxu0 0.0
        %4172 = vmatprep.subr.mxu0 0.0
        %4173 = vmatpush1.msra.mxu0 0.0
        %4174 = vmatprep.subr.mxu0 0.0
        %4175 = vmatpush1.msra.mxu0 0.0
        %4176 = vmatprep.subr.mxu0 0.0
        %4177 = vmatpush1.msra.mxu0 0.0
        %4178 = vmatprep.subr.mxu0 0.0
        %4179 = vmatpush1.msra.mxu0 0.0
        %4180 = vmatprep.subr.mxu0 0.0
        %4181 = vmatpush1.msra.mxu0 0.0
        %4182 = vmatprep.subr.mxu0 0.0
        %4183 = vmatpush1.msra.mxu0 0.0
        %4184 = vmatprep.subr.mxu0 0.0
        %4185 = vmatpush1.msra.mxu0 0.0
        %4186 = vmatprep.subr.mxu0 0.0
        %4187 = vmatpush1.msra.mxu0 0.0
        %4188 = vmatprep.subr.mxu0 0.0
        %4189 = vmatpush1.msra.mxu0 0.0
        %4190 = vmatprep.subr.mxu0 0.0
        %4191 = vmatpush1.msra.mxu0 0.0
        %4192 = vmatprep.subr.mxu0 0.0
        %4193 = vmatpush1.msra.mxu0 0.0
        %4194 = vmatprep.subr.mxu0 0.0
        %4195 = vmatpush1.msra.mxu0 0.0
        %4196 = vmatprep.subr.mxu0 0.0
        %4197 = vmatpush1.msra.mxu0 0.0
        %4198 = vmatprep.subr.mxu0 0.0
        %4199 = vmatpush1.msra.mxu0 0.0
        %4200 = vmatprep.subr.mxu0 0.0
        %4201 = vmatpush1.msra.mxu0 0.0
        %4202 = vmatprep.subr.mxu0 0.0
        %4203 = vmatpush1.msra.mxu0 0.0
        %4204 = vmatprep.mubr.f32.mxu0 0.0
        %4205 = vmatmul.mubr.f32.gmra.mrb[0].mxu0 %v4138
        %v4206 = vpop.f32.mrb[0].mxu0
        %v4207 = vadd.f32 0.0, %v4206
        %v4208 = vpop.f32.mrb[0].mxu0
        %4209 = vdwg.mxu0
        %s4210 = scalar_lea.vmem %s243, 144 [#allocation5]
        %4211 = vst.msk [vmem:[%s4210] sm:$0xff] %vm262, %v4207
        %s4212 = scalar_lea.vmem %s2, 24
        %v4213 = vld [vmem:[%s4212] sm:$0xf]
        %v4214 = vld [vmem:[%s4212 + $0x4] sm:$0xf]
        %v4217 = vunpack.c.l.b16 %v4213
        %v4218 = vunpack.c.l.b16 %v4214
        %v4219 = vpack.c.b16 %v4218, %v4217
        %4221 = vmatprep.subr.bf16.mxu0 0
        %4222 = vmatpush1.bf16.msra.mxu0 %v4219
        %4223 = vmatprep.subr.bf16.mxu0 0
        %4224 = vmatpush1.bf16.msra.mxu0 0
        %4225 = vmatprep.subr.bf16.mxu0 0
        %4226 = vmatpush1.bf16.msra.mxu0 0
        %4227 = vmatprep.subr.bf16.mxu0 0
        %4228 = vmatpush1.bf16.msra.mxu0 0
        %4229 = vmatprep.subr.bf16.mxu0 0
        %4230 = vmatpush1.bf16.msra.mxu0 0
        %4231 = vmatprep.subr.bf16.mxu0 0
        %4232 = vmatpush1.bf16.msra.mxu0 0
        %4233 = vmatprep.subr.bf16.mxu0 0
        %4234 = vmatpush1.bf16.msra.mxu0 0
        %4235 = vmatprep.subr.bf16.mxu0 0
        %4236 = vmatpush1.bf16.msra.mxu0 0
        %4237 = vmatprep.subr.bf16.mxu0 0
        %4238 = vmatpush1.bf16.msra.mxu0 0
        %4239 = vmatprep.subr.bf16.mxu0 0
        %4240 = vmatpush1.bf16.msra.mxu0 0
        %4241 = vmatprep.subr.bf16.mxu0 0
        %4242 = vmatpush1.bf16.msra.mxu0 0
        %4243 = vmatprep.subr.bf16.mxu0 0
        %4244 = vmatpush1.bf16.msra.mxu0 0
        %4245 = vmatprep.subr.bf16.mxu0 0
        %4246 = vmatpush1.bf16.msra.mxu0 0
        %4247 = vmatprep.subr.bf16.mxu0 0
        %4248 = vmatpush1.bf16.msra.mxu0 0
        %4249 = vmatprep.subr.bf16.mxu0 0
        %4250 = vmatpush1.bf16.msra.mxu0 0
        %4251 = vmatprep.subr.bf16.mxu0 0
        %4252 = vmatpush1.bf16.msra.mxu0 0
        %4253 = vmatprep.mubr.bf16.mxu0 0
        %4254 = vmatmul.mubr.bf16.gmra.mrb[0].mxu0 %v854
        %v4255 = vpop.f32.mrb[0].mxu0
        %v4256 = vadd.f32 0.0, %v4255
        %v4257 = vpop.f32.mrb[0].mxu0
        %v4258 = vpop.f32.mrb[0].mxu0
        %v4259 = vadd.f32 0.0, %v4258
        %v4260 = vpop.f32.mrb[0].mxu0
        %4261 = vmatprep.mubr.bf16.mxu0 0
        %4262 = vmatmul.mubr.bf16.gmra.mrb[0].mxu0 %v857
        %v4263 = vpop.f32.mrb[0].mxu0
        %v4264 = vadd.f32 0.0, %v4263
        %v4265 = vpop.f32.mrb[0].mxu0
        %v4266 = vpop.f32.mrb[0].mxu0
        %v4267 = vadd.f32 0.0, %v4266
        %v4268 = vpop.f32.mrb[0].mxu0
        %4269 = vmatprep.mubr.bf16.mxu0 0
        %4270 = vmatmul.mubr.bf16.gmra.mrb[0].mxu0 %v860
        %v4271 = vpop.f32.mrb[0].mxu0
        %v4272 = vadd.f32 0.0, %v4271
        %v4273 = vpop.f32.mrb[0].mxu0
        %v4274 = vpop.f32.mrb[0].mxu0
        %v4275 = vadd.f32 0.0, %v4274
        %v4276 = vpop.f32.mrb[0].mxu0
        %4277 = vmatprep.mubr.bf16.mxu0 0
        %4278 = vmatmul.mubr.bf16.gmra.mrb[0].mxu0 %v863
        %v4279 = vpop.f32.mrb[0].mxu0
        %v4280 = vadd.f32 0.0, %v4279
        %v4281 = vpop.f32.mrb[0].mxu0
        %v4282 = vpop.f32.mrb[0].mxu0
        %v4283 = vadd.f32 0.0, %v4282
        %v4284 = vpop.f32.mrb[0].mxu0
        %4285 = vdwg.mxu0
        %v4286 = vpack.c.bf16 %v4259, %v4256
        %v4287 = vpack.c.bf16 %v4267, %v4264
        %v4288 = vpack.c.bf16 %v4275, %v4272
        %v4289 = vpack.c.bf16 %v4283, %v4280
        %s4290 = scalar_lea.vmem %s1, 48
        %v4291 = vld [vmem:[%s4290] sm:$0xf]
        %v4292 = vld [vmem:[%s4290 + $0x4] sm:$0xf]
        %v4293 = vld [vmem:[%s4290 + $0x8] sm:$0xf]
        %v4294 = vld [vmem:[%s4290 + $0xc] sm:$0xf]
        %v4299 = vunpack.c.l.b16 %v4291
        %v4300 = vunpack.c.l.b16 %v4292
        %v4301 = vunpack.c.l.b16 %v4293
        %v4302 = vunpack.c.l.b16 %v4294
        %v4303 = vpack.c.b16 %v4300, %v4299
        %v4304 = vpack.c.b16 %v4302, %v4301
        %v4306 = vsel %vm262, %v4303, 0
        %v4309 = vsel %vm262, %v4304, 0
        %4311 = vmatprep.subr.bf16.mxu0 0
        %4312 = vmatpush1.bf16.msra.mxu0 %v4286
        %4313 = vmatprep.subr.bf16.mxu0 0
        %4314 = vmatpush1.bf16.msra.mxu0 0
        %4315 = vmatprep.subr.bf16.mxu0 0
        %4316 = vmatpush1.bf16.msra.mxu0 0
        %4317 = vmatprep.subr.bf16.mxu0 0
        %4318 = vmatpush1.bf16.msra.mxu0 0
        %4319 = vmatprep.subr.bf16.mxu0 0
        %4320 = vmatpush1.bf16.msra.mxu0 0
        %4321 = vmatprep.subr.bf16.mxu0 0
        %4322 = vmatpush1.bf16.msra.mxu0 0
        %4323 = vmatprep.subr.bf16.mxu0 0
        %4324 = vmatpush1.bf16.msra.mxu0 0
        %4325 = vmatprep.subr.bf16.mxu0 0
        %4326 = vmatpush1.bf16.msra.mxu0 0
        %4327 = vmatprep.subr.bf16.mxu0 0
        %4328 = vmatpush1.bf16.msra.mxu0 0
        %4329 = vmatprep.subr.bf16.mxu0 0
        %4330 = vmatpush1.bf16.msra.mxu0 0
        %4331 = vmatprep.subr.bf16.mxu0 0
        %4332 = vmatpush1.bf16.msra.mxu0 0
        %4333 = vmatprep.subr.bf16.mxu0 0
        %4334 = vmatpush1.bf16.msra.mxu0 0
        %4335 = vmatprep.subr.bf16.mxu0 0
        %4336 = vmatpush1.bf16.msra.mxu0 0
        %4337 = vmatprep.subr.bf16.mxu0 0
        %4338 = vmatpush1.bf16.msra.mxu0 0
        %4339 = vmatprep.subr.bf16.mxu0 0
        %4340 = vmatpush1.bf16.msra.mxu0 0
        %4341 = vmatprep.subr.bf16.mxu0 0
        %4342 = vmatpush1.bf16.msra.mxu0 0
        %4343 = vmatprep.mubr.bf16.mxu0 0
        %4344 = vmatmul.mubr.bf16.gmra.mrb[0].mxu0 %v4306
        %v4345 = vpop.f32.mrb[0].mxu0
        %v4346 = vadd.f32 0.0, %v4345
        %v4347 = vpop.f32.mrb[0].mxu0
        %v4348 = vpop.f32.mrb[0].mxu0
        %v4349 = vadd.f32 0.0, %v4348
        %v4350 = vpop.f32.mrb[0].mxu0
        %4351 = vmatprep.mubr.bf16.mxu0 0
        %4352 = vmatmul.mubr.bf16.gmra.mrb[0].mxu0 %v4309
        %v4353 = vpop.f32.mrb[0].mxu0
        %v4354 = vadd.f32 0.0, %v4353
        %v4355 = vpop.f32.mrb[0].mxu0
        %v4356 = vpop.f32.mrb[0].mxu0
        %v4357 = vadd.f32 0.0, %v4356
        %v4358 = vpop.f32.mrb[0].mxu0
        %4359 = vdwg.mxu0
        %4362 = vrot.lane.b32.xlu0 %v4354, 112
        %v4363 = vpop.permute.xlu0 %4362
        %4364 = vrot.lane.b32.xlu0 %v4357, 112
        %v4365 = vpop.permute.xlu0 %4364
        %v4368 = vsub.f32 %v4346, %v4363
        %v4369 = vsub.f32 %v4349, %v4365
        %4370 = vrot.lane.b32.xlu0 %v4354, 16
        %v4371 = vpop.permute.xlu0 %4370
        %4372 = vrot.lane.b32.xlu0 %v4357, 16
        %v4373 = vpop.permute.xlu0 %4372
        %v4376 = vadd.f32 %v4346, %v4371
        %v4377 = vadd.f32 %v4349, %v4373
        %v4378 = vmul.f32 %v4368, %v4368
        %v4379 = vmul.f32 %v4369, %v4369
        %v4380 = vmul.f32 %v4376, %v4376
        %v4381 = vmul.f32 %v4377, %v4377
        %4384 = vrot.lane.b32.xlu0 %v4380, 112
        %v4385 = vpop.permute.xlu0 %4384
        %4386 = vrot.lane.b32.xlu0 %v4381, 112
        %v4387 = vpop.permute.xlu0 %4386
        %v4390 = vadd.f32 %v4378, %v4385
        %v4391 = vadd.f32 %v4379, %v4387
        %v4392 = vrsqrt.pop %v4390
        %v4393 = vmul.f32 %v4390, %v4392
        %vm4394 = vcmp.eq.f32.partialorder %v4390, inf
        %v4395 = vsel %vm4394, %v4390, %v4393
        %vm4396 = vcmp.eq.f32.partialorder %v4390, 0.0
        %v4397 = vand.u32 %v4390, 2147483648
        %v4398 = vsel %vm4396, %v4397, %v4395
        %v4399 = vrsqrt.pop %v4391
        %v4400 = vmul.f32 %v4391, %v4399
        %vm4401 = vcmp.eq.f32.partialorder %v4391, inf
        %v4402 = vsel %vm4401, %v4391, %v4400
        %vm4403 = vcmp.eq.f32.partialorder %v4391, 0.0
        %v4404 = vand.u32 %v4391, 2147483648
        %v4405 = vsel %vm4403, %v4404, %v4402
        %4406 = vmatprep.subr.mxu0 0.0
        %4407 = vmatpush1.msra.mxu0 %v4398
        %4408 = vmatprep.subr.mxu0 0.0
        %4409 = vmatpush1.msra.mxu0 %v4405
        %4410 = vmatprep.subr.mxu0 0.0
        %4411 = vmatpush1.msra.mxu0 0.0
        %4412 = vmatprep.subr.mxu0 0.0
        %4413 = vmatpush1.msra.mxu0 0.0
        %4414 = vmatprep.subr.mxu0 0.0
        %4415 = vmatpush1.msra.mxu0 0.0
        %4416 = vmatprep.subr.mxu0 0.0
        %4417 = vmatpush1.msra.mxu0 0.0
        %4418 = vmatprep.subr.mxu0 0.0
        %4419 = vmatpush1.msra.mxu0 0.0
        %4420 = vmatprep.subr.mxu0 0.0
        %4421 = vmatpush1.msra.mxu0 0.0
        %4422 = vmatprep.subr.mxu0 0.0
        %4423 = vmatpush1.msra.mxu0 0.0
        %4424 = vmatprep.subr.mxu0 0.0
        %4425 = vmatpush1.msra.mxu0 0.0
        %4426 = vmatprep.subr.mxu0 0.0
        %4427 = vmatpush1.msra.mxu0 0.0
        %4428 = vmatprep.subr.mxu0 0.0
        %4429 = vmatpush1.msra.mxu0 0.0
        %4430 = vmatprep.subr.mxu0 0.0
        %4431 = vmatpush1.msra.mxu0 0.0
        %4432 = vmatprep.subr.mxu0 0.0
        %4433 = vmatpush1.msra.mxu0 0.0
        %4434 = vmatprep.subr.mxu0 0.0
        %4435 = vmatpush1.msra.mxu0 0.0
        %4436 = vmatprep.subr.mxu0 0.0
        %4437 = vmatpush1.msra.mxu0 0.0
        %4438 = vmatprep.subr.mxu0 0.0
        %4439 = vmatpush1.msra.mxu0 0.0
        %4440 = vmatprep.subr.mxu0 0.0
        %4441 = vmatpush1.msra.mxu0 0.0
        %4442 = vmatprep.subr.mxu0 0.0
        %4443 = vmatpush1.msra.mxu0 0.0
        %4444 = vmatprep.subr.mxu0 0.0
        %4445 = vmatpush1.msra.mxu0 0.0
        %4446 = vmatprep.subr.mxu0 0.0
        %4447 = vmatpush1.msra.mxu0 0.0
        %4448 = vmatprep.subr.mxu0 0.0
        %4449 = vmatpush1.msra.mxu0 0.0
        %4450 = vmatprep.subr.mxu0 0.0
        %4451 = vmatpush1.msra.mxu0 0.0
        %4452 = vmatprep.subr.mxu0 0.0
        %4453 = vmatpush1.msra.mxu0 0.0
        %4454 = vmatprep.subr.mxu0 0.0
        %4455 = vmatpush1.msra.mxu0 0.0
        %4456 = vmatprep.subr.mxu0 0.0
        %4457 = vmatpush1.msra.mxu0 0.0
        %4458 = vmatprep.subr.mxu0 0.0
        %4459 = vmatpush1.msra.mxu0 0.0
        %4460 = vmatprep.subr.mxu0 0.0
        %4461 = vmatpush1.msra.mxu0 0.0
        %4462 = vmatprep.subr.mxu0 0.0
        %4463 = vmatpush1.msra.mxu0 0.0
        %4464 = vmatprep.subr.mxu0 0.0
        %4465 = vmatpush1.msra.mxu0 0.0
        %4466 = vmatprep.subr.mxu0 0.0
        %4467 = vmatpush1.msra.mxu0 0.0
        %4468 = vmatprep.subr.mxu0 0.0
        %4469 = vmatpush1.msra.mxu0 0.0
        %4470 = vmatprep.mubr.f32.mxu0 0.0
        %4471 = vmatmul.mubr.f32.gmra.mrb[0].mxu0 %v264
        %v4472 = vpop.f32.mrb[0].mxu0
        %v4473 = vadd.f32 0.0, %v4472
        %v4474 = vpop.f32.mrb[0].mxu0
        %4475 = vdwg.mxu0
        %v4477 = vsel %vm262, %v4473, 0
        %4479 = vmatprep.subr.mxu0 0.0
        %4480 = vmatpush1.msra.mxu0 %v260
        %4481 = vmatprep.subr.mxu0 0.0
        %4482 = vmatpush1.msra.mxu0 %v261
        %4483 = vmatprep.subr.mxu0 0.0
        %4484 = vmatpush1.msra.mxu0 0.0
        %4485 = vmatprep.subr.mxu0 0.0
        %4486 = vmatpush1.msra.mxu0 0.0
        %4487 = vmatprep.subr.mxu0 0.0
        %4488 = vmatpush1.msra.mxu0 0.0
        %4489 = vmatprep.subr.mxu0 0.0
        %4490 = vmatpush1.msra.mxu0 0.0
        %4491 = vmatprep.subr.mxu0 0.0
        %4492 = vmatpush1.msra.mxu0 0.0
        %4493 = vmatprep.subr.mxu0 0.0
        %4494 = vmatpush1.msra.mxu0 0.0
        %4495 = vmatprep.subr.mxu0 0.0
        %4496 = vmatpush1.msra.mxu0 0.0
        %4497 = vmatprep.subr.mxu0 0.0
        %4498 = vmatpush1.msra.mxu0 0.0
        %4499 = vmatprep.subr.mxu0 0.0
        %4500 = vmatpush1.msra.mxu0 0.0
        %4501 = vmatprep.subr.mxu0 0.0
        %4502 = vmatpush1.msra.mxu0 0.0
        %4503 = vmatprep.subr.mxu0 0.0
        %4504 = vmatpush1.msra.mxu0 0.0
        %4505 = vmatprep.subr.mxu0 0.0
        %4506 = vmatpush1.msra.mxu0 0.0
        %4507 = vmatprep.subr.mxu0 0.0
        %4508 = vmatpush1.msra.mxu0 0.0
        %4509 = vmatprep.subr.mxu0 0.0
        %4510 = vmatpush1.msra.mxu0 0.0
        %4511 = vmatprep.subr.mxu0 0.0
        %4512 = vmatpush1.msra.mxu0 0.0
        %4513 = vmatprep.subr.mxu0 0.0
        %4514 = vmatpush1.msra.mxu0 0.0
        %4515 = vmatprep.subr.mxu0 0.0
        %4516 = vmatpush1.msra.mxu0 0.0
        %4517 = vmatprep.subr.mxu0 0.0
        %4518 = vmatpush1.msra.mxu0 0.0
        %4519 = vmatprep.subr.mxu0 0.0
        %4520 = vmatpush1.msra.mxu0 0.0
        %4521 = vmatprep.subr.mxu0 0.0
        %4522 = vmatpush1.msra.mxu0 0.0
        %4523 = vmatprep.subr.mxu0 0.0
        %4524 = vmatpush1.msra.mxu0 0.0
        %4525 = vmatprep.subr.mxu0 0.0
        %4526 = vmatpush1.msra.mxu0 0.0
        %4527 = vmatprep.subr.mxu0 0.0
        %4528 = vmatpush1.msra.mxu0 0.0
        %4529 = vmatprep.subr.mxu0 0.0
        %4530 = vmatpush1.msra.mxu0 0.0
        %4531 = vmatprep.subr.mxu0 0.0
        %4532 = vmatpush1.msra.mxu0 0.0
        %4533 = vmatprep.subr.mxu0 0.0
        %4534 = vmatpush1.msra.mxu0 0.0
        %4535 = vmatprep.subr.mxu0 0.0
        %4536 = vmatpush1.msra.mxu0 0.0
        %4537 = vmatprep.subr.mxu0 0.0
        %4538 = vmatpush1.msra.mxu0 0.0
        %4539 = vmatprep.subr.mxu0 0.0
        %4540 = vmatpush1.msra.mxu0 0.0
        %4541 = vmatprep.subr.mxu0 0.0
        %4542 = vmatpush1.msra.mxu0 0.0
        %4543 = vmatprep.mubr.f32.mxu0 0.0
        %4544 = vmatmul.mubr.f32.gmra.mrb[0].mxu0 %v4477
        %v4545 = vpop.f32.mrb[0].mxu0
        %v4546 = vadd.f32 0.0, %v4545
        %v4547 = vpop.f32.mrb[0].mxu0
        %4548 = vdwg.mxu0
        %s4549 = scalar_lea.vmem %s243, 32 [#allocation5]
        %4550 = vst.msk [vmem:[%s4549] sm:$0xff] %vm262, %v4546
        %v4551 = vld [vmem:[%s4290] sm:$0xf]
        %v4552 = vld [vmem:[%s4290 + $0x4] sm:$0xf]
        %v4553 = vld [vmem:[%s4290 + $0x8] sm:$0xf]
        %v4554 = vld [vmem:[%s4290 + $0xc] sm:$0xf]
        %v4559 = vunpack.c.l.b16 %v4551
        %v4560 = vunpack.c.l.b16 %v4552
        %v4561 = vunpack.c.l.b16 %v4553
        %v4562 = vunpack.c.l.b16 %v4554
        %v4563 = vpack.c.b16 %v4560, %v4559
        %v4564 = vpack.c.b16 %v4562, %v4561
        %v4566 = vsel %vm262, %v4563, 0
        %v4569 = vsel %vm262, %v4564, 0
        %4571 = vmatprep.subr.bf16.mxu0 0
        %4572 = vmatpush1.bf16.msra.mxu0 %v4287
        %4573 = vmatprep.subr.bf16.mxu0 0
        %4574 = vmatpush1.bf16.msra.mxu0 0
        %4575 = vmatprep.subr.bf16.mxu0 0
        %4576 = vmatpush1.bf16.msra.mxu0 0
        %4577 = vmatprep.subr.bf16.mxu0 0
        %4578 = vmatpush1.bf16.msra.mxu0 0
        %4579 = vmatprep.subr.bf16.mxu0 0
        %4580 = vmatpush1.bf16.msra.mxu0 0
        %4581 = vmatprep.subr.bf16.mxu0 0
        %4582 = vmatpush1.bf16.msra.mxu0 0
        %4583 = vmatprep.subr.bf16.mxu0 0
        %4584 = vmatpush1.bf16.msra.mxu0 0
        %4585 = vmatprep.subr.bf16.mxu0 0
        %4586 = vmatpush1.bf16.msra.mxu0 0
        %4587 = vmatprep.subr.bf16.mxu0 0
        %4588 = vmatpush1.bf16.msra.mxu0 0
        %4589 = vmatprep.subr.bf16.mxu0 0
        %4590 = vmatpush1.bf16.msra.mxu0 0
        %4591 = vmatprep.subr.bf16.mxu0 0
        %4592 = vmatpush1.bf16.msra.mxu0 0
        %4593 = vmatprep.subr.bf16.mxu0 0
        %4594 = vmatpush1.bf16.msra.mxu0 0
        %4595 = vmatprep.subr.bf16.mxu0 0
        %4596 = vmatpush1.bf16.msra.mxu0 0
        %4597 = vmatprep.subr.bf16.mxu0 0
        %4598 = vmatpush1.bf16.msra.mxu0 0
        %4599 = vmatprep.subr.bf16.mxu0 0
        %4600 = vmatpush1.bf16.msra.mxu0 0
        %4601 = vmatprep.subr.bf16.mxu0 0
        %4602 = vmatpush1.bf16.msra.mxu0 0
        %4603 = vmatprep.mubr.bf16.mxu0 0
        %4604 = vmatmul.mubr.bf16.gmra.mrb[0].mxu0 %v4566
        %v4605 = vpop.f32.mrb[0].mxu0
        %v4606 = vadd.f32 0.0, %v4605
        %v4607 = vpop.f32.mrb[0].mxu0
        %v4608 = vpop.f32.mrb[0].mxu0
        %v4609 = vadd.f32 0.0, %v4608
        %v4610 = vpop.f32.mrb[0].mxu0
        %4611 = vmatprep.mubr.bf16.mxu0 0
        %4612 = vmatmul.mubr.bf16.gmra.mrb[0].mxu0 %v4569
        %v4613 = vpop.f32.mrb[0].mxu0
        %v4614 = vadd.f32 0.0, %v4613
        %v4615 = vpop.f32.mrb[0].mxu0
        %v4616 = vpop.f32.mrb[0].mxu0
        %v4617 = vadd.f32 0.0, %v4616
        %v4618 = vpop.f32.mrb[0].mxu0
        %4619 = vdwg.mxu0
        %4622 = vrot.lane.b32.xlu0 %v4614, 112
        %v4623 = vpop.permute.xlu0 %4622
        %4624 = vrot.lane.b32.xlu0 %v4617, 112
        %v4625 = vpop.permute.xlu0 %4624
        %v4628 = vsub.f32 %v4606, %v4623
        %v4629 = vsub.f32 %v4609, %v4625
        %4630 = vrot.lane.b32.xlu0 %v4614, 16
        %v4631 = vpop.permute.xlu0 %4630
        %4632 = vrot.lane.b32.xlu0 %v4617, 16
        %v4633 = vpop.permute.xlu0 %4632
        %v4636 = vadd.f32 %v4606, %v4631
        %v4637 = vadd.f32 %v4609, %v4633
        %v4638 = vmul.f32 %v4628, %v4628
        %v4639 = vmul.f32 %v4629, %v4629
        %v4640 = vmul.f32 %v4636, %v4636
        %v4641 = vmul.f32 %v4637, %v4637
        %4644 = vrot.lane.b32.xlu0 %v4640, 112
        %v4645 = vpop.permute.xlu0 %4644
        %4646 = vrot.lane.b32.xlu0 %v4641, 112
        %v4647 = vpop.permute.xlu0 %4646
        %v4650 = vadd.f32 %v4638, %v4645
        %v4651 = vadd.f32 %v4639, %v4647
        %v4652 = vrsqrt.pop %v4650
        %v4653 = vmul.f32 %v4650, %v4652
        %vm4654 = vcmp.eq.f32.partialorder %v4650, inf
        %v4655 = vsel %vm4654, %v4650, %v4653
        %vm4656 = vcmp.eq.f32.partialorder %v4650, 0.0
        %v4657 = vand.u32 %v4650, 2147483648
        %v4658 = vsel %vm4656, %v4657, %v4655
        %v4659 = vrsqrt.pop %v4651
        %v4660 = vmul.f32 %v4651, %v4659
        %vm4661 = vcmp.eq.f32.partialorder %v4651, inf
        %v4662 = vsel %vm4661, %v4651, %v4660
        %vm4663 = vcmp.eq.f32.partialorder %v4651, 0.0
        %v4664 = vand.u32 %v4651, 2147483648
        %v4665 = vsel %vm4663, %v4664, %v4662
        %4666 = vmatprep.subr.mxu0 0.0
        %4667 = vmatpush1.msra.mxu0 %v4658
        %4668 = vmatprep.subr.mxu0 0.0
        %4669 = vmatpush1.msra.mxu0 %v4665
        %4670 = vmatprep.subr.mxu0 0.0
        %4671 = vmatpush1.msra.mxu0 0.0
        %4672 = vmatprep.subr.mxu0 0.0
        %4673 = vmatpush1.msra.mxu0 0.0
        %4674 = vmatprep.subr.mxu0 0.0
        %4675 = vmatpush1.msra.mxu0 0.0
        %4676 = vmatprep.subr.mxu0 0.0
        %4677 = vmatpush1.msra.mxu0 0.0
        %4678 = vmatprep.subr.mxu0 0.0
        %4679 = vmatpush1.msra.mxu0 0.0
        %4680 = vmatprep.subr.mxu0 0.0
        %4681 = vmatpush1.msra.mxu0 0.0
        %4682 = vmatprep.subr.mxu0 0.0
        %4683 = vmatpush1.msra.mxu0 0.0
        %4684 = vmatprep.subr.mxu0 0.0
        %4685 = vmatpush1.msra.mxu0 0.0
        %4686 = vmatprep.subr.mxu0 0.0
        %4687 = vmatpush1.msra.mxu0 0.0
        %4688 = vmatprep.subr.mxu0 0.0
        %4689 = vmatpush1.msra.mxu0 0.0
        %4690 = vmatprep.subr.mxu0 0.0
        %4691 = vmatpush1.msra.mxu0 0.0
        %4692 = vmatprep.subr.mxu0 0.0
        %4693 = vmatpush1.msra.mxu0 0.0
        %4694 = vmatprep.subr.mxu0 0.0
        %4695 = vmatpush1.msra.mxu0 0.0
        %4696 = vmatprep.subr.mxu0 0.0
        %4697 = vmatpush1.msra.mxu0 0.0
        %4698 = vmatprep.subr.mxu0 0.0
        %4699 = vmatpush1.msra.mxu0 0.0
        %4700 = vmatprep.subr.mxu0 0.0
        %4701 = vmatpush1.msra.mxu0 0.0
        %4702 = vmatprep.subr.mxu0 0.0
        %4703 = vmatpush1.msra.mxu0 0.0
        %4704 = vmatprep.subr.mxu0 0.0
        %4705 = vmatpush1.msra.mxu0 0.0
        %4706 = vmatprep.subr.mxu0 0.0
        %4707 = vmatpush1.msra.mxu0 0.0
        %4708 = vmatprep.subr.mxu0 0.0
        %4709 = vmatpush1.msra.mxu0 0.0
        %4710 = vmatprep.subr.mxu0 0.0
        %4711 = vmatpush1.msra.mxu0 0.0
        %4712 = vmatprep.subr.mxu0 0.0
        %4713 = vmatpush1.msra.mxu0 0.0
        %4714 = vmatprep.subr.mxu0 0.0
        %4715 = vmatpush1.msra.mxu0 0.0
        %4716 = vmatprep.subr.mxu0 0.0
        %4717 = vmatpush1.msra.mxu0 0.0
        %4718 = vmatprep.subr.mxu0 0.0
        %4719 = vmatpush1.msra.mxu0 0.0
        %4720 = vmatprep.subr.mxu0 0.0
        %4721 = vmatpush1.msra.mxu0 0.0
        %4722 = vmatprep.subr.mxu0 0.0
        %4723 = vmatpush1.msra.mxu0 0.0
        %4724 = vmatprep.subr.mxu0 0.0
        %4725 = vmatpush1.msra.mxu0 0.0
        %4726 = vmatprep.subr.mxu0 0.0
        %4727 = vmatpush1.msra.mxu0 0.0
        %4728 = vmatprep.subr.mxu0 0.0
        %4729 = vmatpush1.msra.mxu0 0.0
        %4730 = vmatprep.mubr.f32.mxu0 0.0
        %4731 = vmatmul.mubr.f32.gmra.mrb[0].mxu0 %v264
        %v4732 = vpop.f32.mrb[0].mxu0
        %v4733 = vadd.f32 0.0, %v4732
        %v4734 = vpop.f32.mrb[0].mxu0
        %4735 = vdwg.mxu0
        %v4737 = vsel %vm262, %v4733, 0
        %4739 = vmatprep.subr.mxu0 0.0
        %4740 = vmatpush1.msra.mxu0 %v260
        %4741 = vmatprep.subr.mxu0 0.0
        %4742 = vmatpush1.msra.mxu0 %v261
        %4743 = vmatprep.subr.mxu0 0.0
        %4744 = vmatpush1.msra.mxu0 0.0
        %4745 = vmatprep.subr.mxu0 0.0
        %4746 = vmatpush1.msra.mxu0 0.0
        %4747 = vmatprep.subr.mxu0 0.0
        %4748 = vmatpush1.msra.mxu0 0.0
        %4749 = vmatprep.subr.mxu0 0.0
        %4750 = vmatpush1.msra.mxu0 0.0
        %4751 = vmatprep.subr.mxu0 0.0
        %4752 = vmatpush1.msra.mxu0 0.0
        %4753 = vmatprep.subr.mxu0 0.0
        %4754 = vmatpush1.msra.mxu0 0.0
        %4755 = vmatprep.subr.mxu0 0.0
        %4756 = vmatpush1.msra.mxu0 0.0
        %4757 = vmatprep.subr.mxu0 0.0
        %4758 = vmatpush1.msra.mxu0 0.0
        %4759 = vmatprep.subr.mxu0 0.0
        %4760 = vmatpush1.msra.mxu0 0.0
        %4761 = vmatprep.subr.mxu0 0.0
        %4762 = vmatpush1.msra.mxu0 0.0
        %4763 = vmatprep.subr.mxu0 0.0
        %4764 = vmatpush1.msra.mxu0 0.0
        %4765 = vmatprep.subr.mxu0 0.0
        %4766 = vmatpush1.msra.mxu0 0.0
        %4767 = vmatprep.subr.mxu0 0.0
        %4768 = vmatpush1.msra.mxu0 0.0
        %4769 = vmatprep.subr.mxu0 0.0
        %4770 = vmatpush1.msra.mxu0 0.0
        %4771 = vmatprep.subr.mxu0 0.0
        %4772 = vmatpush1.msra.mxu0 0.0
        %4773 = vmatprep.subr.mxu0 0.0
        %4774 = vmatpush1.msra.mxu0 0.0
        %4775 = vmatprep.subr.mxu0 0.0
        %4776 = vmatpush1.msra.mxu0 0.0
        %4777 = vmatprep.subr.mxu0 0.0
        %4778 = vmatpush1.msra.mxu0 0.0
        %4779 = vmatprep.subr.mxu0 0.0
        %4780 = vmatpush1.msra.mxu0 0.0
        %4781 = vmatprep.subr.mxu0 0.0
        %4782 = vmatpush1.msra.mxu0 0.0
        %4783 = vmatprep.subr.mxu0 0.0
        %4784 = vmatpush1.msra.mxu0 0.0
        %4785 = vmatprep.subr.mxu0 0.0
        %4786 = vmatpush1.msra.mxu0 0.0
        %4787 = vmatprep.subr.mxu0 0.0
        %4788 = vmatpush1.msra.mxu0 0.0
        %4789 = vmatprep.subr.mxu0 0.0
        %4790 = vmatpush1.msra.mxu0 0.0
        %4791 = vmatprep.subr.mxu0 0.0
        %4792 = vmatpush1.msra.mxu0 0.0
        %4793 = vmatprep.subr.mxu0 0.0
        %4794 = vmatpush1.msra.mxu0 0.0
        %4795 = vmatprep.subr.mxu0 0.0
        %4796 = vmatpush1.msra.mxu0 0.0
        %4797 = vmatprep.subr.mxu0 0.0
        %4798 = vmatpush1.msra.mxu0 0.0
        %4799 = vmatprep.subr.mxu0 0.0
        %4800 = vmatpush1.msra.mxu0 0.0
        %4801 = vmatprep.subr.mxu0 0.0
        %4802 = vmatpush1.msra.mxu0 0.0
        %4803 = vmatprep.mubr.f32.mxu0 0.0
        %4804 = vmatmul.mubr.f32.gmra.mrb[0].mxu0 %v4737
        %v4805 = vpop.f32.mrb[0].mxu0
        %v4806 = vadd.f32 0.0, %v4805
        %v4807 = vpop.f32.mrb[0].mxu0
        %4808 = vdwg.mxu0
        %s4809 = scalar_lea.vmem %s243, 72 [#allocation5]
        %4810 = vst.msk [vmem:[%s4809] sm:$0xff] %vm262, %v4806
        %v4811 = vld [vmem:[%s4290] sm:$0xf]
        %v4812 = vld [vmem:[%s4290 + $0x4] sm:$0xf]
        %v4813 = vld [vmem:[%s4290 + $0x8] sm:$0xf]
        %v4814 = vld [vmem:[%s4290 + $0xc] sm:$0xf]
        %v4819 = vunpack.c.l.b16 %v4811
        %v4820 = vunpack.c.l.b16 %v4812
        %v4821 = vunpack.c.l.b16 %v4813
        %v4822 = vunpack.c.l.b16 %v4814
        %v4823 = vpack.c.b16 %v4820, %v4819
        %v4824 = vpack.c.b16 %v4822, %v4821
        %v4826 = vsel %vm262, %v4823, 0
        %v4829 = vsel %vm262, %v4824, 0
        %4831 = vmatprep.subr.bf16.mxu0 0
        %4832 = vmatpush1.bf16.msra.mxu0 %v4288
        %4833 = vmatprep.subr.bf16.mxu0 0
        %4834 = vmatpush1.bf16.msra.mxu0 0
        %4835 = vmatprep.subr.bf16.mxu0 0
        %4836 = vmatpush1.bf16.msra.mxu0 0
        %4837 = vmatprep.subr.bf16.mxu0 0
        %4838 = vmatpush1.bf16.msra.mxu0 0
        %4839 = vmatprep.subr.bf16.mxu0 0
        %4840 = vmatpush1.bf16.msra.mxu0 0
        %4841 = vmatprep.subr.bf16.mxu0 0
        %4842 = vmatpush1.bf16.msra.mxu0 0
        %4843 = vmatprep.subr.bf16.mxu0 0
        %4844 = vmatpush1.bf16.msra.mxu0 0
        %4845 = vmatprep.subr.bf16.mxu0 0
        %4846 = vmatpush1.bf16.msra.mxu0 0
        %4847 = vmatprep.subr.bf16.mxu0 0
        %4848 = vmatpush1.bf16.msra.mxu0 0
        %4849 = vmatprep.subr.bf16.mxu0 0
        %4850 = vmatpush1.bf16.msra.mxu0 0
        %4851 = vmatprep.subr.bf16.mxu0 0
        %4852 = vmatpush1.bf16.msra.mxu0 0
        %4853 = vmatprep.subr.bf16.mxu0 0
        %4854 = vmatpush1.bf16.msra.mxu0 0
        %4855 = vmatprep.subr.bf16.mxu0 0
        %4856 = vmatpush1.bf16.msra.mxu0 0
        %4857 = vmatprep.subr.bf16.mxu0 0
        %4858 = vmatpush1.bf16.msra.mxu0 0
        %4859 = vmatprep.subr.bf16.mxu0 0
        %4860 = vmatpush1.bf16.msra.mxu0 0
        %4861 = vmatprep.subr.bf16.mxu0 0
        %4862 = vmatpush1.bf16.msra.mxu0 0
        %4863 = vmatprep.mubr.bf16.mxu0 0
        %4864 = vmatmul.mubr.bf16.gmra.mrb[0].mxu0 %v4826
        %v4865 = vpop.f32.mrb[0].mxu0
        %v4866 = vadd.f32 0.0, %v4865
        %v4867 = vpop.f32.mrb[0].mxu0
        %v4868 = vpop.f32.mrb[0].mxu0
        %v4869 = vadd.f32 0.0, %v4868
        %v4870 = vpop.f32.mrb[0].mxu0
        %4871 = vmatprep.mubr.bf16.mxu0 0
        %4872 = vmatmul.mubr.bf16.gmra.mrb[0].mxu0 %v4829
        %v4873 = vpop.f32.mrb[0].mxu0
        %v4874 = vadd.f32 0.0, %v4873
        %v4875 = vpop.f32.mrb[0].mxu0
        %v4876 = vpop.f32.mrb[0].mxu0
        %v4877 = vadd.f32 0.0, %v4876
        %v4878 = vpop.f32.mrb[0].mxu0
        %4879 = vdwg.mxu0
        %4882 = vrot.lane.b32.xlu0 %v4874, 112
        %v4883 = vpop.permute.xlu0 %4882
        %4884 = vrot.lane.b32.xlu0 %v4877, 112
        %v4885 = vpop.permute.xlu0 %4884
        %v4888 = vsub.f32 %v4866, %v4883
        %v4889 = vsub.f32 %v4869, %v4885
        %4890 = vrot.lane.b32.xlu0 %v4874, 16
        %v4891 = vpop.permute.xlu0 %4890
        %4892 = vrot.lane.b32.xlu0 %v4877, 16
        %v4893 = vpop.permute.xlu0 %4892
        %v4896 = vadd.f32 %v4866, %v4891
        %v4897 = vadd.f32 %v4869, %v4893
        %v4898 = vmul.f32 %v4888, %v4888
        %v4899 = vmul.f32 %v4889, %v4889
        %v4900 = vmul.f32 %v4896, %v4896
        %v4901 = vmul.f32 %v4897, %v4897
        %4904 = vrot.lane.b32.xlu0 %v4900, 112
        %v4905 = vpop.permute.xlu0 %4904
        %4906 = vrot.lane.b32.xlu0 %v4901, 112
        %v4907 = vpop.permute.xlu0 %4906
        %v4910 = vadd.f32 %v4898, %v4905
        %v4911 = vadd.f32 %v4899, %v4907
        %v4912 = vrsqrt.pop %v4910
        %v4913 = vmul.f32 %v4910, %v4912
        %vm4914 = vcmp.eq.f32.partialorder %v4910, inf
        %v4915 = vsel %vm4914, %v4910, %v4913
        %vm4916 = vcmp.eq.f32.partialorder %v4910, 0.0
        %v4917 = vand.u32 %v4910, 2147483648
        %v4918 = vsel %vm4916, %v4917, %v4915
        %v4919 = vrsqrt.pop %v4911
        %v4920 = vmul.f32 %v4911, %v4919
        %vm4921 = vcmp.eq.f32.partialorder %v4911, inf
        %v4922 = vsel %vm4921, %v4911, %v4920
        %vm4923 = vcmp.eq.f32.partialorder %v4911, 0.0
        %v4924 = vand.u32 %v4911, 2147483648
        %v4925 = vsel %vm4923, %v4924, %v4922
        %4926 = vmatprep.subr.mxu0 0.0
        %4927 = vmatpush1.msra.mxu0 %v4918
        %4928 = vmatprep.subr.mxu0 0.0
        %4929 = vmatpush1.msra.mxu0 %v4925
        %4930 = vmatprep.subr.mxu0 0.0
        %4931 = vmatpush1.msra.mxu0 0.0
        %4932 = vmatprep.subr.mxu0 0.0
        %4933 = vmatpush1.msra.mxu0 0.0
        %4934 = vmatprep.subr.mxu0 0.0
        %4935 = vmatpush1.msra.mxu0 0.0
        %4936 = vmatprep.subr.mxu0 0.0
        %4937 = vmatpush1.msra.mxu0 0.0
        %4938 = vmatprep.subr.mxu0 0.0
        %4939 = vmatpush1.msra.mxu0 0.0
        %4940 = vmatprep.subr.mxu0 0.0
        %4941 = vmatpush1.msra.mxu0 0.0
        %4942 = vmatprep.subr.mxu0 0.0
        %4943 = vmatpush1.msra.mxu0 0.0
        %4944 = vmatprep.subr.mxu0 0.0
        %4945 = vmatpush1.msra.mxu0 0.0
        %4946 = vmatprep.subr.mxu0 0.0
        %4947 = vmatpush1.msra.mxu0 0.0
        %4948 = vmatprep.subr.mxu0 0.0
        %4949 = vmatpush1.msra.mxu0 0.0
        %4950 = vmatprep.subr.mxu0 0.0
        %4951 = vmatpush1.msra.mxu0 0.0
        %4952 = vmatprep.subr.mxu0 0.0
        %4953 = vmatpush1.msra.mxu0 0.0
        %4954 = vmatprep.subr.mxu0 0.0
        %4955 = vmatpush1.msra.mxu0 0.0
        %4956 = vmatprep.subr.mxu0 0.0
        %4957 = vmatpush1.msra.mxu0 0.0
        %4958 = vmatprep.subr.mxu0 0.0
        %4959 = vmatpush1.msra.mxu0 0.0
        %4960 = vmatprep.subr.mxu0 0.0
        %4961 = vmatpush1.msra.mxu0 0.0
        %4962 = vmatprep.subr.mxu0 0.0
        %4963 = vmatpush1.msra.mxu0 0.0
        %4964 = vmatprep.subr.mxu0 0.0
        %4965 = vmatpush1.msra.mxu0 0.0
        %4966 = vmatprep.subr.mxu0 0.0
        %4967 = vmatpush1.msra.mxu0 0.0
        %4968 = vmatprep.subr.mxu0 0.0
        %4969 = vmatpush1.msra.mxu0 0.0
        %4970 = vmatprep.subr.mxu0 0.0
        %4971 = vmatpush1.msra.mxu0 0.0
        %4972 = vmatprep.subr.mxu0 0.0
        %4973 = vmatpush1.msra.mxu0 0.0
        %4974 = vmatprep.subr.mxu0 0.0
        %4975 = vmatpush1.msra.mxu0 0.0
        %4976 = vmatprep.subr.mxu0 0.0
        %4977 = vmatpush1.msra.mxu0 0.0
        %4978 = vmatprep.subr.mxu0 0.0
        %4979 = vmatpush1.msra.mxu0 0.0
        %4980 = vmatprep.subr.mxu0 0.0
        %4981 = vmatpush1.msra.mxu0 0.0
        %4982 = vmatprep.subr.mxu0 0.0
        %4983 = vmatpush1.msra.mxu0 0.0
        %4984 = vmatprep.subr.mxu0 0.0
        %4985 = vmatpush1.msra.mxu0 0.0
        %4986 = vmatprep.subr.mxu0 0.0
        %4987 = vmatpush1.msra.mxu0 0.0
        %4988 = vmatprep.subr.mxu0 0.0
        %4989 = vmatpush1.msra.mxu0 0.0
        %4990 = vmatprep.mubr.f32.mxu0 0.0
        %4991 = vmatmul.mubr.f32.gmra.mrb[0].mxu0 %v264
        %v4992 = vpop.f32.mrb[0].mxu0
        %v4993 = vadd.f32 0.0, %v4992
        %v4994 = vpop.f32.mrb[0].mxu0
        %4995 = vdwg.mxu0
        %v4997 = vsel %vm262, %v4993, 0
        %4999 = vmatprep.subr.mxu0 0.0
        %5000 = vmatpush1.msra.mxu0 %v260
        %5001 = vmatprep.subr.mxu0 0.0
        %5002 = vmatpush1.msra.mxu0 %v261
        %5003 = vmatprep.subr.mxu0 0.0
        %5004 = vmatpush1.msra.mxu0 0.0
        %5005 = vmatprep.subr.mxu0 0.0
        %5006 = vmatpush1.msra.mxu0 0.0
        %5007 = vmatprep.subr.mxu0 0.0
        %5008 = vmatpush1.msra.mxu0 0.0
        %5009 = vmatprep.subr.mxu0 0.0
        %5010 = vmatpush1.msra.mxu0 0.0
        %5011 = vmatprep.subr.mxu0 0.0
        %5012 = vmatpush1.msra.mxu0 0.0
        %5013 = vmatprep.subr.mxu0 0.0
        %5014 = vmatpush1.msra.mxu0 0.0
        %5015 = vmatprep.subr.mxu0 0.0
        %5016 = vmatpush1.msra.mxu0 0.0
        %5017 = vmatprep.subr.mxu0 0.0
        %5018 = vmatpush1.msra.mxu0 0.0
        %5019 = vmatprep.subr.mxu0 0.0
        %5020 = vmatpush1.msra.mxu0 0.0
        %5021 = vmatprep.subr.mxu0 0.0
        %5022 = vmatpush1.msra.mxu0 0.0
        %5023 = vmatprep.subr.mxu0 0.0
        %5024 = vmatpush1.msra.mxu0 0.0
        %5025 = vmatprep.subr.mxu0 0.0
        %5026 = vmatpush1.msra.mxu0 0.0
        %5027 = vmatprep.subr.mxu0 0.0
        %5028 = vmatpush1.msra.mxu0 0.0
        %5029 = vmatprep.subr.mxu0 0.0
        %5030 = vmatpush1.msra.mxu0 0.0
        %5031 = vmatprep.subr.mxu0 0.0
        %5032 = vmatpush1.msra.mxu0 0.0
        %5033 = vmatprep.subr.mxu0 0.0
        %5034 = vmatpush1.msra.mxu0 0.0
        %5035 = vmatprep.subr.mxu0 0.0
        %5036 = vmatpush1.msra.mxu0 0.0
        %5037 = vmatprep.subr.mxu0 0.0
        %5038 = vmatpush1.msra.mxu0 0.0
        %5039 = vmatprep.subr.mxu0 0.0
        %5040 = vmatpush1.msra.mxu0 0.0
        %5041 = vmatprep.subr.mxu0 0.0
        %5042 = vmatpush1.msra.mxu0 0.0
        %5043 = vmatprep.subr.mxu0 0.0
        %5044 = vmatpush1.msra.mxu0 0.0
        %5045 = vmatprep.subr.mxu0 0.0
        %5046 = vmatpush1.msra.mxu0 0.0
        %5047 = vmatprep.subr.mxu0 0.0
        %5048 = vmatpush1.msra.mxu0 0.0
        %5049 = vmatprep.subr.mxu0 0.0
        %5050 = vmatpush1.msra.mxu0 0.0
        %5051 = vmatprep.subr.mxu0 0.0
        %5052 = vmatpush1.msra.mxu0 0.0
        %5053 = vmatprep.subr.mxu0 0.0
        %5054 = vmatpush1.msra.mxu0 0.0
        %5055 = vmatprep.subr.mxu0 0.0
        %5056 = vmatpush1.msra.mxu0 0.0
        %5057 = vmatprep.subr.mxu0 0.0
        %5058 = vmatpush1.msra.mxu0 0.0
        %5059 = vmatprep.subr.mxu0 0.0
        %5060 = vmatpush1.msra.mxu0 0.0
        %5061 = vmatprep.subr.mxu0 0.0
        %5062 = vmatpush1.msra.mxu0 0.0
        %5063 = vmatprep.mubr.f32.mxu0 0.0
        %5064 = vmatmul.mubr.f32.gmra.mrb[0].mxu0 %v4997
        %v5065 = vpop.f32.mrb[0].mxu0
        %v5066 = vadd.f32 0.0, %v5065
        %v5067 = vpop.f32.mrb[0].mxu0
        %5068 = vdwg.mxu0
        %s5069 = scalar_lea.vmem %s243, 112 [#allocation5]
        %5070 = vst.msk [vmem:[%s5069] sm:$0xff] %vm262, %v5066
        %v5071 = vld [vmem:[%s4290] sm:$0xf]
        %v5072 = vld [vmem:[%s4290 + $0x4] sm:$0xf]
        %v5073 = vld [vmem:[%s4290 + $0x8] sm:$0xf]
        %v5074 = vld [vmem:[%s4290 + $0xc] sm:$0xf]
        %v5079 = vunpack.c.l.b16 %v5071
        %v5080 = vunpack.c.l.b16 %v5072
        %v5081 = vunpack.c.l.b16 %v5073
        %v5082 = vunpack.c.l.b16 %v5074
        %v5083 = vpack.c.b16 %v5080, %v5079
        %v5084 = vpack.c.b16 %v5082, %v5081
        %v5086 = vsel %vm262, %v5083, 0
        %v5089 = vsel %vm262, %v5084, 0
        %5091 = vmatprep.subr.bf16.mxu0 0
        %5092 = vmatpush1.bf16.msra.mxu0 %v4289
        %5093 = vmatprep.subr.bf16.mxu0 0
        %5094 = vmatpush1.bf16.msra.mxu0 0
        %5095 = vmatprep.subr.bf16.mxu0 0
        %5096 = vmatpush1.bf16.msra.mxu0 0
        %5097 = vmatprep.subr.bf16.mxu0 0
        %5098 = vmatpush1.bf16.msra.mxu0 0
        %5099 = vmatprep.subr.bf16.mxu0 0
        %5100 = vmatpush1.bf16.msra.mxu0 0
        %5101 = vmatprep.subr.bf16.mxu0 0
        %5102 = vmatpush1.bf16.msra.mxu0 0
        %5103 = vmatprep.subr.bf16.mxu0 0
        %5104 = vmatpush1.bf16.msra.mxu0 0
        %5105 = vmatprep.subr.bf16.mxu0 0
        %5106 = vmatpush1.bf16.msra.mxu0 0
        %5107 = vmatprep.subr.bf16.mxu0 0
        %5108 = vmatpush1.bf16.msra.mxu0 0
        %5109 = vmatprep.subr.bf16.mxu0 0
        %5110 = vmatpush1.bf16.msra.mxu0 0
        %5111 = vmatprep.subr.bf16.mxu0 0
        %5112 = vmatpush1.bf16.msra.mxu0 0
        %5113 = vmatprep.subr.bf16.mxu0 0
        %5114 = vmatpush1.bf16.msra.mxu0 0
        %5115 = vmatprep.subr.bf16.mxu0 0
        %5116 = vmatpush1.bf16.msra.mxu0 0
        %5117 = vmatprep.subr.bf16.mxu0 0
        %5118 = vmatpush1.bf16.msra.mxu0 0
        %5119 = vmatprep.subr.bf16.mxu0 0
        %5120 = vmatpush1.bf16.msra.mxu0 0
        %5121 = vmatprep.subr.bf16.mxu0 0
        %5122 = vmatpush1.bf16.msra.mxu0 0
        %5123 = vmatprep.mubr.bf16.mxu0 0
        %5124 = vmatmul.mubr.bf16.gmra.mrb[0].mxu0 %v5086
        %v5125 = vpop.f32.mrb[0].mxu0
        %v5126 = vadd.f32 0.0, %v5125
        %v5127 = vpop.f32.mrb[0].mxu0
        %v5128 = vpop.f32.mrb[0].mxu0
        %v5129 = vadd.f32 0.0, %v5128
        %v5130 = vpop.f32.mrb[0].mxu0
        %5131 = vmatprep.mubr.bf16.mxu0 0
        %5132 = vmatmul.mubr.bf16.gmra.mrb[0].mxu0 %v5089
        %v5133 = vpop.f32.mrb[0].mxu0
        %v5134 = vadd.f32 0.0, %v5133
        %v5135 = vpop.f32.mrb[0].mxu0
        %v5136 = vpop.f32.mrb[0].mxu0
        %v5137 = vadd.f32 0.0, %v5136
        %v5138 = vpop.f32.mrb[0].mxu0
        %5139 = vdwg.mxu0
        %5142 = vrot.lane.b32.xlu0 %v5134, 112
        %v5143 = vpop.permute.xlu0 %5142
        %5144 = vrot.lane.b32.xlu0 %v5137, 112
        %v5145 = vpop.permute.xlu0 %5144
        %v5148 = vsub.f32 %v5126, %v5143
        %v5149 = vsub.f32 %v5129, %v5145
        %5150 = vrot.lane.b32.xlu0 %v5134, 16
        %v5151 = vpop.permute.xlu0 %5150
        %5152 = vrot.lane.b32.xlu0 %v5137, 16
        %v5153 = vpop.permute.xlu0 %5152
        %v5156 = vadd.f32 %v5126, %v5151
        %v5157 = vadd.f32 %v5129, %v5153
        %v5158 = vmul.f32 %v5148, %v5148
        %v5159 = vmul.f32 %v5149, %v5149
        %v5160 = vmul.f32 %v5156, %v5156
        %v5161 = vmul.f32 %v5157, %v5157
        %5164 = vrot.lane.b32.xlu0 %v5160, 112
        %v5165 = vpop.permute.xlu0 %5164
        %5166 = vrot.lane.b32.xlu0 %v5161, 112
        %v5167 = vpop.permute.xlu0 %5166
        %v5170 = vadd.f32 %v5158, %v5165
        %v5171 = vadd.f32 %v5159, %v5167
        %v5172 = vrsqrt.pop %v5170
        %v5173 = vmul.f32 %v5170, %v5172
        %vm5174 = vcmp.eq.f32.partialorder %v5170, inf
        %v5175 = vsel %vm5174, %v5170, %v5173
        %vm5176 = vcmp.eq.f32.partialorder %v5170, 0.0
        %v5177 = vand.u32 %v5170, 2147483648
        %v5178 = vsel %vm5176, %v5177, %v5175
        %v5179 = vrsqrt.pop %v5171
        %v5180 = vmul.f32 %v5171, %v5179
        %vm5181 = vcmp.eq.f32.partialorder %v5171, inf
        %v5182 = vsel %vm5181, %v5171, %v5180
        %vm5183 = vcmp.eq.f32.partialorder %v5171, 0.0
        %v5184 = vand.u32 %v5171, 2147483648
        %v5185 = vsel %vm5183, %v5184, %v5182
        %5186 = vmatprep.subr.mxu0 0.0
        %5187 = vmatpush1.msra.mxu0 %v5178
        %5188 = vmatprep.subr.mxu0 0.0
        %5189 = vmatpush1.msra.mxu0 %v5185
        %5190 = vmatprep.subr.mxu0 0.0
        %5191 = vmatpush1.msra.mxu0 0.0
        %5192 = vmatprep.subr.mxu0 0.0
        %5193 = vmatpush1.msra.mxu0 0.0
        %5194 = vmatprep.subr.mxu0 0.0
        %5195 = vmatpush1.msra.mxu0 0.0
        %5196 = vmatprep.subr.mxu0 0.0
        %5197 = vmatpush1.msra.mxu0 0.0
        %5198 = vmatprep.subr.mxu0 0.0
        %5199 = vmatpush1.msra.mxu0 0.0
        %5200 = vmatprep.subr.mxu0 0.0
        %5201 = vmatpush1.msra.mxu0 0.0
        %5202 = vmatprep.subr.mxu0 0.0
        %5203 = vmatpush1.msra.mxu0 0.0
        %5204 = vmatprep.subr.mxu0 0.0
        %5205 = vmatpush1.msra.mxu0 0.0
        %5206 = vmatprep.subr.mxu0 0.0
        %5207 = vmatpush1.msra.mxu0 0.0
        %5208 = vmatprep.subr.mxu0 0.0
        %5209 = vmatpush1.msra.mxu0 0.0
        %5210 = vmatprep.subr.mxu0 0.0
        %5211 = vmatpush1.msra.mxu0 0.0
        %5212 = vmatprep.subr.mxu0 0.0
        %5213 = vmatpush1.msra.mxu0 0.0
        %5214 = vmatprep.subr.mxu0 0.0
        %5215 = vmatpush1.msra.mxu0 0.0
        %5216 = vmatprep.subr.mxu0 0.0
        %5217 = vmatpush1.msra.mxu0 0.0
        %5218 = vmatprep.subr.mxu0 0.0
        %5219 = vmatpush1.msra.mxu0 0.0
        %5220 = vmatprep.subr.mxu0 0.0
        %5221 = vmatpush1.msra.mxu0 0.0
        %5222 = vmatprep.subr.mxu0 0.0
        %5223 = vmatpush1.msra.mxu0 0.0
        %5224 = vmatprep.subr.mxu0 0.0
        %5225 = vmatpush1.msra.mxu0 0.0
        %5226 = vmatprep.subr.mxu0 0.0
        %5227 = vmatpush1.msra.mxu0 0.0
        %5228 = vmatprep.subr.mxu0 0.0
        %5229 = vmatpush1.msra.mxu0 0.0
        %5230 = vmatprep.subr.mxu0 0.0
        %5231 = vmatpush1.msra.mxu0 0.0
        %5232 = vmatprep.subr.mxu0 0.0
        %5233 = vmatpush1.msra.mxu0 0.0
        %5234 = vmatprep.subr.mxu0 0.0
        %5235 = vmatpush1.msra.mxu0 0.0
        %5236 = vmatprep.subr.mxu0 0.0
        %5237 = vmatpush1.msra.mxu0 0.0
        %5238 = vmatprep.subr.mxu0 0.0
        %5239 = vmatpush1.msra.mxu0 0.0
        %5240 = vmatprep.subr.mxu0 0.0
        %5241 = vmatpush1.msra.mxu0 0.0
        %5242 = vmatprep.subr.mxu0 0.0
        %5243 = vmatpush1.msra.mxu0 0.0
        %5244 = vmatprep.subr.mxu0 0.0
        %5245 = vmatpush1.msra.mxu0 0.0
        %5246 = vmatprep.subr.mxu0 0.0
        %5247 = vmatpush1.msra.mxu0 0.0
        %5248 = vmatprep.subr.mxu0 0.0
        %5249 = vmatpush1.msra.mxu0 0.0
        %5250 = vmatprep.mubr.f32.mxu0 0.0
        %5251 = vmatmul.mubr.f32.gmra.mrb[0].mxu0 %v264
        %v5252 = vpop.f32.mrb[0].mxu0
        %v5253 = vadd.f32 0.0, %v5252
        %v5254 = vpop.f32.mrb[0].mxu0
        %5255 = vdwg.mxu0
        %v5257 = vsel %vm262, %v5253, 0
        %5259 = vmatprep.subr.mxu0 0.0
        %5260 = vmatpush1.msra.mxu0 %v260
        %5261 = vmatprep.subr.mxu0 0.0
        %5262 = vmatpush1.msra.mxu0 %v261
        %5263 = vmatprep.subr.mxu0 0.0
        %5264 = vmatpush1.msra.mxu0 0.0
        %5265 = vmatprep.subr.mxu0 0.0
        %5266 = vmatpush1.msra.mxu0 0.0
        %5267 = vmatprep.subr.mxu0 0.0
        %5268 = vmatpush1.msra.mxu0 0.0
        %5269 = vmatprep.subr.mxu0 0.0
        %5270 = vmatpush1.msra.mxu0 0.0
        %5271 = vmatprep.subr.mxu0 0.0
        %5272 = vmatpush1.msra.mxu0 0.0
        %5273 = vmatprep.subr.mxu0 0.0
        %5274 = vmatpush1.msra.mxu0 0.0
        %5275 = vmatprep.subr.mxu0 0.0
        %5276 = vmatpush1.msra.mxu0 0.0
        %5277 = vmatprep.subr.mxu0 0.0
        %5278 = vmatpush1.msra.mxu0 0.0
        %5279 = vmatprep.subr.mxu0 0.0
        %5280 = vmatpush1.msra.mxu0 0.0
        %5281 = vmatprep.subr.mxu0 0.0
        %5282 = vmatpush1.msra.mxu0 0.0
        %5283 = vmatprep.subr.mxu0 0.0
        %5284 = vmatpush1.msra.mxu0 0.0
        %5285 = vmatprep.subr.mxu0 0.0
        %5286 = vmatpush1.msra.mxu0 0.0
        %5287 = vmatprep.subr.mxu0 0.0
        %5288 = vmatpush1.msra.mxu0 0.0
        %5289 = vmatprep.subr.mxu0 0.0
        %5290 = vmatpush1.msra.mxu0 0.0
        %5291 = vmatprep.subr.mxu0 0.0
        %5292 = vmatpush1.msra.mxu0 0.0
        %5293 = vmatprep.subr.mxu0 0.0
        %5294 = vmatpush1.msra.mxu0 0.0
        %5295 = vmatprep.subr.mxu0 0.0
        %5296 = vmatpush1.msra.mxu0 0.0
        %5297 = vmatprep.subr.mxu0 0.0
        %5298 = vmatpush1.msra.mxu0 0.0
        %5299 = vmatprep.subr.mxu0 0.0
        %5300 = vmatpush1.msra.mxu0 0.0
        %5301 = vmatprep.subr.mxu0 0.0
        %5302 = vmatpush1.msra.mxu0 0.0
        %5303 = vmatprep.subr.mxu0 0.0
        %5304 = vmatpush1.msra.mxu0 0.0
        %5305 = vmatprep.subr.mxu0 0.0
        %5306 = vmatpush1.msra.mxu0 0.0
        %5307 = vmatprep.subr.mxu0 0.0
        %5308 = vmatpush1.msra.mxu0 0.0
        %5309 = vmatprep.subr.mxu0 0.0
        %5310 = vmatpush1.msra.mxu0 0.0
        %5311 = vmatprep.subr.mxu0 0.0
        %5312 = vmatpush1.msra.mxu0 0.0
        %5313 = vmatprep.subr.mxu0 0.0
        %5314 = vmatpush1.msra.mxu0 0.0
        %5315 = vmatprep.subr.mxu0 0.0
        %5316 = vmatpush1.msra.mxu0 0.0
        %5317 = vmatprep.subr.mxu0 0.0
        %5318 = vmatpush1.msra.mxu0 0.0
        %5319 = vmatprep.subr.mxu0 0.0
        %5320 = vmatpush1.msra.mxu0 0.0
        %5321 = vmatprep.subr.mxu0 0.0
        %5322 = vmatpush1.msra.mxu0 0.0
        %5323 = vmatprep.mubr.f32.mxu0 0.0
        %5324 = vmatmul.mubr.f32.gmra.mrb[0].mxu0 %v5257
        %v5325 = vpop.f32.mrb[0].mxu0
        %v5326 = vadd.f32 0.0, %v5325
        %v5327 = vpop.f32.mrb[0].mxu0
        %5328 = vdwg.mxu0
        %s5329 = scalar_lea.vmem %s243, 152 [#allocation5]
        %5330 = vst.msk [vmem:[%s5329] sm:$0xff] %vm262, %v5326
        %s5331 = sand.u32 %s140, 1
        %s5332 = scalar_lea.sflag [#allocation4], %s5331
        %s5333 = sand.u32 %s140, 1
        %s5334 = smul.addr %s5333, 160
        %s5335 = scalar_lea.vmem [#allocation5], %s5334
        // Predicated region
        $region45: #{tpu_custom_call.1} parent=39 // pred_check
          %p5336 = pneg %p150
        $region46: #{tpu_custom_call.1} parent=39 // pred_check_branch
          %5338 = sbr.rel (%p5336) target = $region48
        $region47: #{tpu_custom_call.1} parent=39 // pred_region
          %s5339 = smul.u32 4, %s22
          %s5341 = ssub.s32 2560, 2560
          %5342 = vsyncadd %s5332, %s5341
          %s5343 = smul.addr %s5339, 5
          %s5344 = smul.addr %s5343, 128
          %s5345 = scalar_lea.hbm %s5, %s5344
          %s5346 = sshll.u32 %s5335, 4
          %s5347 = int_to_ptr.vmem [resolvable:$true] %s5346
          %5352 = dma.vmem_to_hbm [thread:$0]  %s5347, 2560, %s5345, %s5332, 128, 128, 8
        $region48: #{tpu_custom_call.1} parent=39 // pred_fallthru
          _
      $region40: #{tpu_custom_call.1} parent=5 // pred_fallthru
        _
      %p5353 = scmp.le.s32.totalorder 2, %s17
      // Predicated region
      $region49: #{tpu_custom_call.1} parent=5 // pred_check
        %p5354 = pneg %p5353
      $region50: #{tpu_custom_call.1} parent=5 // pred_check_branch
        %5356 = sbr.rel (%p5354) target = $region52
      $region51: #{tpu_custom_call.1} parent=5 // pred_region
        %s5357 = ssub.s32 %s17, 2
        // Predicated region
        $region53: #{tpu_custom_call.1} parent=51 // pred_check
          %p5358 = pneg %p156
        $region54: #{tpu_custom_call.1} parent=51 // pred_check_branch
          %5360 = sbr.rel (%p5358) target = $region56
        $region55: #{tpu_custom_call.1} parent=51 // pred_region
          %s5361 = sand.u32 %s141, 1
          %s5362 = scalar_lea.sflag [#allocation4], %s5361
          %s5363 = sand.u32 %s141, 1
          %s5364 = smul.addr %s5363, 160
          %s5365 = scalar_lea.vmem [#allocation5], %s5364
          %5366 = dma.done %s5362, 2560
        $region56: #{tpu_custom_call.1} parent=51 // pred_fallthru
          _
      $region52: #{tpu_custom_call.1} parent=5 // pred_fallthru
        _
    $region6: #{tpu_custom_call.1} parent=1 // loop_footer
      %s21 = sadd.s32 1, %s17
    $region7: #{tpu_custom_call.1} parent=1 // loop_footer_branch
      %16 = sbr.rel target = $region3
    $region8: #{tpu_custom_call.1} parent=1 // loop_exit
      _
    %5367 = vsyncpa [#allocation3], 1
    %s5368 = scalar_lea.sflag [#allocation3], 1
    %5369 = vsyncpa %s5368, 1
    %5370 = vsyncpa [#allocation4], 1
    %s5371 = scalar_lea.sflag [#allocation4], 1
    %5372 = vsyncpa %s5371, 1

</llo_original>
